<compile_context>
chip_gen: v6e
topology: v6e:2x2x1
jax: 0.10.0
libtpu: 0.0.40
codegen_flags: <defaults>
</compile_context>

<pallas_src>
import numpy as np

import jax
import jax.numpy as jnp
from jax import lax
from jax.experimental import pallas as pl
from jax.experimental.pallas import tpu as pltpu


# --------------------------------------------------------------------------
# Fused network (single pallas_call)
# --------------------------------------------------------------------------

def build_net_forward(num_channels=8, num_class=6):
    c = num_channels
    C1, C2, C3 = c, 2 * c, 4 * c
    H0, H1, H2, H3 = 32, 16, 8, 4            # spatial size before each stage

    def kernel(x_ref, w1b_ref, s1_ref, b1_ref,
               w2b_ref, s2_ref, b2_ref,
               w3b_ref, s3_ref, b3_ref,
               wf1_ref, sf_ref, bf1_ref, wf2_ref, bf2_ref,
               o_ref):
        f32, bf16 = jnp.float32, jnp.bfloat16

        def sel_matrix(rows, cols, fn, dtype=f32):
            ii = lax.broadcasted_iota(jnp.int32, (rows, cols), 0)
            jj = lax.broadcasted_iota(jnp.int32, (rows, cols), 1)
            return fn(ii, jj).astype(dtype)

        def bn_relu(acc, s_ref, b_ref):
            # folded BN (eval) + ReLU, f32 epilogue (v5e-safe)
            return jnp.maximum(acc * s_ref[...] + b_ref[...], 0.0)

        def pool_expand(y, h_in, h_out_pad, ch):
            # 2x2 max-pool of the packed conv output y: (h_in, W*ch).
            #  * row pair-max, then row-compaction + zero row-padding for the
            #    next conv via one 0/1 selection matmul (bf16 operands, f32
            #    accumulate -- exact, one nonzero per row);
            #  * lane pair-max left *expanded* (valid data at lane 2*x*ch + c);
            #    the lane compaction is folded into the next stage's band
            #    weights, so no lane gather / concat / reshape is needed.
            m_y = jnp.maximum(y[0:h_in - 1, :], y[1:h_in, :]).astype(bf16)
            sel = sel_matrix(h_out_pad, h_in - 1,
                             lambda ii, jj: jj == 2 * (ii - 1), bf16)
            p = jnp.dot(sel, m_y, preferred_element_type=f32)
            n = p.shape[1]
            # returned as bf16: it is consumed only as the next conv's matmul
            # input (single cast per stage).
            return jnp.maximum(p[:, :n - ch], p[:, ch:]).astype(bf16)

        # ---------- block 1: conv3x3(3->C1) + BN + ReLU + maxpool ----------
        # Zero row-padding of each NCHW input plane via a 0/1 matmul; the
        # column (x) zero-padding is folded into the band weight matrices.
        rpad = sel_matrix(H0 + 2, H0, lambda ii, jj: ii == jj + 1, bf16)  # (34,32)
        acc = None
        for ci in range(3):
            plane = jnp.dot(rpad, x_ref[0, ci].astype(bf16),
                            preferred_element_type=f32).astype(bf16)
            for dy in range(3):
                t = jnp.dot(plane[dy:dy + H0, :], w1b_ref[dy, ci],
                            preferred_element_type=f32)
                acc = t if acc is None else acc + t
        xp = pool_expand(bn_relu(acc, s1_ref, b1_ref), H0, H1 + 2, C1)

        # ---------- block 2: conv3x3(C1->C2) + BN + ReLU + maxpool ----------
        acc = None
        for dy in range(3):
            t = jnp.dot(xp[dy:dy + H1, :], w2b_ref[dy],
                        preferred_element_type=f32)
            acc = t if acc is None else acc + t
        xp = pool_expand(bn_relu(acc, s2_ref, b2_ref), H1, H2 + 2, C2)

        # ---------- block 3: conv3x3(C2->C3) + BN + ReLU + maxpool ----------
        acc = None
        for dy in range(3):
            t = jnp.dot(xp[dy:dy + H2, :], w3b_ref[dy],
                        preferred_element_type=f32)
            acc = t if acc is None else acc + t
        y3 = bn_relu(acc, s3_ref, b3_ref)                          # (8, 8*C3)
        # final 2x2 pool (no padding rows needed, feeds the fc head)
        m_y = jnp.maximum(y3[0:H2 - 1, :], y3[1:H2, :]).astype(bf16)   # (7, 8*C3)
        sel = sel_matrix(H3, H2 - 1, lambda ii, jj: jj == 2 * ii, bf16)  # (4, 7)
        p = jnp.dot(sel, m_y, preferred_element_type=f32)              # (4, 8*C3)
        n = p.shape[1]
        feat = jnp.maximum(p[:, :n - C3], p[:, C3:]).astype(bf16)      # (4, 7*C3)

        # ---- head: flatten -> fc1 -> BN1d -> ReLU -> dropout(id) -> fc2 ----
        # PyTorch's NCHW .view flatten order + the expanded lane layout are
        # folded into wf1 (pre-permuted rows), so "flatten" is just 4 row-wise
        # matmuls accumulated together.
        h = jnp.dot(feat[0:1, :], wf1_ref[0], preferred_element_type=f32)
        for r in range(1, H3):
            h = h + jnp.dot(feat[r:r + 1, :], wf1_ref[r],
                            preferred_element_type=f32)
        h = jnp.maximum(h * sf_ref[...] + bf1_ref[...], 0.0)
        # TODO(synk): dropout is identity (eval mode); training-mode dropout
        # and batch-stats BatchNorm are not implemented.
        out = jnp.dot(h.astype(bf16), wf2_ref[...],
                      preferred_element_type=f32) + bf2_ref[...]
        o_ref[0] = out

    def forward(params, x_nchw):
        assert x_nchw.shape[1:] == (3, H0, H0), x_nchw.shape
        B = x_nchw.shape[0]
        p = params
        weights = (p["w1b"], p["s1"], p["b1"], p["w2b"], p["s2"], p["b2"],
                   p["w3b"], p["s3"], p["b3"], p["wf1"], p["sf"], p["bf1"],
                   p["wf2"], p["bf2"])

        def full_spec(a):
            nd = a.ndim
            return pl.BlockSpec(a.shape, lambda b, _nd=nd: (0,) * _nd)

        out = pl.pallas_call(
            kernel,
            out_shape=jax.ShapeDtypeStruct((B, 1, num_class), jnp.float32),
            grid=(B,),
            in_specs=[pl.BlockSpec((1, 3, H0, H0), lambda b: (b, 0, 0, 0))]
                     + [full_spec(a) for a in weights],
            out_specs=pl.BlockSpec((1, 1, num_class), lambda b: (b, 0, 0)),
            compiler_params=pltpu.CompilerParams(
                dimension_semantics=("parallel",)),
        )(x_nchw, *weights)
        return out.reshape(B, num_class)

    return forward


# --------------------------------------------------------------------------
# Parameter construction (deterministic; BN folded; conv weights pre-expanded
# into the band / block-Toeplitz form consumed by the fused kernel)
# --------------------------------------------------------------------------

def make_params(key, num_channels=8, num_class=6):
    eps = 1e-5
    c = num_channels
    C1, C2, C3 = c, 2 * c, 4 * c
    W = 32

    kc1, kc2, kc3, kh = jax.random.split(key, 4)

    def conv_block(k, cin, cout):
        k1, k2, k3, k4, k5 = jax.random.split(k, 5)
        w = jax.random.normal(k1, (3, 3, cin, cout), jnp.float32)
        w = w * (1.0 / (9.0 * cin) ** 0.5)
        b = 0.1 * jax.random.normal(k2, (cout,), jnp.float32)
        gamma = 1.0 + 0.1 * jax.random.normal(k3, (cout,), jnp.float32)
        beta = 0.1 * jax.random.normal(k4, (cout,), jnp.float32)
        mean = 0.1 * jax.random.normal(k5, (cout,), jnp.float32)
        var = jnp.ones((cout,), jnp.float32)
        scale = gamma / jnp.sqrt(var + eps)          # BN (eval) scale
        bias = beta + (b - mean) * scale             # conv bias folded into BN
        return np.asarray(w), np.asarray(scale), np.asarray(bias)

    w1, s1, b1 = conv_block(kc1, 3, C1)
    w2, s2, b2 = conv_block(kc2, C1, C2)
    w3, s3, b3 = conv_block(kc3, C2, C3)

    def band_stage1(w, wsp):
        # (3, 3, 3, C1) -> (3 dy, 3 cin, wsp, wsp*C1) per-plane band matrices.
        cout = w.shape[-1]
        out = np.zeros((3, 3, wsp, wsp * cout), np.float32)
        for dy in range(3):
            for ci in range(3):
                for x in range(wsp):
                    for dx in range(3):
                        xs = x + dx - 1
                        if 0 <= xs < wsp:
                            out[dy, ci, xs, x * cout:(x + 1) * cout] = w[dy, dx, ci, :]
        return out

    def band_expanded(w, wsp_out):
        # (3, 3, cin, cout) -> (3 dy, (2*wsp_out-1)*cin, wsp_out*cout).
        # Input lanes are the *expanded* pooled activation of the previous
        # stage: valid data lives at lane 2*xs*cin + ci; other rows are zero
        # (this also implements the x-direction zero padding).
        cin, cout = w.shape[2], w.shape[3]
        n_in = (2 * wsp_out - 1) * cin
        out = np.zeros((3, n_in, wsp_out * cout), np.float32)
        for dy in range(3):
            for x in range(wsp_out):
                for dx in range(3):
                    xs = x + dx - 1
                    if 0 <= xs < wsp_out:
                        out[dy, 2 * xs * cin:2 * xs * cin + cin,
                            x * cout:(x + 1) * cout] = w[dy, dx]
        return out

    w1b = band_stage1(w1, W)            # (3, 3, 32, 32*C1)
    w2b = band_expanded(w2, W // 2)     # (3, 31*C1, 16*C2)
    w3b = band_expanded(w3, W // 4)     # (3, 15*C2,  8*C3)

    def tile_bn(v, wsp):
        # per-channel vector -> lane layout (x-major, channel-minor)
        return np.tile(v, wsp).reshape(1, wsp * v.shape[0]).astype(np.float32)

    # ---- head: fc1 -> BN1d -> ReLU -> dropout -> fc2 ----
    d_in, d_hid = 4 * 4 * C3, C3
    k1, k2, k3, k4, k5, k6, k7 = jax.random.split(kh, 7)
    wf1 = np.asarray(jax.random.normal(k1, (d_in, d_hid), jnp.float32)) / d_in ** 0.5
    bfc1 = np.asarray(0.1 * jax.random.normal(k2, (d_hid,), jnp.float32))
    gamma = np.asarray(1.0 + 0.1 * jax.random.normal(k3, (d_hid,), jnp.float32))
    beta = np.asarray(0.1 * jax.random.normal(k4, (d_hid,), jnp.float32))
    mean = np.asarray(0.1 * jax.random.normal(k5, (d_hid,), jnp.float32))
    var = np.ones((d_hid,), np.float32)
    sf = gamma / np.sqrt(var + eps)
    bff = beta + (bfc1 - mean) * sf
    wf2 = np.asarray(jax.random.normal(k6, (d_hid, num_class), jnp.float32)) / d_hid ** 0.5
    bf2 = np.asarray(0.1 * jax.random.normal(k7, (num_class,), jnp.float32)).reshape(1, num_class)

    # fc1 rows re-indexed from PyTorch's NCHW flatten order (ch*16 + y*4 + x)
    # to the kernel's expanded (row y, lane 2*x*C3 + ch) layout.
    wf1_exp = np.zeros((4, (2 * 4 - 1) * C3, d_hid), np.float32)
    for y in range(4):
        for x in range(4):
            for ch in range(C3):
                wf1_exp[y, 2 * x * C3 + ch, :] = wf1[ch * 16 + y * 4 + x, :]

    bf16, f32 = jnp.bfloat16, jnp.float32
    return {
        "w1b": jnp.asarray(w1b, bf16),
        "s1": jnp.asarray(tile_bn(s1, W), f32),
        "b1": jnp.asarray(tile_bn(b1, W), f32),
        "w2b": jnp.asarray(w2b, bf16),
        "s2": jnp.asarray(tile_bn(s2, W // 2), f32),
        "b2": jnp.asarray(tile_bn(b2, W // 2), f32),
        "w3b": jnp.asarray(w3b, bf16),
        "s3": jnp.asarray(tile_bn(s3, W // 4), f32),
        "b3": jnp.asarray(tile_bn(b3, W // 4), f32),
        "wf1": jnp.asarray(wf1_exp, bf16),
        "sf": jnp.asarray(sf.reshape(1, d_hid), f32),
        "bf1": jnp.asarray(bff.reshape(1, d_hid), f32),
        "wf2": jnp.asarray(wf2, bf16),
        "bf2": jnp.asarray(bf2, f32),
    }


# --------------------------------------------------------------------------

if __name__ == "__main__":
    num_channels = 8
    num_class = 6

    key = jax.random.PRNGKey(0)
    pkey, xkey = jax.random.split(key)
    params = make_params(pkey, num_channels=num_channels, num_class=num_class)

    # batch of 2 RGB 32x32 images (NCHW, like the PyTorch module expects)
    x = jax.random.normal(xkey, (2, 3, 32, 32), jnp.float32)

    net = jax.jit(build_net_forward(num_channels, num_class))
    out = jax.block_until_ready(net(params, x))

    assert out.shape == (2, num_class), out.shape
    assert out.dtype == jnp.float32
    assert bool(jnp.all(jnp.isfinite(out)))
    print("KERNEL_OK")
</pallas_src>

<mosaic_0001>
module attributes {stable_mosaic.version = 11 : i64} {
  func.func @kernel(%arg0: i32, %arg1: memref<1x3x32x32xf32, #tpu.memory_space<vmem>>, %arg2: memref<3x3x32x256xbf16, #tpu.memory_space<vmem>>, %arg3: memref<1x256xf32, #tpu.memory_space<vmem>>, %arg4: memref<1x256xf32, #tpu.memory_space<vmem>>, %arg5: memref<3x248x256xbf16, #tpu.memory_space<vmem>>, %arg6: memref<1x256xf32, #tpu.memory_space<vmem>>, %arg7: memref<1x256xf32, #tpu.memory_space<vmem>>, %arg8: memref<3x240x256xbf16, #tpu.memory_space<vmem>>, %arg9: memref<1x256xf32, #tpu.memory_space<vmem>>, %arg10: memref<1x256xf32, #tpu.memory_space<vmem>>, %arg11: memref<4x224x32xbf16, #tpu.memory_space<vmem>>, %arg12: memref<1x32xf32, #tpu.memory_space<vmem>>, %arg13: memref<1x32xf32, #tpu.memory_space<vmem>>, %arg14: memref<32x6xbf16, #tpu.memory_space<vmem>>, %arg15: memref<1x6xf32, #tpu.memory_space<vmem>>, %arg16: memref<1x1x6xf32, #tpu.memory_space<vmem>>) attributes {dimension_semantics = [#tpu.dimension_semantics<parallel>], iteration_bounds = array<i64: 2>, scalar_prefetch = 0 : i64, scratch_operands = 0 : i64, tpu.core_type = #tpu.core_type<tc>, window_params = [{transform_indices = @transform_0, window_bounds = array<i64: 1, 3, 32, 32>}, {pipeline_mode = #tpu.pipeline_mode<synchronous>, transform_indices = @transform_1, window_bounds = array<i64: 3, 3, 32, 256>}, {pipeline_mode = #tpu.pipeline_mode<synchronous>, transform_indices = @transform_2, window_bounds = array<i64: 1, 256>}, {pipeline_mode = #tpu.pipeline_mode<synchronous>, transform_indices = @transform_3, window_bounds = array<i64: 1, 256>}, {pipeline_mode = #tpu.pipeline_mode<synchronous>, transform_indices = @transform_4, window_bounds = array<i64: 3, 248, 256>}, {pipeline_mode = #tpu.pipeline_mode<synchronous>, transform_indices = @transform_5, window_bounds = array<i64: 1, 256>}, {pipeline_mode = #tpu.pipeline_mode<synchronous>, transform_indices = @transform_6, window_bounds = array<i64: 1, 256>}, {pipeline_mode = #tpu.pipeline_mode<synchronous>, transform_indices = @transform_7, window_bounds = array<i64: 3, 240, 256>}, {pipeline_mode = #tpu.pipeline_mode<synchronous>, transform_indices = @transform_8, window_bounds = array<i64: 1, 256>}, {pipeline_mode = #tpu.pipeline_mode<synchronous>, transform_indices = @transform_9, window_bounds = array<i64: 1, 256>}, {pipeline_mode = #tpu.pipeline_mode<synchronous>, transform_indices = @transform_10, window_bounds = array<i64: 4, 224, 32>}, {pipeline_mode = #tpu.pipeline_mode<synchronous>, transform_indices = @transform_11, window_bounds = array<i64: 1, 32>}, {pipeline_mode = #tpu.pipeline_mode<synchronous>, transform_indices = @transform_12, window_bounds = array<i64: 1, 32>}, {pipeline_mode = #tpu.pipeline_mode<synchronous>, transform_indices = @transform_13, window_bounds = array<i64: 32, 6>}, {pipeline_mode = #tpu.pipeline_mode<synchronous>, transform_indices = @transform_14, window_bounds = array<i64: 1, 6>}, {transform_indices = @transform_15, window_bounds = array<i64: 1, 1, 6>}]} {
    %0 = tpu.iota {dimensions = array<i32: 0>} : vector<34x32xi32>
    %1 = tpu.iota {dimensions = array<i32: 1>} : vector<34x32xi32>
    %c1_i32 = arith.constant 1 : i32
    %2 = vector.broadcast %c1_i32 : i32 to vector<34x32xi32>
    %3 = arith.addi %1, %2 : vector<34x32xi32>
    %4 = arith.cmpi eq, %0, %3 : vector<34x32xi32>
    %5 = arith.extui %4 : vector<34x32xi1> to vector<34x32xi32>
    %6 = arith.sitofp %5 : vector<34x32xi32> to vector<34x32xf32>
    %7 = arith.truncf %6 : vector<34x32xf32> to vector<34x32xbf16>
    %c0 = arith.constant 0 : index
    %c0_0 = arith.constant 0 : index
    %c0_1 = arith.constant 0 : index
    %c0_2 = arith.constant 0 : index
    %8 = vector.load %arg1[%c0, %c0_0, %c0_1, %c0_2] : memref<1x3x32x32xf32, #tpu.memory_space<vmem>>, vector<1x1x32x32xf32>
    %9 = vector.shape_cast %8 : vector<1x1x32x32xf32> to vector<32x32xf32>
    %10 = arith.truncf %9 : vector<32x32xf32> to vector<32x32xbf16>
    %cst = arith.constant dense<0.000000e+00> : vector<34x32xf32>
    %11 = tpu.matmul %7, %10, %cst {dimension_numbers = #tpu.dot_dimension_numbers<[1], [0], [0], [1], [0, 0, 1, 1], [], []>} : vector<34x32xbf16>, vector<32x32xbf16>, vector<34x32xf32> -> vector<34x32xf32>
    %12 = arith.truncf %11 : vector<34x32xf32> to vector<34x32xbf16>
    %13 = vector.extract_strided_slice %12 {offsets = [0, 0], sizes = [32, 32], strides = [1, 1]} : vector<34x32xbf16> to vector<32x32xbf16>
    %c0_3 = arith.constant 0 : index
    %c0_4 = arith.constant 0 : index
    %c0_5 = arith.constant 0 : index
    %c0_6 = arith.constant 0 : index
    %14 = vector.load %arg2[%c0_3, %c0_4, %c0_5, %c0_6] : memref<3x3x32x256xbf16, #tpu.memory_space<vmem>>, vector<1x1x32x256xbf16>
    %15 = vector.shape_cast %14 : vector<1x1x32x256xbf16> to vector<32x256xbf16>
    %cst_7 = arith.constant dense<0.000000e+00> : vector<32x256xf32>
    %16 = tpu.matmul %13, %15, %cst_7 {dimension_numbers = #tpu.dot_dimension_numbers<[1], [0], [0], [1], [0, 0, 1, 1], [], []>} : vector<32x32xbf16>, vector<32x256xbf16>, vector<32x256xf32> -> vector<32x256xf32>
    %17 = vector.extract_strided_slice %12 {offsets = [1, 0], sizes = [32, 32], strides = [1, 1]} : vector<34x32xbf16> to vector<32x32xbf16>
    %c1 = arith.constant 1 : index
    %c0_8 = arith.constant 0 : index
    %c0_9 = arith.constant 0 : index
    %c0_10 = arith.constant 0 : index
    %18 = vector.load %arg2[%c1, %c0_8, %c0_9, %c0_10] : memref<3x3x32x256xbf16, #tpu.memory_space<vmem>>, vector<1x1x32x256xbf16>
    %19 = vector.shape_cast %18 : vector<1x1x32x256xbf16> to vector<32x256xbf16>
    %cst_11 = arith.constant dense<0.000000e+00> : vector<32x256xf32>
    %20 = tpu.matmul %17, %19, %cst_11 {dimension_numbers = #tpu.dot_dimension_numbers<[1], [0], [0], [1], [0, 0, 1, 1], [], []>} : vector<32x32xbf16>, vector<32x256xbf16>, vector<32x256xf32> -> vector<32x256xf32>
    %21 = arith.addf %16, %20 : vector<32x256xf32>
    %22 = vector.extract_strided_slice %12 {offsets = [2, 0], sizes = [32, 32], strides = [1, 1]} : vector<34x32xbf16> to vector<32x32xbf16>
    %c2 = arith.constant 2 : index
    %c0_12 = arith.constant 0 : index
    %c0_13 = arith.constant 0 : index
    %c0_14 = arith.constant 0 : index
    %23 = vector.load %arg2[%c2, %c0_12, %c0_13, %c0_14] : memref<3x3x32x256xbf16, #tpu.memory_space<vmem>>, vector<1x1x32x256xbf16>
    %24 = vector.shape_cast %23 : vector<1x1x32x256xbf16> to vector<32x256xbf16>
    %cst_15 = arith.constant dense<0.000000e+00> : vector<32x256xf32>
    %25 = tpu.matmul %22, %24, %cst_15 {dimension_numbers = #tpu.dot_dimension_numbers<[1], [0], [0], [1], [0, 0, 1, 1], [], []>} : vector<32x32xbf16>, vector<32x256xbf16>, vector<32x256xf32> -> vector<32x256xf32>
    %26 = arith.addf %21, %25 : vector<32x256xf32>
    %c0_16 = arith.constant 0 : index
    %c1_17 = arith.constant 1 : index
    %c0_18 = arith.constant 0 : index
    %c0_19 = arith.constant 0 : index
    %27 = vector.load %arg1[%c0_16, %c1_17, %c0_18, %c0_19] : memref<1x3x32x32xf32, #tpu.memory_space<vmem>>, vector<1x1x32x32xf32>
    %28 = vector.shape_cast %27 : vector<1x1x32x32xf32> to vector<32x32xf32>
    %29 = arith.truncf %28 : vector<32x32xf32> to vector<32x32xbf16>
    %cst_20 = arith.constant dense<0.000000e+00> : vector<34x32xf32>
    %30 = tpu.matmul %7, %29, %cst_20 {dimension_numbers = #tpu.dot_dimension_numbers<[1], [0], [0], [1], [0, 0, 1, 1], [], []>} : vector<34x32xbf16>, vector<32x32xbf16>, vector<34x32xf32> -> vector<34x32xf32>
    %31 = arith.truncf %30 : vector<34x32xf32> to vector<34x32xbf16>
    %32 = vector.extract_strided_slice %31 {offsets = [0, 0], sizes = [32, 32], strides = [1, 1]} : vector<34x32xbf16> to vector<32x32xbf16>
    %c0_21 = arith.constant 0 : index
    %c1_22 = arith.constant 1 : index
    %c0_23 = arith.constant 0 : index
    %c0_24 = arith.constant 0 : index
    %33 = vector.load %arg2[%c0_21, %c1_22, %c0_23, %c0_24] : memref<3x3x32x256xbf16, #tpu.memory_space<vmem>>, vector<1x1x32x256xbf16>
    %34 = vector.shape_cast %33 : vector<1x1x32x256xbf16> to vector<32x256xbf16>
    %cst_25 = arith.constant dense<0.000000e+00> : vector<32x256xf32>
    %35 = tpu.matmul %32, %34, %cst_25 {dimension_numbers = #tpu.dot_dimension_numbers<[1], [0], [0], [1], [0, 0, 1, 1], [], []>} : vector<32x32xbf16>, vector<32x256xbf16>, vector<32x256xf32> -> vector<32x256xf32>
    %36 = arith.addf %26, %35 : vector<32x256xf32>
    %37 = vector.extract_strided_slice %31 {offsets = [1, 0], sizes = [32, 32], strides = [1, 1]} : vector<34x32xbf16> to vector<32x32xbf16>
    %c1_26 = arith.constant 1 : index
    %c1_27 = arith.constant 1 : index
    %c0_28 = arith.constant 0 : index
    %c0_29 = arith.constant 0 : index
    %38 = vector.load %arg2[%c1_26, %c1_27, %c0_28, %c0_29] : memref<3x3x32x256xbf16, #tpu.memory_space<vmem>>, vector<1x1x32x256xbf16>
    %39 = vector.shape_cast %38 : vector<1x1x32x256xbf16> to vector<32x256xbf16>
    %cst_30 = arith.constant dense<0.000000e+00> : vector<32x256xf32>
    %40 = tpu.matmul %37, %39, %cst_30 {dimension_numbers = #tpu.dot_dimension_numbers<[1], [0], [0], [1], [0, 0, 1, 1], [], []>} : vector<32x32xbf16>, vector<32x256xbf16>, vector<32x256xf32> -> vector<32x256xf32>
    %41 = arith.addf %36, %40 : vector<32x256xf32>
    %42 = vector.extract_strided_slice %31 {offsets = [2, 0], sizes = [32, 32], strides = [1, 1]} : vector<34x32xbf16> to vector<32x32xbf16>
    %c2_31 = arith.constant 2 : index
    %c1_32 = arith.constant 1 : index
    %c0_33 = arith.constant 0 : index
    %c0_34 = arith.constant 0 : index
    %43 = vector.load %arg2[%c2_31, %c1_32, %c0_33, %c0_34] : memref<3x3x32x256xbf16, #tpu.memory_space<vmem>>, vector<1x1x32x256xbf16>
    %44 = vector.shape_cast %43 : vector<1x1x32x256xbf16> to vector<32x256xbf16>
    %cst_35 = arith.constant dense<0.000000e+00> : vector<32x256xf32>
    %45 = tpu.matmul %42, %44, %cst_35 {dimension_numbers = #tpu.dot_dimension_numbers<[1], [0], [0], [1], [0, 0, 1, 1], [], []>} : vector<32x32xbf16>, vector<32x256xbf16>, vector<32x256xf32> -> vector<32x256xf32>
    %46 = arith.addf %41, %45 : vector<32x256xf32>
    %c0_36 = arith.constant 0 : index
    %c2_37 = arith.constant 2 : index
    %c0_38 = arith.constant 0 : index
    %c0_39 = arith.constant 0 : index
    %47 = vector.load %arg1[%c0_36, %c2_37, %c0_38, %c0_39] : memref<1x3x32x32xf32, #tpu.memory_space<vmem>>, vector<1x1x32x32xf32>
    %48 = vector.shape_cast %47 : vector<1x1x32x32xf32> to vector<32x32xf32>
    %49 = arith.truncf %48 : vector<32x32xf32> to vector<32x32xbf16>
    %cst_40 = arith.constant dense<0.000000e+00> : vector<34x32xf32>
    %50 = tpu.matmul %7, %49, %cst_40 {dimension_numbers = #tpu.dot_dimension_numbers<[1], [0], [0], [1], [0, 0, 1, 1], [], []>} : vector<34x32xbf16>, vector<32x32xbf16>, vector<34x32xf32> -> vector<34x32xf32>
    %51 = arith.truncf %50 : vector<34x32xf32> to vector<34x32xbf16>
    %52 = vector.extract_strided_slice %51 {offsets = [0, 0], sizes = [32, 32], strides = [1, 1]} : vector<34x32xbf16> to vector<32x32xbf16>
    %c0_41 = arith.constant 0 : index
    %c2_42 = arith.constant 2 : index
    %c0_43 = arith.constant 0 : index
    %c0_44 = arith.constant 0 : index
    %53 = vector.load %arg2[%c0_41, %c2_42, %c0_43, %c0_44] : memref<3x3x32x256xbf16, #tpu.memory_space<vmem>>, vector<1x1x32x256xbf16>
    %54 = vector.shape_cast %53 : vector<1x1x32x256xbf16> to vector<32x256xbf16>
    %cst_45 = arith.constant dense<0.000000e+00> : vector<32x256xf32>
    %55 = tpu.matmul %52, %54, %cst_45 {dimension_numbers = #tpu.dot_dimension_numbers<[1], [0], [0], [1], [0, 0, 1, 1], [], []>} : vector<32x32xbf16>, vector<32x256xbf16>, vector<32x256xf32> -> vector<32x256xf32>
    %56 = arith.addf %46, %55 : vector<32x256xf32>
    %57 = vector.extract_strided_slice %51 {offsets = [1, 0], sizes = [32, 32], strides = [1, 1]} : vector<34x32xbf16> to vector<32x32xbf16>
    %c1_46 = arith.constant 1 : index
    %c2_47 = arith.constant 2 : index
    %c0_48 = arith.constant 0 : index
    %c0_49 = arith.constant 0 : index
    %58 = vector.load %arg2[%c1_46, %c2_47, %c0_48, %c0_49] : memref<3x3x32x256xbf16, #tpu.memory_space<vmem>>, vector<1x1x32x256xbf16>
    %59 = vector.shape_cast %58 : vector<1x1x32x256xbf16> to vector<32x256xbf16>
    %cst_50 = arith.constant dense<0.000000e+00> : vector<32x256xf32>
    %60 = tpu.matmul %57, %59, %cst_50 {dimension_numbers = #tpu.dot_dimension_numbers<[1], [0], [0], [1], [0, 0, 1, 1], [], []>} : vector<32x32xbf16>, vector<32x256xbf16>, vector<32x256xf32> -> vector<32x256xf32>
    %61 = arith.addf %56, %60 : vector<32x256xf32>
    %62 = vector.extract_strided_slice %51 {offsets = [2, 0], sizes = [32, 32], strides = [1, 1]} : vector<34x32xbf16> to vector<32x32xbf16>
    %c2_51 = arith.constant 2 : index
    %c2_52 = arith.constant 2 : index
    %c0_53 = arith.constant 0 : index
    %c0_54 = arith.constant 0 : index
    %63 = vector.load %arg2[%c2_51, %c2_52, %c0_53, %c0_54] : memref<3x3x32x256xbf16, #tpu.memory_space<vmem>>, vector<1x1x32x256xbf16>
    %64 = vector.shape_cast %63 : vector<1x1x32x256xbf16> to vector<32x256xbf16>
    %cst_55 = arith.constant dense<0.000000e+00> : vector<32x256xf32>
    %65 = tpu.matmul %62, %64, %cst_55 {dimension_numbers = #tpu.dot_dimension_numbers<[1], [0], [0], [1], [0, 0, 1, 1], [], []>} : vector<32x32xbf16>, vector<32x256xbf16>, vector<32x256xf32> -> vector<32x256xf32>
    %66 = arith.addf %61, %65 : vector<32x256xf32>
    %c0_56 = arith.constant 0 : index
    %c0_57 = arith.constant 0 : index
    %67 = vector.load %arg3[%c0_56, %c0_57] : memref<1x256xf32, #tpu.memory_space<vmem>>, vector<1x256xf32>
    %68 = vector.broadcast %67 : vector<1x256xf32> to vector<32x256xf32>
    %69 = arith.mulf %66, %68 : vector<32x256xf32>
    %c0_58 = arith.constant 0 : index
    %c0_59 = arith.constant 0 : index
    %70 = vector.load %arg4[%c0_58, %c0_59] : memref<1x256xf32, #tpu.memory_space<vmem>>, vector<1x256xf32>
    %71 = vector.broadcast %70 : vector<1x256xf32> to vector<32x256xf32>
    %72 = arith.addf %69, %71 : vector<32x256xf32>
    %cst_60 = arith.constant 0.000000e+00 : f32
    %73 = vector.broadcast %cst_60 : f32 to vector<32x256xf32>
    %74 = arith.maximumf %72, %73 : vector<32x256xf32>
    %75 = vector.extract_strided_slice %74 {offsets = [0, 0], sizes = [31, 256], strides = [1, 1]} : vector<32x256xf32> to vector<31x256xf32>
    %76 = vector.extract_strided_slice %74 {offsets = [1, 0], sizes = [31, 256], strides = [1, 1]} : vector<32x256xf32> to vector<31x256xf32>
    %77 = arith.maximumf %75, %76 : vector<31x256xf32>
    %78 = arith.truncf %77 : vector<31x256xf32> to vector<31x256xbf16>
    %79 = tpu.iota {dimensions = array<i32: 0>} : vector<18x31xi32>
    %80 = tpu.iota {dimensions = array<i32: 1>} : vector<18x31xi32>
    %c1_i32_61 = arith.constant 1 : i32
    %81 = vector.broadcast %c1_i32_61 : i32 to vector<18x31xi32>
    %82 = arith.subi %79, %81 : vector<18x31xi32>
    %c2_i32 = arith.constant 2 : i32
    %83 = vector.broadcast %c2_i32 : i32 to vector<18x31xi32>
    %84 = arith.muli %83, %82 : vector<18x31xi32>
    %85 = arith.cmpi eq, %80, %84 : vector<18x31xi32>
    %86 = arith.extui %85 : vector<18x31xi1> to vector<18x31xi32>
    %87 = arith.sitofp %86 : vector<18x31xi32> to vector<18x31xf32>
    %88 = arith.truncf %87 : vector<18x31xf32> to vector<18x31xbf16>
    %cst_62 = arith.constant dense<0.000000e+00> : vector<18x256xf32>
    %89 = tpu.matmul %88, %78, %cst_62 {dimension_numbers = #tpu.dot_dimension_numbers<[1], [0], [0], [1], [0, 0, 1, 1], [], []>} : vector<18x31xbf16>, vector<31x256xbf16>, vector<18x256xf32> -> vector<18x256xf32>
    %90 = vector.extract_strided_slice %89 {offsets = [0, 0], sizes = [18, 248], strides = [1, 1]} : vector<18x256xf32> to vector<18x248xf32>
    %91 = vector.extract_strided_slice %89 {offsets = [0, 8], sizes = [18, 248], strides = [1, 1]} : vector<18x256xf32> to vector<18x248xf32>
    %92 = arith.maximumf %90, %91 : vector<18x248xf32>
    %93 = arith.truncf %92 : vector<18x248xf32> to vector<18x248xbf16>
    %94 = vector.extract_strided_slice %93 {offsets = [0, 0], sizes = [16, 248], strides = [1, 1]} : vector<18x248xbf16> to vector<16x248xbf16>
    %c0_63 = arith.constant 0 : index
    %c0_64 = arith.constant 0 : index
    %c0_65 = arith.constant 0 : index
    %95 = vector.load %arg5[%c0_63, %c0_64, %c0_65] : memref<3x248x256xbf16, #tpu.memory_space<vmem>>, vector<1x248x256xbf16>
    %96 = vector.shape_cast %95 : vector<1x248x256xbf16> to vector<248x256xbf16>
    %cst_66 = arith.constant dense<0.000000e+00> : vector<16x256xf32>
    %97 = tpu.matmul %94, %96, %cst_66 {dimension_numbers = #tpu.dot_dimension_numbers<[1], [0], [0], [1], [0, 0, 1, 1], [], []>} : vector<16x248xbf16>, vector<248x256xbf16>, vector<16x256xf32> -> vector<16x256xf32>
    %98 = vector.extract_strided_slice %93 {offsets = [1, 0], sizes = [16, 248], strides = [1, 1]} : vector<18x248xbf16> to vector<16x248xbf16>
    %c1_67 = arith.constant 1 : index
    %c0_68 = arith.constant 0 : index
    %c0_69 = arith.constant 0 : index
    %99 = vector.load %arg5[%c1_67, %c0_68, %c0_69] : memref<3x248x256xbf16, #tpu.memory_space<vmem>>, vector<1x248x256xbf16>
    %100 = vector.shape_cast %99 : vector<1x248x256xbf16> to vector<248x256xbf16>
    %cst_70 = arith.constant dense<0.000000e+00> : vector<16x256xf32>
    %101 = tpu.matmul %98, %100, %cst_70 {dimension_numbers = #tpu.dot_dimension_numbers<[1], [0], [0], [1], [0, 0, 1, 1], [], []>} : vector<16x248xbf16>, vector<248x256xbf16>, vector<16x256xf32> -> vector<16x256xf32>
    %102 = arith.addf %97, %101 : vector<16x256xf32>
    %103 = vector.extract_strided_slice %93 {offsets = [2, 0], sizes = [16, 248], strides = [1, 1]} : vector<18x248xbf16> to vector<16x248xbf16>
    %c2_71 = arith.constant 2 : index
    %c0_72 = arith.constant 0 : index
    %c0_73 = arith.constant 0 : index
    %104 = vector.load %arg5[%c2_71, %c0_72, %c0_73] : memref<3x248x256xbf16, #tpu.memory_space<vmem>>, vector<1x248x256xbf16>
    %105 = vector.shape_cast %104 : vector<1x248x256xbf16> to vector<248x256xbf16>
    %cst_74 = arith.constant dense<0.000000e+00> : vector<16x256xf32>
    %106 = tpu.matmul %103, %105, %cst_74 {dimension_numbers = #tpu.dot_dimension_numbers<[1], [0], [0], [1], [0, 0, 1, 1], [], []>} : vector<16x248xbf16>, vector<248x256xbf16>, vector<16x256xf32> -> vector<16x256xf32>
    %107 = arith.addf %102, %106 : vector<16x256xf32>
    %c0_75 = arith.constant 0 : index
    %c0_76 = arith.constant 0 : index
    %108 = vector.load %arg6[%c0_75, %c0_76] : memref<1x256xf32, #tpu.memory_space<vmem>>, vector<1x256xf32>
    %109 = vector.broadcast %108 : vector<1x256xf32> to vector<16x256xf32>
    %110 = arith.mulf %107, %109 : vector<16x256xf32>
    %c0_77 = arith.constant 0 : index
    %c0_78 = arith.constant 0 : index
    %111 = vector.load %arg7[%c0_77, %c0_78] : memref<1x256xf32, #tpu.memory_space<vmem>>, vector<1x256xf32>
    %112 = vector.broadcast %111 : vector<1x256xf32> to vector<16x256xf32>
    %113 = arith.addf %110, %112 : vector<16x256xf32>
    %cst_79 = arith.constant 0.000000e+00 : f32
    %114 = vector.broadcast %cst_79 : f32 to vector<16x256xf32>
    %115 = arith.maximumf %113, %114 : vector<16x256xf32>
    %116 = vector.extract_strided_slice %115 {offsets = [0, 0], sizes = [15, 256], strides = [1, 1]} : vector<16x256xf32> to vector<15x256xf32>
    %117 = vector.extract_strided_slice %115 {offsets = [1, 0], sizes = [15, 256], strides = [1, 1]} : vector<16x256xf32> to vector<15x256xf32>
    %118 = arith.maximumf %116, %117 : vector<15x256xf32>
    %119 = arith.truncf %118 : vector<15x256xf32> to vector<15x256xbf16>
    %120 = tpu.iota {dimensions = array<i32: 0>} : vector<10x15xi32>
    %121 = tpu.iota {dimensions = array<i32: 1>} : vector<10x15xi32>
    %c1_i32_80 = arith.constant 1 : i32
    %122 = vector.broadcast %c1_i32_80 : i32 to vector<10x15xi32>
    %123 = arith.subi %120, %122 : vector<10x15xi32>
    %c2_i32_81 = arith.constant 2 : i32
    %124 = vector.broadcast %c2_i32_81 : i32 to vector<10x15xi32>
    %125 = arith.muli %124, %123 : vector<10x15xi32>
    %126 = arith.cmpi eq, %121, %125 : vector<10x15xi32>
    %127 = arith.extui %126 : vector<10x15xi1> to vector<10x15xi32>
    %128 = arith.sitofp %127 : vector<10x15xi32> to vector<10x15xf32>
    %129 = arith.truncf %128 : vector<10x15xf32> to vector<10x15xbf16>
    %cst_82 = arith.constant dense<0.000000e+00> : vector<10x256xf32>
    %130 = tpu.matmul %129, %119, %cst_82 {dimension_numbers = #tpu.dot_dimension_numbers<[1], [0], [0], [1], [0, 0, 1, 1], [], []>} : vector<10x15xbf16>, vector<15x256xbf16>, vector<10x256xf32> -> vector<10x256xf32>
    %131 = vector.extract_strided_slice %130 {offsets = [0, 0], sizes = [10, 240], strides = [1, 1]} : vector<10x256xf32> to vector<10x240xf32>
    %132 = vector.extract_strided_slice %130 {offsets = [0, 16], sizes = [10, 240], strides = [1, 1]} : vector<10x256xf32> to vector<10x240xf32>
    %133 = arith.maximumf %131, %132 : vector<10x240xf32>
    %134 = arith.truncf %133 : vector<10x240xf32> to vector<10x240xbf16>
    %135 = vector.extract_strided_slice %134 {offsets = [0, 0], sizes = [8, 240], strides = [1, 1]} : vector<10x240xbf16> to vector<8x240xbf16>
    %c0_83 = arith.constant 0 : index
    %c0_84 = arith.constant 0 : index
    %c0_85 = arith.constant 0 : index
    %136 = vector.load %arg8[%c0_83, %c0_84, %c0_85] : memref<3x240x256xbf16, #tpu.memory_space<vmem>>, vector<1x240x256xbf16>
    %137 = vector.shape_cast %136 : vector<1x240x256xbf16> to vector<240x256xbf16>
    %cst_86 = arith.constant dense<0.000000e+00> : vector<8x256xf32>
    %138 = tpu.matmul %135, %137, %cst_86 {dimension_numbers = #tpu.dot_dimension_numbers<[1], [0], [0], [1], [0, 0, 1, 1], [], []>} : vector<8x240xbf16>, vector<240x256xbf16>, vector<8x256xf32> -> vector<8x256xf32>
    %139 = vector.extract_strided_slice %134 {offsets = [1, 0], sizes = [8, 240], strides = [1, 1]} : vector<10x240xbf16> to vector<8x240xbf16>
    %c1_87 = arith.constant 1 : index
    %c0_88 = arith.constant 0 : index
    %c0_89 = arith.constant 0 : index
    %140 = vector.load %arg8[%c1_87, %c0_88, %c0_89] : memref<3x240x256xbf16, #tpu.memory_space<vmem>>, vector<1x240x256xbf16>
    %141 = vector.shape_cast %140 : vector<1x240x256xbf16> to vector<240x256xbf16>
    %cst_90 = arith.constant dense<0.000000e+00> : vector<8x256xf32>
    %142 = tpu.matmul %139, %141, %cst_90 {dimension_numbers = #tpu.dot_dimension_numbers<[1], [0], [0], [1], [0, 0, 1, 1], [], []>} : vector<8x240xbf16>, vector<240x256xbf16>, vector<8x256xf32> -> vector<8x256xf32>
    %143 = arith.addf %138, %142 : vector<8x256xf32>
    %144 = vector.extract_strided_slice %134 {offsets = [2, 0], sizes = [8, 240], strides = [1, 1]} : vector<10x240xbf16> to vector<8x240xbf16>
    %c2_91 = arith.constant 2 : index
    %c0_92 = arith.constant 0 : index
    %c0_93 = arith.constant 0 : index
    %145 = vector.load %arg8[%c2_91, %c0_92, %c0_93] : memref<3x240x256xbf16, #tpu.memory_space<vmem>>, vector<1x240x256xbf16>
    %146 = vector.shape_cast %145 : vector<1x240x256xbf16> to vector<240x256xbf16>
    %cst_94 = arith.constant dense<0.000000e+00> : vector<8x256xf32>
    %147 = tpu.matmul %144, %146, %cst_94 {dimension_numbers = #tpu.dot_dimension_numbers<[1], [0], [0], [1], [0, 0, 1, 1], [], []>} : vector<8x240xbf16>, vector<240x256xbf16>, vector<8x256xf32> -> vector<8x256xf32>
    %148 = arith.addf %143, %147 : vector<8x256xf32>
    %c0_95 = arith.constant 0 : index
    %c0_96 = arith.constant 0 : index
    %149 = vector.load %arg9[%c0_95, %c0_96] : memref<1x256xf32, #tpu.memory_space<vmem>>, vector<1x256xf32>
    %150 = vector.broadcast %149 : vector<1x256xf32> to vector<8x256xf32>
    %151 = arith.mulf %148, %150 : vector<8x256xf32>
    %c0_97 = arith.constant 0 : index
    %c0_98 = arith.constant 0 : index
    %152 = vector.load %arg10[%c0_97, %c0_98] : memref<1x256xf32, #tpu.memory_space<vmem>>, vector<1x256xf32>
    %153 = vector.broadcast %152 : vector<1x256xf32> to vector<8x256xf32>
    %154 = arith.addf %151, %153 : vector<8x256xf32>
    %cst_99 = arith.constant 0.000000e+00 : f32
    %155 = vector.broadcast %cst_99 : f32 to vector<8x256xf32>
    %156 = arith.maximumf %154, %155 : vector<8x256xf32>
    %157 = vector.extract_strided_slice %156 {offsets = [0, 0], sizes = [7, 256], strides = [1, 1]} : vector<8x256xf32> to vector<7x256xf32>
    %158 = vector.extract_strided_slice %156 {offsets = [1, 0], sizes = [7, 256], strides = [1, 1]} : vector<8x256xf32> to vector<7x256xf32>
    %159 = arith.maximumf %157, %158 : vector<7x256xf32>
    %160 = arith.truncf %159 : vector<7x256xf32> to vector<7x256xbf16>
    %161 = tpu.iota {dimensions = array<i32: 0>} : vector<4x7xi32>
    %162 = tpu.iota {dimensions = array<i32: 1>} : vector<4x7xi32>
    %c2_i32_100 = arith.constant 2 : i32
    %163 = vector.broadcast %c2_i32_100 : i32 to vector<4x7xi32>
    %164 = arith.muli %163, %161 : vector<4x7xi32>
    %165 = arith.cmpi eq, %162, %164 : vector<4x7xi32>
    %166 = arith.extui %165 : vector<4x7xi1> to vector<4x7xi32>
    %167 = arith.sitofp %166 : vector<4x7xi32> to vector<4x7xf32>
    %168 = arith.truncf %167 : vector<4x7xf32> to vector<4x7xbf16>
    %cst_101 = arith.constant dense<0.000000e+00> : vector<4x256xf32>
    %169 = tpu.matmul %168, %160, %cst_101 {dimension_numbers = #tpu.dot_dimension_numbers<[1], [0], [0], [1], [0, 0, 1, 1], [], []>} : vector<4x7xbf16>, vector<7x256xbf16>, vector<4x256xf32> -> vector<4x256xf32>
    %170 = vector.extract_strided_slice %169 {offsets = [0, 0], sizes = [4, 224], strides = [1, 1]} : vector<4x256xf32> to vector<4x224xf32>
    %171 = vector.extract_strided_slice %169 {offsets = [0, 32], sizes = [4, 224], strides = [1, 1]} : vector<4x256xf32> to vector<4x224xf32>
    %172 = arith.maximumf %170, %171 : vector<4x224xf32>
    %173 = arith.truncf %172 : vector<4x224xf32> to vector<4x224xbf16>
    %174 = vector.extract_strided_slice %173 {offsets = [0, 0], sizes = [1, 224], strides = [1, 1]} : vector<4x224xbf16> to vector<1x224xbf16>
    %c0_102 = arith.constant 0 : index
    %c0_103 = arith.constant 0 : index
    %c0_104 = arith.constant 0 : index
    %175 = vector.load %arg11[%c0_102, %c0_103, %c0_104] : memref<4x224x32xbf16, #tpu.memory_space<vmem>>, vector<1x224x32xbf16>
    %176 = vector.shape_cast %175 : vector<1x224x32xbf16> to vector<224x32xbf16>
    %cst_105 = arith.constant dense<0.000000e+00> : vector<1x32xf32>
    %177 = tpu.matmul %174, %176, %cst_105 {dimension_numbers = #tpu.dot_dimension_numbers<[1], [0], [0], [1], [0, 0, 1, 1], [], []>} : vector<1x224xbf16>, vector<224x32xbf16>, vector<1x32xf32> -> vector<1x32xf32>
    %178 = vector.extract_strided_slice %173 {offsets = [1, 0], sizes = [1, 224], strides = [1, 1]} : vector<4x224xbf16> to vector<1x224xbf16>
    %c1_106 = arith.constant 1 : index
    %c0_107 = arith.constant 0 : index
    %c0_108 = arith.constant 0 : index
    %179 = vector.load %arg11[%c1_106, %c0_107, %c0_108] : memref<4x224x32xbf16, #tpu.memory_space<vmem>>, vector<1x224x32xbf16>
    %180 = vector.shape_cast %179 : vector<1x224x32xbf16> to vector<224x32xbf16>
    %cst_109 = arith.constant dense<0.000000e+00> : vector<1x32xf32>
    %181 = tpu.matmul %178, %180, %cst_109 {dimension_numbers = #tpu.dot_dimension_numbers<[1], [0], [0], [1], [0, 0, 1, 1], [], []>} : vector<1x224xbf16>, vector<224x32xbf16>, vector<1x32xf32> -> vector<1x32xf32>
    %182 = arith.addf %177, %181 : vector<1x32xf32>
    %183 = vector.extract_strided_slice %173 {offsets = [2, 0], sizes = [1, 224], strides = [1, 1]} : vector<4x224xbf16> to vector<1x224xbf16>
    %c2_110 = arith.constant 2 : index
    %c0_111 = arith.constant 0 : index
    %c0_112 = arith.constant 0 : index
    %184 = vector.load %arg11[%c2_110, %c0_111, %c0_112] : memref<4x224x32xbf16, #tpu.memory_space<vmem>>, vector<1x224x32xbf16>
    %185 = vector.shape_cast %184 : vector<1x224x32xbf16> to vector<224x32xbf16>
    %cst_113 = arith.constant dense<0.000000e+00> : vector<1x32xf32>
    %186 = tpu.matmul %183, %185, %cst_113 {dimension_numbers = #tpu.dot_dimension_numbers<[1], [0], [0], [1], [0, 0, 1, 1], [], []>} : vector<1x224xbf16>, vector<224x32xbf16>, vector<1x32xf32> -> vector<1x32xf32>
    %187 = arith.addf %182, %186 : vector<1x32xf32>
    %188 = vector.extract_strided_slice %173 {offsets = [3, 0], sizes = [1, 224], strides = [1, 1]} : vector<4x224xbf16> to vector<1x224xbf16>
    %c3 = arith.constant 3 : index
    %c0_114 = arith.constant 0 : index
    %c0_115 = arith.constant 0 : index
    %189 = vector.load %arg11[%c3, %c0_114, %c0_115] : memref<4x224x32xbf16, #tpu.memory_space<vmem>>, vector<1x224x32xbf16>
    %190 = vector.shape_cast %189 : vector<1x224x32xbf16> to vector<224x32xbf16>
    %cst_116 = arith.constant dense<0.000000e+00> : vector<1x32xf32>
    %191 = tpu.matmul %188, %190, %cst_116 {dimension_numbers = #tpu.dot_dimension_numbers<[1], [0], [0], [1], [0, 0, 1, 1], [], []>} : vector<1x224xbf16>, vector<224x32xbf16>, vector<1x32xf32> -> vector<1x32xf32>
    %192 = arith.addf %187, %191 : vector<1x32xf32>
    %c0_117 = arith.constant 0 : index
    %c0_118 = arith.constant 0 : index
    %193 = vector.load %arg12[%c0_117, %c0_118] : memref<1x32xf32, #tpu.memory_space<vmem>>, vector<1x32xf32>
    %194 = arith.mulf %192, %193 : vector<1x32xf32>
    %c0_119 = arith.constant 0 : index
    %c0_120 = arith.constant 0 : index
    %195 = vector.load %arg13[%c0_119, %c0_120] : memref<1x32xf32, #tpu.memory_space<vmem>>, vector<1x32xf32>
    %196 = arith.addf %194, %195 : vector<1x32xf32>
    %cst_121 = arith.constant 0.000000e+00 : f32
    %197 = vector.broadcast %cst_121 : f32 to vector<1x32xf32>
    %198 = arith.maximumf %196, %197 : vector<1x32xf32>
    %199 = arith.truncf %198 : vector<1x32xf32> to vector<1x32xbf16>
    %c0_122 = arith.constant 0 : index
    %c0_123 = arith.constant 0 : index
    %200 = vector.load %arg14[%c0_122, %c0_123] : memref<32x6xbf16, #tpu.memory_space<vmem>>, vector<32x6xbf16>
    %cst_124 = arith.constant dense<0.000000e+00> : vector<1x6xf32>
    %201 = tpu.matmul %199, %200, %cst_124 {dimension_numbers = #tpu.dot_dimension_numbers<[1], [0], [0], [1], [0, 0, 1, 1], [], []>} : vector<1x32xbf16>, vector<32x6xbf16>, vector<1x6xf32> -> vector<1x6xf32>
    %c0_125 = arith.constant 0 : index
    %c0_126 = arith.constant 0 : index
    %202 = vector.load %arg15[%c0_125, %c0_126] : memref<1x6xf32, #tpu.memory_space<vmem>>, vector<1x6xf32>
    %203 = arith.addf %201, %202 : vector<1x6xf32>
    %c0_127 = arith.constant 0 : index
    %c0_128 = arith.constant 0 : index
    %c0_129 = arith.constant 0 : index
    %204 = vector.load %arg16[%c0_127, %c0_128, %c0_129] : memref<1x1x6xf32, #tpu.memory_space<vmem>>, vector<1x1x6xf32>
    %205 = vector.shape_cast %204 : vector<1x1x6xf32> to vector<1x6xf32>
    %206 = vector.shape_cast %203 : vector<1x6xf32> to vector<1x1x6xf32>
    tpu.vector_store %arg16[%c0_127, %c0_128, %c0_129], %206 {strides = array<i32>} : memref<1x1x6xf32, #tpu.memory_space<vmem>>, vector<1x1x6xf32>,
    return
  }
  func.func @transform_0(%arg0: i32) -> (i32, i32, i32, i32) {
    %c0_i32 = arith.constant 0 : i32
    %c0_i32_0 = arith.constant 0 : i32
    %c0_i32_1 = arith.constant 0 : i32
    %c0_i32_2 = arith.constant 0 : i32
    return %arg0, %c0_i32, %c0_i32_0, %c0_i32_1 : i32, i32, i32, i32
  }
  func.func @transform_1(%arg0: i32) -> (i32, i32, i32, i32) {
    %c0_i32 = arith.constant 0 : i32
    %c0_i32_0 = arith.constant 0 : i32
    %c0_i32_1 = arith.constant 0 : i32
    %c0_i32_2 = arith.constant 0 : i32
    %c0_i32_3 = arith.constant 0 : i32
    return %c0_i32, %c0_i32_0, %c0_i32_1, %c0_i32_2 : i32, i32, i32, i32
  }
  func.func @transform_2(%arg0: i32) -> (i32, i32) {
    %c0_i32 = arith.constant 0 : i32
    %c0_i32_0 = arith.constant 0 : i32
    %c0_i32_1 = arith.constant 0 : i32
    return %c0_i32, %c0_i32_0 : i32, i32
  }
  func.func @transform_3(%arg0: i32) -> (i32, i32) {
    %c0_i32 = arith.constant 0 : i32
    %c0_i32_0 = arith.constant 0 : i32
    %c0_i32_1 = arith.constant 0 : i32
    return %c0_i32, %c0_i32_0 : i32, i32
  }
  func.func @transform_4(%arg0: i32) -> (i32, i32, i32) {
    %c0_i32 = arith.constant 0 : i32
    %c0_i32_0 = arith.constant 0 : i32
    %c0_i32_1 = arith.constant 0 : i32
    %c0_i32_2 = arith.constant 0 : i32
    return %c0_i32, %c0_i32_0, %c0_i32_1 : i32, i32, i32
  }
  func.func @transform_5(%arg0: i32) -> (i32, i32) {
    %c0_i32 = arith.constant 0 : i32
    %c0_i32_0 = arith.constant 0 : i32
    %c0_i32_1 = arith.constant 0 : i32
    return %c0_i32, %c0_i32_0 : i32, i32
  }
  func.func @transform_6(%arg0: i32) -> (i32, i32) {
    %c0_i32 = arith.constant 0 : i32
    %c0_i32_0 = arith.constant 0 : i32
    %c0_i32_1 = arith.constant 0 : i32
    return %c0_i32, %c0_i32_0 : i32, i32
  }
  func.func @transform_7(%arg0: i32) -> (i32, i32, i32) {
    %c0_i32 = arith.constant 0 : i32
    %c0_i32_0 = arith.constant 0 : i32
    %c0_i32_1 = arith.constant 0 : i32
    %c0_i32_2 = arith.constant 0 : i32
    return %c0_i32, %c0_i32_0, %c0_i32_1 : i32, i32, i32
  }
  func.func @transform_8(%arg0: i32) -> (i32, i32) {
    %c0_i32 = arith.constant 0 : i32
    %c0_i32_0 = arith.constant 0 : i32
    %c0_i32_1 = arith.constant 0 : i32
    return %c0_i32, %c0_i32_0 : i32, i32
  }
  func.func @transform_9(%arg0: i32) -> (i32, i32) {
    %c0_i32 = arith.constant 0 : i32
    %c0_i32_0 = arith.constant 0 : i32
    %c0_i32_1 = arith.constant 0 : i32
    return %c0_i32, %c0_i32_0 : i32, i32
  }
  func.func @transform_10(%arg0: i32) -> (i32, i32, i32) {
    %c0_i32 = arith.constant 0 : i32
    %c0_i32_0 = arith.constant 0 : i32
    %c0_i32_1 = arith.constant 0 : i32
    %c0_i32_2 = arith.constant 0 : i32
    return %c0_i32, %c0_i32_0, %c0_i32_1 : i32, i32, i32
  }
  func.func @transform_11(%arg0: i32) -> (i32, i32) {
    %c0_i32 = arith.constant 0 : i32
    %c0_i32_0 = arith.constant 0 : i32
    %c0_i32_1 = arith.constant 0 : i32
    return %c0_i32, %c0_i32_0 : i32, i32
  }
  func.func @transform_12(%arg0: i32) -> (i32, i32) {
    %c0_i32 = arith.constant 0 : i32
    %c0_i32_0 = arith.constant 0 : i32
    %c0_i32_1 = arith.constant 0 : i32
    return %c0_i32, %c0_i32_0 : i32, i32
  }
  func.func @transform_13(%arg0: i32) -> (i32, i32) {
    %c0_i32 = arith.constant 0 : i32
    %c0_i32_0 = arith.constant 0 : i32
    %c0_i32_1 = arith.constant 0 : i32
    return %c0_i32, %c0_i32_0 : i32, i32
  }
  func.func @transform_14(%arg0: i32) -> (i32, i32) {
    %c0_i32 = arith.constant 0 : i32
    %c0_i32_0 = arith.constant 0 : i32
    %c0_i32_1 = arith.constant 0 : i32
    return %c0_i32, %c0_i32_0 : i32, i32
  }
  func.func @transform_15(%arg0: i32) -> (i32, i32, i32) {
    %c0_i32 = arith.constant 0 : i32
    %c0_i32_0 = arith.constant 0 : i32
    %c0_i32_1 = arith.constant 0 : i32
    return %arg0, %c0_i32, %c0_i32_0 : i32, i32, i32
  }
}

</mosaic_0001>

<llo_original>
// kernel: forward.1
$region0: #{forward.1}
  #allocation0 [shape = 'u32[]', space=smem, size = 0x4, offset = 0x4, fixed_abs, tag = 'smem constant byte address 0x4 - core index']
  #allocation1 [shape = 'u32[144,128]{1,0:T(1,128)}', space=vmem, size = 0x12000, scoped, tag = 'internal scratch']
  %s0 = inlined_call_operand.vmem [shape: f32[2,3,32,32], index: 0, kind: input, shape index: {}]
  %s1 = inlined_call_operand.vmem [shape: bf16[3,3,32,256], index: 1, kind: input, shape index: {}]
  %s2 = inlined_call_operand.vmem [shape: f32[1,256], index: 2, kind: input, shape index: {}]
  %s3 = inlined_call_operand.vmem [shape: f32[1,256], index: 3, kind: input, shape index: {}]
  %s4 = inlined_call_operand.hbm [shape: bf16[3,248,256], index: 4, kind: input, shape index: {}]
  %s5 = inlined_call_operand.vmem [shape: f32[1,256], index: 5, kind: input, shape index: {}]
  %s6 = inlined_call_operand.vmem [shape: f32[1,256], index: 6, kind: input, shape index: {}]
  %s7 = inlined_call_operand.hbm [shape: bf16[3,240,256], index: 7, kind: input, shape index: {}]
  %s8 = inlined_call_operand.vmem [shape: f32[1,256], index: 8, kind: input, shape index: {}]
  %s9 = inlined_call_operand.vmem [shape: f32[1,256], index: 9, kind: input, shape index: {}]
  %s10 = inlined_call_operand.vmem [shape: bf16[4,224,32], index: 10, kind: input, shape index: {}]
  %s11 = inlined_call_operand.vmem [shape: f32[1,32], index: 11, kind: input, shape index: {}]
  %s12 = inlined_call_operand.vmem [shape: f32[1,32], index: 12, kind: input, shape index: {}]
  %s13 = inlined_call_operand.vmem [shape: bf16[32,6], index: 13, kind: input, shape index: {}]
  %s14 = inlined_call_operand.vmem [shape: f32[1,6], index: 14, kind: input, shape index: {}]
  %s15 = inlined_call_operand.hbm [shape: f32[2,1,6], index: 15, kind: output, shape index: {}]
  %s16 = sld [smem:[#allocation0]]
  $region101: #{forward.1} parent=0
    _
  %s18 = ssub.s32 1, %s16
  %s19 = scalar_select 0, %s18, %s16
  $region1: #{forward.1} parent=0
    #allocation2 [shape = 'u8[380928]{0}', space=vmem, size = 0x5d000, scoped, tag = 'input window, operand 4, single buffered']
    #allocation3 [shape = 's32[2]{0}', space=sflag, size = 0x8, scoped, tag = 'scoped memory for forward.1']
    #allocation4 [shape = 's32[2]{0}', space=sflag, size = 0x8, scoped, tag = 'scoped memory for forward.1']
    #allocation5 [shape = 'u8[368640]{0}', space=vmem, size = 0x5a000, scoped, tag = 'input window, operand 7, single buffered']
    #allocation6 [shape = 's32[1]{0}', space=sflag, size = 0x4, scoped, tag = 'scoped memory for forward.1']
    #allocation7 [shape = 'u8[1024]{0}', space=vmem, size = 0x400, scoped, tag = 'output window, operand 0']
    %20 = vsyncpa [#allocation3], 0
    %21 = vsyncpa [#allocation6], 0
    %22 = vsyncpa [#allocation4], 0
    %s23 = scalar_lea.sflag [#allocation4], 1
    %24 = vsyncpa %s23, 0
    loop: start=0, step=1, limit=4
    $region2: #{forward.1} parent=1 // loop_pre_header
      _
    $region3: #{forward.1} parent=1 // loop_header
      %s26 = sphi 0, %s30
      %p27 = scmp.ge.s32.totalorder %s26, 4
      %s36 = sphi 0, %s38
      %s39 = sphi 0, %s36
      %s40 = sphi 0, %s39
      %s56 = sphi 0, %s40
      %s60 = sphi 0, %s60
      %s62 = sphi 0, %s60
      %s63 = sphi 0, %s62
      %s77 = sphi 0, %s63
      %s81 = sphi 0, %s81
      %s83 = sphi 0, %s81
      %s84 = sphi 0, %s83
      %s98 = sphi 0, %s84
      %s102 = sphi 0, %s102
      %s104 = sphi 0, %s102
      %s105 = sphi 0, %s104
      %s119 = sphi 0, %s105
      %s123 = sphi 0, %s123
      %s125 = sphi 0, %s123
      %s126 = sphi 0, %s125
      %s140 = sphi 0, %s126
      %s144 = sphi 0, %s144
      %s146 = sphi 0, %s144
      %s147 = sphi 0, %s146
      %s161 = sphi 0, %s147
      %s165 = sphi 0, %s165
      %s167 = sphi 0, %s165
      %s168 = sphi 0, %s167
      %s182 = sphi 0, %s168
      %s186 = sphi 0, %s186
      %s188 = sphi 0, %s186
      %s189 = sphi 0, %s188
      %s203 = sphi 0, %s189
      %s207 = sphi 0, %s207
      %s209 = sphi 0, %s207
      %s210 = sphi 0, %s209
      %s224 = sphi 0, %s210
      %s228 = sphi 0, %s228
      %s230 = sphi 0, %s228
      %s231 = sphi 0, %s230
      %s245 = sphi 0, %s231
      %s249 = sphi 0, %s249
      %s251 = sphi 0, %s249
      %s252 = sphi 0, %s251
      %s266 = sphi 0, %s252
      %s270 = sphi 0, %s270
      %s272 = sphi 0, %s270
      %s273 = sphi 0, %s272
      %s287 = sphi 0, %s273
      %s291 = sphi 0, %s291
      %s293 = sphi 0, %s291
      %s294 = sphi 0, %s293
      %s308 = sphi 0, %s294
      %s312 = sphi 0, %s312
      %s314 = sphi 0, %s312
      %s315 = sphi 0, %s314
      %s329 = sphi 0, %s315
      %s333 = sphi 0, %s333
      %s335 = sphi 0, %s333
      %s336 = sphi 0, %s335
      %s350 = sphi 0, %s336
      %s356 = sphi 0, %s358
      %s359 = sphi 0, %s356
      %s360 = sphi 0, %s359
      %s376 = sphi 0, %s360
    $region4: #{forward.1} parent=1 // loop_header_branch
      %29 = sbr.rel (%p27) target = $region8
    $region5: #{forward.1} parent=1 // loop_body
      %s31 = ssub.s32 %s26, 1
      %s32 = ssub.s32 %s26, 2
      %s33 = sadd.s32 %s26, 1
      %s34 = ssub.s32 %s26, %s33
      %p35 = scmp.eq.s32.totalorder %s34, 0
      %s37 = sadd.s32 %s36, 1
      %s38 = scalar_select %p35, %s36, %s37
      %p41 = pneg %p35
      %p42 = scmp.eq.s32.totalorder %s26, 1
      %p43 = por %p41, %p42
      %p44 = scmp.ne.s32.totalorder %s36, %s39
      %p45 = scmp.eq.s32.totalorder %s26, 0
      %p46 = por %p44, %p45
      %p47 = scmp.ne.s32.totalorder %s36, %s39
      %p48 = scmp.eq.s32.totalorder %s31, 1
      %p49 = por %p47, %p48
      %p50 = scmp.ne.s32.totalorder %s39, %s40
      %p51 = scmp.eq.s32.totalorder %s31, 0
      %p52 = por %p50, %p51
      %p53 = scmp.ne.s32.totalorder %s39, %s40
      %p54 = scmp.eq.s32.totalorder %s32, 1
      %p55 = por %p53, %p54
      %p57 = scmp.ne.s32.totalorder %s40, %s56
      %p58 = scmp.eq.s32.totalorder %s32, 0
      %p59 = por %p57, %p58
      %s61 = sadd.s32 %s60, 1
      %p64 = scmp.eq.s32.totalorder %s26, 1
      %p65 = scmp.ne.s32.totalorder %s60, %s62
      %p66 = scmp.eq.s32.totalorder %s26, 0
      %p67 = por %p65, %p66
      %p68 = scmp.ne.s32.totalorder %s60, %s62
      %p69 = scmp.eq.s32.totalorder %s31, 1
      %p70 = por %p68, %p69
      %p71 = scmp.ne.s32.totalorder %s62, %s63
      %p72 = scmp.eq.s32.totalorder %s31, 0
      %p73 = por %p71, %p72
      %p74 = scmp.ne.s32.totalorder %s62, %s63
      %p75 = scmp.eq.s32.totalorder %s32, 1
      %p76 = por %p74, %p75
      %p78 = scmp.ne.s32.totalorder %s63, %s77
      %p79 = scmp.eq.s32.totalorder %s32, 0
      %p80 = por %p78, %p79
      %s82 = sadd.s32 %s81, 1
      %p85 = scmp.eq.s32.totalorder %s26, 1
      %p86 = scmp.ne.s32.totalorder %s81, %s83
      %p87 = scmp.eq.s32.totalorder %s26, 0
      %p88 = por %p86, %p87
      %p89 = scmp.ne.s32.totalorder %s81, %s83
      %p90 = scmp.eq.s32.totalorder %s31, 1
      %p91 = por %p89, %p90
      %p92 = scmp.ne.s32.totalorder %s83, %s84
      %p93 = scmp.eq.s32.totalorder %s31, 0
      %p94 = por %p92, %p93
      %p95 = scmp.ne.s32.totalorder %s83, %s84
      %p96 = scmp.eq.s32.totalorder %s32, 1
      %p97 = por %p95, %p96
      %p99 = scmp.ne.s32.totalorder %s84, %s98
      %p100 = scmp.eq.s32.totalorder %s32, 0
      %p101 = por %p99, %p100
      %s103 = sadd.s32 %s102, 1
      %p106 = scmp.eq.s32.totalorder %s26, 1
      %p107 = scmp.ne.s32.totalorder %s102, %s104
      %p108 = scmp.eq.s32.totalorder %s26, 0
      %p109 = por %p107, %p108
      %p110 = scmp.ne.s32.totalorder %s102, %s104
      %p111 = scmp.eq.s32.totalorder %s31, 1
      %p112 = por %p110, %p111
      %p113 = scmp.ne.s32.totalorder %s104, %s105
      %p114 = scmp.eq.s32.totalorder %s31, 0
      %p115 = por %p113, %p114
      %p116 = scmp.ne.s32.totalorder %s104, %s105
      %p117 = scmp.eq.s32.totalorder %s32, 1
      %p118 = por %p116, %p117
      %p120 = scmp.ne.s32.totalorder %s105, %s119
      %p121 = scmp.eq.s32.totalorder %s32, 0
      %p122 = por %p120, %p121
      %s124 = sadd.s32 %s123, 1
      %p127 = scmp.eq.s32.totalorder %s26, 1
      %p128 = scmp.ne.s32.totalorder %s123, %s125
      %p129 = scmp.eq.s32.totalorder %s26, 0
      %p130 = por %p128, %p129
      %p131 = scmp.ne.s32.totalorder %s123, %s125
      %p132 = scmp.eq.s32.totalorder %s31, 1
      %p133 = por %p131, %p132
      %p134 = scmp.ne.s32.totalorder %s125, %s126
      %p135 = scmp.eq.s32.totalorder %s31, 0
      %p136 = por %p134, %p135
      %p137 = scmp.ne.s32.totalorder %s125, %s126
      %p138 = scmp.eq.s32.totalorder %s32, 1
      %p139 = por %p137, %p138
      %p141 = scmp.ne.s32.totalorder %s126, %s140
      %p142 = scmp.eq.s32.totalorder %s32, 0
      %p143 = por %p141, %p142
      %s145 = sadd.s32 %s144, 1
      %p148 = scmp.eq.s32.totalorder %s26, 1
      %p149 = scmp.ne.s32.totalorder %s144, %s146
      %p150 = scmp.eq.s32.totalorder %s26, 0
      %p151 = por %p149, %p150
      %p152 = scmp.ne.s32.totalorder %s144, %s146
      %p153 = scmp.eq.s32.totalorder %s31, 1
      %p154 = por %p152, %p153
      %p155 = scmp.ne.s32.totalorder %s146, %s147
      %p156 = scmp.eq.s32.totalorder %s31, 0
      %p157 = por %p155, %p156
      %p158 = scmp.ne.s32.totalorder %s146, %s147
      %p159 = scmp.eq.s32.totalorder %s32, 1
      %p160 = por %p158, %p159
      %p162 = scmp.ne.s32.totalorder %s147, %s161
      %p163 = scmp.eq.s32.totalorder %s32, 0
      %p164 = por %p162, %p163
      %s166 = sadd.s32 %s165, 1
      %p169 = scmp.eq.s32.totalorder %s26, 1
      %p170 = scmp.ne.s32.totalorder %s165, %s167
      %p171 = scmp.eq.s32.totalorder %s26, 0
      %p172 = por %p170, %p171
      %p173 = scmp.ne.s32.totalorder %s165, %s167
      %p174 = scmp.eq.s32.totalorder %s31, 1
      %p175 = por %p173, %p174
      %p176 = scmp.ne.s32.totalorder %s167, %s168
      %p177 = scmp.eq.s32.totalorder %s31, 0
      %p178 = por %p176, %p177
      %p179 = scmp.ne.s32.totalorder %s167, %s168
      %p180 = scmp.eq.s32.totalorder %s32, 1
      %p181 = por %p179, %p180
      %p183 = scmp.ne.s32.totalorder %s168, %s182
      %p184 = scmp.eq.s32.totalorder %s32, 0
      %p185 = por %p183, %p184
      %s187 = sadd.s32 %s186, 1
      %p190 = scmp.eq.s32.totalorder %s26, 1
      %p191 = scmp.ne.s32.totalorder %s186, %s188
      %p192 = scmp.eq.s32.totalorder %s26, 0
      %p193 = por %p191, %p192
      %p194 = scmp.ne.s32.totalorder %s186, %s188
      %p195 = scmp.eq.s32.totalorder %s31, 1
      %p196 = por %p194, %p195
      %p197 = scmp.ne.s32.totalorder %s188, %s189
      %p198 = scmp.eq.s32.totalorder %s31, 0
      %p199 = por %p197, %p198
      %p200 = scmp.ne.s32.totalorder %s188, %s189
      %p201 = scmp.eq.s32.totalorder %s32, 1
      %p202 = por %p200, %p201
      %p204 = scmp.ne.s32.totalorder %s189, %s203
      %p205 = scmp.eq.s32.totalorder %s32, 0
      %p206 = por %p204, %p205
      %s208 = sadd.s32 %s207, 1
      %p211 = scmp.eq.s32.totalorder %s26, 1
      %p212 = scmp.ne.s32.totalorder %s207, %s209
      %p213 = scmp.eq.s32.totalorder %s26, 0
      %p214 = por %p212, %p213
      %p215 = scmp.ne.s32.totalorder %s207, %s209
      %p216 = scmp.eq.s32.totalorder %s31, 1
      %p217 = por %p215, %p216
      %p218 = scmp.ne.s32.totalorder %s209, %s210
      %p219 = scmp.eq.s32.totalorder %s31, 0
      %p220 = por %p218, %p219
      %p221 = scmp.ne.s32.totalorder %s209, %s210
      %p222 = scmp.eq.s32.totalorder %s32, 1
      %p223 = por %p221, %p222
      %p225 = scmp.ne.s32.totalorder %s210, %s224
      %p226 = scmp.eq.s32.totalorder %s32, 0
      %p227 = por %p225, %p226
      %s229 = sadd.s32 %s228, 1
      %p232 = scmp.eq.s32.totalorder %s26, 1
      %p233 = scmp.ne.s32.totalorder %s228, %s230
      %p234 = scmp.eq.s32.totalorder %s26, 0
      %p235 = por %p233, %p234
      %p236 = scmp.ne.s32.totalorder %s228, %s230
      %p237 = scmp.eq.s32.totalorder %s31, 1
      %p238 = por %p236, %p237
      %p239 = scmp.ne.s32.totalorder %s230, %s231
      %p240 = scmp.eq.s32.totalorder %s31, 0
      %p241 = por %p239, %p240
      %p242 = scmp.ne.s32.totalorder %s230, %s231
      %p243 = scmp.eq.s32.totalorder %s32, 1
      %p244 = por %p242, %p243
      %p246 = scmp.ne.s32.totalorder %s231, %s245
      %p247 = scmp.eq.s32.totalorder %s32, 0
      %p248 = por %p246, %p247
      %s250 = sadd.s32 %s249, 1
      %p253 = scmp.eq.s32.totalorder %s26, 1
      %p254 = scmp.ne.s32.totalorder %s249, %s251
      %p255 = scmp.eq.s32.totalorder %s26, 0
      %p256 = por %p254, %p255
      %p257 = scmp.ne.s32.totalorder %s249, %s251
      %p258 = scmp.eq.s32.totalorder %s31, 1
      %p259 = por %p257, %p258
      %p260 = scmp.ne.s32.totalorder %s251, %s252
      %p261 = scmp.eq.s32.totalorder %s31, 0
      %p262 = por %p260, %p261
      %p263 = scmp.ne.s32.totalorder %s251, %s252
      %p264 = scmp.eq.s32.totalorder %s32, 1
      %p265 = por %p263, %p264
      %p267 = scmp.ne.s32.totalorder %s252, %s266
      %p268 = scmp.eq.s32.totalorder %s32, 0
      %p269 = por %p267, %p268
      %s271 = sadd.s32 %s270, 1
      %p274 = scmp.eq.s32.totalorder %s26, 1
      %p275 = scmp.ne.s32.totalorder %s270, %s272
      %p276 = scmp.eq.s32.totalorder %s26, 0
      %p277 = por %p275, %p276
      %p278 = scmp.ne.s32.totalorder %s270, %s272
      %p279 = scmp.eq.s32.totalorder %s31, 1
      %p280 = por %p278, %p279
      %p281 = scmp.ne.s32.totalorder %s272, %s273
      %p282 = scmp.eq.s32.totalorder %s31, 0
      %p283 = por %p281, %p282
      %p284 = scmp.ne.s32.totalorder %s272, %s273
      %p285 = scmp.eq.s32.totalorder %s32, 1
      %p286 = por %p284, %p285
      %p288 = scmp.ne.s32.totalorder %s273, %s287
      %p289 = scmp.eq.s32.totalorder %s32, 0
      %p290 = por %p288, %p289
      %s292 = sadd.s32 %s291, 1
      %p295 = scmp.eq.s32.totalorder %s26, 1
      %p296 = scmp.ne.s32.totalorder %s291, %s293
      %p297 = scmp.eq.s32.totalorder %s26, 0
      %p298 = por %p296, %p297
      %p299 = scmp.ne.s32.totalorder %s291, %s293
      %p300 = scmp.eq.s32.totalorder %s31, 1
      %p301 = por %p299, %p300
      %p302 = scmp.ne.s32.totalorder %s293, %s294
      %p303 = scmp.eq.s32.totalorder %s31, 0
      %p304 = por %p302, %p303
      %p305 = scmp.ne.s32.totalorder %s293, %s294
      %p306 = scmp.eq.s32.totalorder %s32, 1
      %p307 = por %p305, %p306
      %p309 = scmp.ne.s32.totalorder %s294, %s308
      %p310 = scmp.eq.s32.totalorder %s32, 0
      %p311 = por %p309, %p310
      %s313 = sadd.s32 %s312, 1
      %p316 = scmp.eq.s32.totalorder %s26, 1
      %p317 = scmp.ne.s32.totalorder %s312, %s314
      %p318 = scmp.eq.s32.totalorder %s26, 0
      %p319 = por %p317, %p318
      %p320 = scmp.ne.s32.totalorder %s312, %s314
      %p321 = scmp.eq.s32.totalorder %s31, 1
      %p322 = por %p320, %p321
      %p323 = scmp.ne.s32.totalorder %s314, %s315
      %p324 = scmp.eq.s32.totalorder %s31, 0
      %p325 = por %p323, %p324
      %p326 = scmp.ne.s32.totalorder %s314, %s315
      %p327 = scmp.eq.s32.totalorder %s32, 1
      %p328 = por %p326, %p327
      %p330 = scmp.ne.s32.totalorder %s315, %s329
      %p331 = scmp.eq.s32.totalorder %s32, 0
      %p332 = por %p330, %p331
      %s334 = sadd.s32 %s333, 1
      %p337 = scmp.eq.s32.totalorder %s26, 1
      %p338 = scmp.ne.s32.totalorder %s333, %s335
      %p339 = scmp.eq.s32.totalorder %s26, 0
      %p340 = por %p338, %p339
      %p341 = scmp.ne.s32.totalorder %s333, %s335
      %p342 = scmp.eq.s32.totalorder %s31, 1
      %p343 = por %p341, %p342
      %p344 = scmp.ne.s32.totalorder %s335, %s336
      %p345 = scmp.eq.s32.totalorder %s31, 0
      %p346 = por %p344, %p345
      %p347 = scmp.ne.s32.totalorder %s335, %s336
      %p348 = scmp.eq.s32.totalorder %s32, 1
      %p349 = por %p347, %p348
      %p351 = scmp.ne.s32.totalorder %s336, %s350
      %p352 = scmp.eq.s32.totalorder %s32, 0
      %p353 = por %p351, %p352
      %s354 = ssub.s32 %s26, %s33
      %p355 = scmp.eq.s32.totalorder %s354, 0
      %s357 = sadd.s32 %s356, 1
      %s358 = scalar_select %p355, %s356, %s357
      %p361 = pneg %p355
      %p362 = scmp.eq.s32.totalorder %s26, 1
      %p363 = por %p361, %p362
      %p364 = scmp.ne.s32.totalorder %s356, %s359
      %p365 = scmp.eq.s32.totalorder %s26, 0
      %p366 = por %p364, %p365
      %p367 = scmp.ne.s32.totalorder %s356, %s359
      %p368 = scmp.eq.s32.totalorder %s31, 1
      %p369 = por %p367, %p368
      %p370 = scmp.ne.s32.totalorder %s359, %s360
      %p371 = scmp.eq.s32.totalorder %s31, 0
      %p372 = por %p370, %p371
      %p373 = scmp.ne.s32.totalorder %s359, %s360
      %p374 = scmp.eq.s32.totalorder %s32, 1
      %p375 = por %p373, %p374
      %p377 = scmp.ne.s32.totalorder %s360, %s376
      %p378 = scmp.eq.s32.totalorder %s32, 0
      %p379 = por %p377, %p378
      %p380 = scmp.le.s32.totalorder 1, %s26
      %p381 = scmp.lt.s32.totalorder %s26, 3
      %p382 = pnand %p380, %p381
      %p383 = pneg %p382
      // Predicated region
      $region9: #{forward.1} parent=5 // pred_check
        _
      $region10: #{forward.1} parent=5 // pred_check_branch
        %385 = sbr.rel (%p382) target = $region12
      $region11: #{forward.1} parent=5 // pred_region
        %s386 = ssub.s32 %s26, 1
        // Predicated region
        $region13: #{forward.1} parent=11 // pred_check
          %p387 = pneg %p73
        $region14: #{forward.1} parent=11 // pred_check_branch
          %389 = sbr.rel (%p387) target = $region16
        $region15: #{forward.1} parent=11 // pred_region
          _
        $region16: #{forward.1} parent=11 // pred_fallthru
          _
        // Predicated region
        $region17: #{forward.1} parent=11 // pred_check
          %p390 = pneg %p94
        $region18: #{forward.1} parent=11 // pred_check_branch
          %392 = sbr.rel (%p390) target = $region20
        $region19: #{forward.1} parent=11 // pred_region
          _
        $region20: #{forward.1} parent=11 // pred_fallthru
          _
        // Predicated region
        $region21: #{forward.1} parent=11 // pred_check
          %p393 = pneg %p115
        $region22: #{forward.1} parent=11 // pred_check_branch
          %395 = sbr.rel (%p393) target = $region24
        $region23: #{forward.1} parent=11 // pred_region
          _
        $region24: #{forward.1} parent=11 // pred_fallthru
          _
        // Predicated region
        $region25: #{forward.1} parent=11 // pred_check
          %p396 = pneg %p136
        $region26: #{forward.1} parent=11 // pred_check_branch
          %398 = sbr.rel (%p396) target = $region28
        $region27: #{forward.1} parent=11 // pred_region
          %s400 = ssub.s32 11904, 11904
          %401 = vsyncadd [#allocation3], %s400
          %s402 = sshll.u32 [#allocation2], 4
          %s403 = int_to_ptr.vmem [resolvable:$true] %s402
          %408 = dma.hbm_to_vmem [thread:$0]  %s4, 11904, %s403, [#allocation3], 128, 128, 8
        $region28: #{forward.1} parent=11 // pred_fallthru
          _
        // Predicated region
        $region29: #{forward.1} parent=11 // pred_check
          %p409 = pneg %p157
        $region30: #{forward.1} parent=11 // pred_check_branch
          %411 = sbr.rel (%p409) target = $region32
        $region31: #{forward.1} parent=11 // pred_region
          _
        $region32: #{forward.1} parent=11 // pred_fallthru
          _
        // Predicated region
        $region33: #{forward.1} parent=11 // pred_check
          %p412 = pneg %p178
        $region34: #{forward.1} parent=11 // pred_check_branch
          %414 = sbr.rel (%p412) target = $region36
        $region35: #{forward.1} parent=11 // pred_region
          _
        $region36: #{forward.1} parent=11 // pred_fallthru
          _
        // Predicated region
        $region37: #{forward.1} parent=11 // pred_check
          %p415 = pneg %p199
        $region38: #{forward.1} parent=11 // pred_check_branch
          %417 = sbr.rel (%p415) target = $region40
        $region39: #{forward.1} parent=11 // pred_region
          %s419 = ssub.s32 11520, 11520
          %420 = vsyncadd [#allocation6], %s419
          %s421 = sshll.u32 [#allocation5], 4
          %s422 = int_to_ptr.vmem [resolvable:$true] %s421
          %427 = dma.hbm_to_vmem [thread:$0]  %s7, 11520, %s422, [#allocation6], 128, 128, 8
        $region40: #{forward.1} parent=11 // pred_fallthru
          _
        // Predicated region
        $region41: #{forward.1} parent=11 // pred_check
          %p428 = pneg %p220
        $region42: #{forward.1} parent=11 // pred_check_branch
          %430 = sbr.rel (%p428) target = $region44
        $region43: #{forward.1} parent=11 // pred_region
          _
        $region44: #{forward.1} parent=11 // pred_fallthru
          _
        // Predicated region
        $region45: #{forward.1} parent=11 // pred_check
          %p431 = pneg %p241
        $region46: #{forward.1} parent=11 // pred_check_branch
          %433 = sbr.rel (%p431) target = $region48
        $region47: #{forward.1} parent=11 // pred_region
          _
        $region48: #{forward.1} parent=11 // pred_fallthru
          _
        // Predicated region
        $region49: #{forward.1} parent=11 // pred_check
          %p434 = pneg %p262
        $region50: #{forward.1} parent=11 // pred_check_branch
          %436 = sbr.rel (%p434) target = $region52
        $region51: #{forward.1} parent=11 // pred_region
          _
        $region52: #{forward.1} parent=11 // pred_fallthru
          _
        // Predicated region
        $region53: #{forward.1} parent=11 // pred_check
          %p437 = pneg %p283
        $region54: #{forward.1} parent=11 // pred_check_branch
          %439 = sbr.rel (%p437) target = $region56
        $region55: #{forward.1} parent=11 // pred_region
          _
        $region56: #{forward.1} parent=11 // pred_fallthru
          _
        // Predicated region
        $region57: #{forward.1} parent=11 // pred_check
          %p440 = pneg %p304
        $region58: #{forward.1} parent=11 // pred_check_branch
          %442 = sbr.rel (%p440) target = $region60
        $region59: #{forward.1} parent=11 // pred_region
          _
        $region60: #{forward.1} parent=11 // pred_fallthru
          _
        // Predicated region
        $region61: #{forward.1} parent=11 // pred_check
          %p443 = pneg %p325
        $region62: #{forward.1} parent=11 // pred_check_branch
          %445 = sbr.rel (%p443) target = $region64
        $region63: #{forward.1} parent=11 // pred_region
          _
        $region64: #{forward.1} parent=11 // pred_fallthru
          _
        // Predicated region
        $region65: #{forward.1} parent=11 // pred_check
          %p446 = pneg %p346
        $region66: #{forward.1} parent=11 // pred_check_branch
          %448 = sbr.rel (%p446) target = $region68
        $region67: #{forward.1} parent=11 // pred_region
          _
        $region68: #{forward.1} parent=11 // pred_fallthru
          _
      $region12: #{forward.1} parent=5 // pred_fallthru
        _
      %p449 = scmp.lt.s32.totalorder %s26, 2
      // Predicated region
      $region69: #{forward.1} parent=5 // pred_check
        %p450 = pneg %p449
      $region70: #{forward.1} parent=5 // pred_check_branch
        %452 = sbr.rel (%p450) target = $region72
      $region71: #{forward.1} parent=5 // pred_region
        // Predicated region
        $region73: #{forward.1} parent=71 // pred_check
          %p453 = pneg %p46
        $region74: #{forward.1} parent=71 // pred_check_branch
          %455 = sbr.rel (%p453) target = $region76
        $region75: #{forward.1} parent=71 // pred_region
          %p456 = scmp.lt.s32.totalorder %s26, 1
          %s457 = scalar_select %p456, %s26, 1
          %s458 = smul.addr %s457, 12
          %s459 = smul.addr %s458, 8
          %s460 = scalar_lea.vmem %s0, %s459
        $region76: #{forward.1} parent=71 // pred_fallthru
          _
      $region72: #{forward.1} parent=5 // pred_fallthru
        _
      %p461 = scmp.le.s32.totalorder 1, %s26
      %p462 = scmp.lt.s32.totalorder %s26, 3
      %p463 = pnand %p461, %p462
      %p464 = pneg %p463
      // Predicated region
      $region77: #{forward.1} parent=5 // pred_check
        _
      $region78: #{forward.1} parent=5 // pred_check_branch
        %466 = sbr.rel (%p463) target = $region80
      $region79: #{forward.1} parent=5 // pred_region
        %s467 = ssub.s32 %s26, 1
        // Predicated region
        $region81: #{forward.1} parent=79 // pred_check
          %p468 = pneg %p136
        $region82: #{forward.1} parent=79 // pred_check_branch
          %470 = sbr.rel (%p468) target = $region84
        $region83: #{forward.1} parent=79 // pred_region
          %471 = dma.done [#allocation3], 11904
        $region84: #{forward.1} parent=79 // pred_fallthru
          _
        // Predicated region
        $region85: #{forward.1} parent=79 // pred_check
          %p472 = pneg %p199
        $region86: #{forward.1} parent=79 // pred_check_branch
          %474 = sbr.rel (%p472) target = $region88
        $region87: #{forward.1} parent=79 // pred_region
          %475 = dma.done [#allocation6], 11520
        $region88: #{forward.1} parent=79 // pred_fallthru
          _
        %p476 = scmp.lt.s32.totalorder %s31, 1
        %s477 = scalar_select %p476, %s31, 1
        %s478 = smul.addr %s477, 12
        %s479 = smul.addr %s478, 8
        %s480 = scalar_lea.vmem %s0, %s479
        %p481 = pneg %p52
        %p482 = pneg %p49
        %p483 = pneg %p73
        %p484 = pneg %p70
        %p485 = pneg %p94
        %p486 = pneg %p91
        %p487 = pneg %p115
        %p488 = pneg %p112
        %p489 = pneg %p136
        %p490 = pneg %p133
        %p491 = pneg %p157
        %p492 = pneg %p154
        %p493 = pneg %p178
        %p494 = pneg %p175
        %p495 = pneg %p199
        %p496 = pneg %p196
        %p497 = pneg %p220
        %p498 = pneg %p217
        %p499 = pneg %p241
        %p500 = pneg %p238
        %p501 = pneg %p262
        %p502 = pneg %p259
        %p503 = pneg %p283
        %p504 = pneg %p280
        %p505 = pneg %p304
        %p506 = pneg %p301
        %p507 = pneg %p325
        %p508 = pneg %p322
        %p509 = pneg %p346
        %p510 = pneg %p343
        %p511 = pneg %p372
        %p512 = pneg %p369
        %s513 = sand.u32 %s359, 1
        %s514 = scalar_lea.sflag [#allocation4], %s513
        %s515 = sand.u32 %s359, 1
        %s516 = scalar_lea.vmem [#allocation7], %s515
        %p517 = scmp.lt.s32.totalorder %s31, 1
        %s518 = scalar_select %p517, %s31, 1
        %s519 = smul.addr %s518, 12
        %s520 = smul.addr %s519, 8
        %s521 = scalar_lea.vmem %s0, %s520
        %v523 = vlaneseq
        %v524 = vshrl.u32 %v523, 7
        %v525 = vadd.s32 %v524, 8
        %v526 = vadd.s32 %v524, 16
        %v527 = vadd.s32 %v524, 24
        %v528 = vadd.s32 %v524, 32
        %v529 = vlaneseq
        %v530 = vand.u32 %v529, 127
        %v531 = vadd.s32 %v530, 1
        %vm532 = vcmp.eq.s32.totalorder %v524, %v531
        %vm533 = vcmp.eq.s32.totalorder %v525, %v531
        %vm534 = vcmp.eq.s32.totalorder %v526, %v531
        %vm535 = vcmp.eq.s32.totalorder %v527, %v531
        %vm536 = vcmp.eq.s32.totalorder %v528, %v531
        %v537 = vsel %vm532, 1, 0
        %v538 = vsel %vm533, 1, 0
        %v539 = vsel %vm534, 1, 0
        %v540 = vsel %vm535, 1, 0
        %v541 = vsel %vm536, 1, 0
        %v542 = vcvt.s32.f32 %v537
        %v543 = vcvt.s32.f32 %v538
        %v544 = vcvt.s32.f32 %v539
        %v545 = vcvt.s32.f32 %v540
        %v546 = vcvt.s32.f32 %v541
        %v547 = vpack.c.bf16 %v543, %v542
        %v548 = vpack.c.bf16 %v545, %v544
        %v549 = vpack.c.bf16 %v546, %v546
        %v550 = vld [vmem:[%s521] sm:$0xff]
        %v551 = vld [vmem:[%s521 + $0x8] sm:$0xff]
        %v552 = vld [vmem:[%s521 + $0x10] sm:$0xff]
        %v553 = vld [vmem:[%s521 + $0x18] sm:$0xff]
        %v554 = vpack.c.bf16 %v551, %v550
        %v555 = vpack.c.bf16 %v553, %v552
        %vm556 = vcmask 261120
        %v558 = vsel %vm556, %v547, 0
        %v561 = vsel %vm556, %v548, 0
        %v564 = vsel %vm556, %v549, 0
        %566 = vmatprep.subr.bf16.mxu0 0
        %567 = vmatpush1.bf16.msra.mxu0 0
        %568 = vmatprep.subr.bf16.mxu0 0
        %569 = vmatpush1.bf16.msra.mxu0 0
        %570 = vmatprep.subr.bf16.mxu0 0
        %571 = vmatpush1.bf16.msra.mxu0 0
        %572 = vmatprep.subr.bf16.mxu0 0
        %573 = vmatpush1.bf16.msra.mxu0 0
        %574 = vmatprep.subr.bf16.mxu0 0
        %575 = vmatpush1.bf16.msra.mxu0 0
        %576 = vmatprep.subr.bf16.mxu0 0
        %577 = vmatpush1.bf16.msra.mxu0 0
        %578 = vmatprep.subr.bf16.mxu0 0
        %579 = vmatpush1.bf16.msra.mxu0 %v555
        %580 = vmatprep.subr.bf16.mxu0 0
        %581 = vmatpush1.bf16.msra.mxu0 %v554
        %582 = vmatprep.subr.bf16.mxu0 0
        %583 = vmatpush2.bf16.msra.mxu0 0
        %584 = vmatprep.subr.bf16.mxu0 0
        %585 = vmatpush2.bf16.msra.mxu0 0
        %586 = vmatprep.subr.bf16.mxu0 0
        %587 = vmatpush2.bf16.msra.mxu0 0
        %588 = vmatprep.subr.bf16.mxu0 0
        %589 = vmatpush2.bf16.msra.mxu0 0
        %590 = vmatprep.subr.bf16.mxu0 0
        %591 = vmatpush2.bf16.msra.mxu0 0
        %592 = vmatprep.subr.bf16.mxu0 0
        %593 = vmatpush2.bf16.msra.mxu0 0
        %594 = vmatprep.subr.bf16.mxu0 0
        %595 = vmatpush2.bf16.msra.mxu0 0
        %596 = vmatprep.subr.bf16.mxu0 0
        %597 = vmatpush2.bf16.msra.mxu0 0
        %598 = vmatprep.mubr.bf16.mxu0 0
        %599 = vmatmul.mubr.bf16.gmra.mxu0 %v558
        %v600 = vpop.f32.mrf.mxu0
        %v601 = vadd.f32 0.0, %v600
        %v602 = vpop.f32.mrf.mxu0
        %v603 = vpop.f32.mrf.mxu0
        %v604 = vadd.f32 0.0, %v603
        %v605 = vpop.f32.mrf.mxu0
        %606 = vmatprep.mubr.bf16.mxu0 0
        %607 = vmatmul.mubr.bf16.gmra.mxu0 %v561
        %v608 = vpop.f32.mrf.mxu0
        %v609 = vadd.f32 0.0, %v608
        %v610 = vpop.f32.mrf.mxu0
        %v611 = vpop.f32.mrf.mxu0
        %v612 = vadd.f32 0.0, %v611
        %v613 = vpop.f32.mrf.mxu0
        %614 = vmatprep.mubr.bf16.mxu0 0
        %615 = vmatmul.mubr.bf16.gmra.mxu0 %v564
        %v616 = vpop.f32.mrf.mxu0
        %v617 = vadd.f32 0.0, %v616
        %v618 = vpop.f32.mrf.mxu0
        %v619 = vpop.f32.mrf.mxu0
        %v620 = vpop.f32.mrf.mxu0
        %621 = vdwg.mxu0
        %v622 = vpack.c.bf16 %v604, %v601
        %v623 = vpack.c.bf16 %v612, %v609
        %v624 = vpack.c.bf16 %v617, %v617
        %v625 = vld [vmem:[%s1] sm:$0xff]
        %v626 = vld [vmem:[%s1 + $0x8] sm:$0xff]
        %v627 = vld [vmem:[%s1 + $0x10] sm:$0xff]
        %v628 = vld [vmem:[%s1 + $0x18] sm:$0xff]
        %s629 = scalar_lea.vmem %s1, 96
        %v630 = vld [vmem:[%s629] sm:$0xff]
        %v631 = vld [vmem:[%s629 + $0x8] sm:$0xff]
        %v632 = vld [vmem:[%s629 + $0x10] sm:$0xff]
        %v633 = vld [vmem:[%s629 + $0x18] sm:$0xff]
        %vm634 = vsmask.f32 7424
        %v636 = vshrl.u32 %v622, 16
        %v638 = vshll.u32 %v622, 16
        %v640 = vrot.slane %v638, 1
        %v641 = vor.u32 %v636, %v640
        %v643 = vshll.u32 %v623, 16
        %v645 = vrot.slane %v643, 1
        %v646 = vsel %vm634, %v641, %v645
        %v647 = vshrl.u32 %v623, 16
        %v649 = vor.u32 %v647, %v645
        %v651 = vshll.u32 %v624, 16
        %v653 = vrot.slane %v651, 1
        %v654 = vsel %vm634, %v649, %v653
        %v659 = vunpack.c.l.b16 %v630
        %v660 = vunpack.c.h.b16 %v630
        %v661 = vunpack.c.l.b16 %v631
        %v662 = vunpack.c.h.b16 %v631
        %v663 = vunpack.c.l.b16 %v632
        %v664 = vunpack.c.h.b16 %v632
        %v665 = vunpack.c.l.b16 %v633
        %v666 = vunpack.c.h.b16 %v633
        %v667 = vpack.c.b16 %v661, %v659
        %v668 = vpack.c.b16 %v662, %v660
        %v669 = vpack.c.b16 %v665, %v663
        %v670 = vpack.c.b16 %v666, %v664
        %v676 = vsel %vm556, %v646, 0
        %v679 = vsel %vm556, %v654, 0
        %681 = vmatprep.subr.bf16.mxu0 0
        %682 = vmatpush1.bf16.msra.mxu0 0
        %683 = vmatprep.subr.bf16.mxu0 0
        %684 = vmatpush1.bf16.msra.mxu0 0
        %685 = vmatprep.subr.bf16.mxu0 0
        %686 = vmatpush1.bf16.msra.mxu0 0
        %687 = vmatprep.subr.bf16.mxu0 0
        %688 = vmatpush1.bf16.msra.mxu0 0
        %689 = vmatprep.subr.bf16.mxu0 0
        %690 = vmatpush1.bf16.msra.mxu0 0
        %691 = vmatprep.subr.bf16.mxu0 0
        %692 = vmatpush1.bf16.msra.mxu0 0
        %693 = vmatprep.subr.bf16.mxu0 %v670
        %694 = vmatpush1.bf16.msra.mxu0 %v669
        %695 = vmatprep.subr.bf16.mxu0 %v668
        %696 = vmatpush1.bf16.msra.mxu0 %v667
        %697 = vmatprep.subr.bf16.mxu0 0
        %698 = vmatpush2.bf16.msra.mxu0 0
        %699 = vmatprep.subr.bf16.mxu0 0
        %700 = vmatpush2.bf16.msra.mxu0 0
        %701 = vmatprep.subr.bf16.mxu0 0
        %702 = vmatpush2.bf16.msra.mxu0 0
        %703 = vmatprep.subr.bf16.mxu0 0
        %704 = vmatpush2.bf16.msra.mxu0 0
        %705 = vmatprep.subr.bf16.mxu0 0
        %706 = vmatpush2.bf16.msra.mxu0 0
        %707 = vmatprep.subr.bf16.mxu0 0
        %708 = vmatpush2.bf16.msra.mxu0 0
        %709 = vmatprep.subr.bf16.mxu0 0
        %710 = vmatpush2.bf16.msra.mxu0 0
        %711 = vmatprep.subr.bf16.mxu0 0
        %712 = vmatpush2.bf16.msra.mxu0 0
        %713 = vmatprep.mubr.bf16.mxu0 0
        %714 = vmatmul.mubr.bf16.gmra.mxu0 %v676
        %v715 = vpop.f32.mrf.mxu0
        %v716 = vadd.f32 0.0, %v715
        %v717 = vpop.f32.mrf.mxu0
        %v718 = vadd.f32 0.0, %v717
        %v719 = vpop.f32.mrf.mxu0
        %v720 = vadd.f32 0.0, %v719
        %v721 = vpop.f32.mrf.mxu0
        %v722 = vadd.f32 0.0, %v721
        %723 = vmatprep.mubr.bf16.mxu0 0
        %724 = vmatmul.mubr.bf16.gmra.mxu0 %v679
        %v725 = vpop.f32.mrf.mxu0
        %v726 = vadd.f32 0.0, %v725
        %v727 = vpop.f32.mrf.mxu0
        %v728 = vadd.f32 0.0, %v727
        %v729 = vpop.f32.mrf.mxu0
        %v730 = vadd.f32 0.0, %v729
        %v731 = vpop.f32.mrf.mxu0
        %v732 = vadd.f32 0.0, %v731
        %733 = vdwg.mxu0
        %v738 = vunpack.c.l.b16 %v625
        %v739 = vunpack.c.h.b16 %v625
        %v740 = vunpack.c.l.b16 %v626
        %v741 = vunpack.c.h.b16 %v626
        %v742 = vunpack.c.l.b16 %v627
        %v743 = vunpack.c.h.b16 %v627
        %v744 = vunpack.c.l.b16 %v628
        %v745 = vunpack.c.h.b16 %v628
        %v746 = vpack.c.b16 %v740, %v738
        %v747 = vpack.c.b16 %v741, %v739
        %v748 = vpack.c.b16 %v744, %v742
        %v749 = vpack.c.b16 %v745, %v743
        %v754 = vsel %vm556, %v622, 0
        %v756 = vsel %vm556, %v623, 0
        %758 = vmatprep.subr.bf16.mxu0 0
        %759 = vmatpush1.bf16.msra.mxu0 0
        %760 = vmatprep.subr.bf16.mxu0 0
        %761 = vmatpush1.bf16.msra.mxu0 0
        %762 = vmatprep.subr.bf16.mxu0 0
        %763 = vmatpush1.bf16.msra.mxu0 0
        %764 = vmatprep.subr.bf16.mxu0 0
        %765 = vmatpush1.bf16.msra.mxu0 0
        %766 = vmatprep.subr.bf16.mxu0 0
        %767 = vmatpush1.bf16.msra.mxu0 0
        %768 = vmatprep.subr.bf16.mxu0 0
        %769 = vmatpush1.bf16.msra.mxu0 0
        %770 = vmatprep.subr.bf16.mxu0 %v749
        %771 = vmatpush1.bf16.msra.mxu0 %v748
        %772 = vmatprep.subr.bf16.mxu0 %v747
        %773 = vmatpush1.bf16.msra.mxu0 %v746
        %774 = vmatprep.subr.bf16.mxu0 0
        %775 = vmatpush2.bf16.msra.mxu0 0
        %776 = vmatprep.subr.bf16.mxu0 0
        %777 = vmatpush2.bf16.msra.mxu0 0
        %778 = vmatprep.subr.bf16.mxu0 0
        %779 = vmatpush2.bf16.msra.mxu0 0
        %780 = vmatprep.subr.bf16.mxu0 0
        %781 = vmatpush2.bf16.msra.mxu0 0
        %782 = vmatprep.subr.bf16.mxu0 0
        %783 = vmatpush2.bf16.msra.mxu0 0
        %784 = vmatprep.subr.bf16.mxu0 0
        %785 = vmatpush2.bf16.msra.mxu0 0
        %786 = vmatprep.subr.bf16.mxu0 0
        %787 = vmatpush2.bf16.msra.mxu0 0
        %788 = vmatprep.subr.bf16.mxu0 0
        %789 = vmatpush2.bf16.msra.mxu0 0
        %790 = vmatprep.mubr.bf16.mxu0 0
        %791 = vmatmul.mubr.bf16.gmra.mxu0 %v754
        %v792 = vpop.f32.mrf.mxu0
        %v793 = vadd.f32 %v716, %v792
        %v794 = vpop.f32.mrf.mxu0
        %v795 = vadd.f32 %v718, %v794
        %v796 = vpop.f32.mrf.mxu0
        %v797 = vadd.f32 %v720, %v796
        %v798 = vpop.f32.mrf.mxu0
        %v799 = vadd.f32 %v722, %v798
        %800 = vmatprep.mubr.bf16.mxu0 0
        %801 = vmatmul.mubr.bf16.gmra.mxu0 %v756
        %v802 = vpop.f32.mrf.mxu0
        %v803 = vadd.f32 %v726, %v802
        %v804 = vpop.f32.mrf.mxu0
        %v805 = vadd.f32 %v728, %v804
        %v806 = vpop.f32.mrf.mxu0
        %v807 = vadd.f32 %v730, %v806
        %v808 = vpop.f32.mrf.mxu0
        %v809 = vadd.f32 %v732, %v808
        %810 = vdwg.mxu0
        %s811 = scalar_lea.vmem %s1, 192
        %v812 = vld [vmem:[%s811] sm:$0xff]
        %v813 = vld [vmem:[%s811 + $0x8] sm:$0xff]
        %v814 = vld [vmem:[%s811 + $0x10] sm:$0xff]
        %v815 = vld [vmem:[%s811 + $0x18] sm:$0xff]
        %vm819 = vcmask 1046528
        %v820 = vrot.slane %v622, 1
        %v821 = vrot.slane %v623, 1
        %v822 = vsel %vm819, %v820, %v821
        %v823 = vrot.slane %v624, 1
        %v824 = vsel %vm819, %v821, %v823
        %v829 = vunpack.c.l.b16 %v812
        %v830 = vunpack.c.h.b16 %v812
        %v831 = vunpack.c.l.b16 %v813
        %v832 = vunpack.c.h.b16 %v813
        %v833 = vunpack.c.l.b16 %v814
        %v834 = vunpack.c.h.b16 %v814
        %v835 = vunpack.c.l.b16 %v815
        %v836 = vunpack.c.h.b16 %v815
        %v837 = vpack.c.b16 %v831, %v829
        %v838 = vpack.c.b16 %v832, %v830
        %v839 = vpack.c.b16 %v835, %v833
        %v840 = vpack.c.b16 %v836, %v834
        %v846 = vsel %vm556, %v822, 0
        %v849 = vsel %vm556, %v824, 0
        %851 = vmatprep.subr.bf16.mxu0 0
        %852 = vmatpush1.bf16.msra.mxu0 0
        %853 = vmatprep.subr.bf16.mxu0 0
        %854 = vmatpush1.bf16.msra.mxu0 0
        %855 = vmatprep.subr.bf16.mxu0 0
        %856 = vmatpush1.bf16.msra.mxu0 0
        %857 = vmatprep.subr.bf16.mxu0 0
        %858 = vmatpush1.bf16.msra.mxu0 0
        %859 = vmatprep.subr.bf16.mxu0 0
        %860 = vmatpush1.bf16.msra.mxu0 0
        %861 = vmatprep.subr.bf16.mxu0 0
        %862 = vmatpush1.bf16.msra.mxu0 0
        %863 = vmatprep.subr.bf16.mxu0 %v840
        %864 = vmatpush1.bf16.msra.mxu0 %v839
        %865 = vmatprep.subr.bf16.mxu0 %v838
        %866 = vmatpush1.bf16.msra.mxu0 %v837
        %867 = vmatprep.subr.bf16.mxu0 0
        %868 = vmatpush2.bf16.msra.mxu0 0
        %869 = vmatprep.subr.bf16.mxu0 0
        %870 = vmatpush2.bf16.msra.mxu0 0
        %871 = vmatprep.subr.bf16.mxu0 0
        %872 = vmatpush2.bf16.msra.mxu0 0
        %873 = vmatprep.subr.bf16.mxu0 0
        %874 = vmatpush2.bf16.msra.mxu0 0
        %875 = vmatprep.subr.bf16.mxu0 0
        %876 = vmatpush2.bf16.msra.mxu0 0
        %877 = vmatprep.subr.bf16.mxu0 0
        %878 = vmatpush2.bf16.msra.mxu0 0
        %879 = vmatprep.subr.bf16.mxu0 0
        %880 = vmatpush2.bf16.msra.mxu0 0
        %881 = vmatprep.subr.bf16.mxu0 0
        %882 = vmatpush2.bf16.msra.mxu0 0
        %883 = vmatprep.mubr.bf16.mxu0 0
        %884 = vmatmul.mubr.bf16.gmra.mxu0 %v846
        %v885 = vpop.f32.mrf.mxu0
        %v886 = vadd.f32 0.0, %v885
        %v887 = vpop.f32.mrf.mxu0
        %v888 = vadd.f32 0.0, %v887
        %v889 = vpop.f32.mrf.mxu0
        %v890 = vadd.f32 0.0, %v889
        %v891 = vpop.f32.mrf.mxu0
        %v892 = vadd.f32 0.0, %v891
        %893 = vmatprep.mubr.bf16.mxu0 0
        %894 = vmatmul.mubr.bf16.gmra.mxu0 %v849
        %v895 = vpop.f32.mrf.mxu0
        %v896 = vadd.f32 0.0, %v895
        %v897 = vpop.f32.mrf.mxu0
        %v898 = vadd.f32 0.0, %v897
        %v899 = vpop.f32.mrf.mxu0
        %v900 = vadd.f32 0.0, %v899
        %v901 = vpop.f32.mrf.mxu0
        %v902 = vadd.f32 0.0, %v901
        %903 = vdwg.mxu0
        %v904 = vadd.f32 %v793, %v886
        %v905 = vadd.f32 %v795, %v888
        %v906 = vadd.f32 %v797, %v890
        %v907 = vadd.f32 %v799, %v892
        %v908 = vadd.f32 %v803, %v896
        %v909 = vadd.f32 %v805, %v898
        %v910 = vadd.f32 %v807, %v900
        %v911 = vadd.f32 %v809, %v902
        %s912 = scalar_lea.vmem %s521, 32
        %v913 = vld [vmem:[%s912] sm:$0xff]
        %v914 = vld [vmem:[%s912 + $0x8] sm:$0xff]
        %v915 = vld [vmem:[%s912 + $0x10] sm:$0xff]
        %v916 = vld [vmem:[%s912 + $0x18] sm:$0xff]
        %v917 = vpack.c.bf16 %v914, %v913
        %v918 = vpack.c.bf16 %v916, %v915
        %919 = vmatprep.subr.bf16.mxu0 0
        %920 = vmatpush1.bf16.msra.mxu0 0
        %921 = vmatprep.subr.bf16.mxu0 0
        %922 = vmatpush1.bf16.msra.mxu0 0
        %923 = vmatprep.subr.bf16.mxu0 0
        %924 = vmatpush1.bf16.msra.mxu0 0
        %925 = vmatprep.subr.bf16.mxu0 0
        %926 = vmatpush1.bf16.msra.mxu0 0
        %927 = vmatprep.subr.bf16.mxu0 0
        %928 = vmatpush1.bf16.msra.mxu0 0
        %929 = vmatprep.subr.bf16.mxu0 0
        %930 = vmatpush1.bf16.msra.mxu0 0
        %931 = vmatprep.subr.bf16.mxu0 0
        %932 = vmatpush1.bf16.msra.mxu0 %v918
        %933 = vmatprep.subr.bf16.mxu0 0
        %934 = vmatpush1.bf16.msra.mxu0 %v917
        %935 = vmatprep.subr.bf16.mxu0 0
        %936 = vmatpush2.bf16.msra.mxu0 0
        %937 = vmatprep.subr.bf16.mxu0 0
        %938 = vmatpush2.bf16.msra.mxu0 0
        %939 = vmatprep.subr.bf16.mxu0 0
        %940 = vmatpush2.bf16.msra.mxu0 0
        %941 = vmatprep.subr.bf16.mxu0 0
        %942 = vmatpush2.bf16.msra.mxu0 0
        %943 = vmatprep.subr.bf16.mxu0 0
        %944 = vmatpush2.bf16.msra.mxu0 0
        %945 = vmatprep.subr.bf16.mxu0 0
        %946 = vmatpush2.bf16.msra.mxu0 0
        %947 = vmatprep.subr.bf16.mxu0 0
        %948 = vmatpush2.bf16.msra.mxu0 0
        %949 = vmatprep.subr.bf16.mxu0 0
        %950 = vmatpush2.bf16.msra.mxu0 0
        %951 = vmatprep.mubr.bf16.mxu0 0
        %952 = vmatmul.mubr.bf16.gmra.mxu0 %v558
        %v953 = vpop.f32.mrf.mxu0
        %v954 = vadd.f32 0.0, %v953
        %v955 = vpop.f32.mrf.mxu0
        %v956 = vpop.f32.mrf.mxu0
        %v957 = vadd.f32 0.0, %v956
        %v958 = vpop.f32.mrf.mxu0
        %959 = vmatprep.mubr.bf16.mxu0 0
        %960 = vmatmul.mubr.bf16.gmra.mxu0 %v561
        %v961 = vpop.f32.mrf.mxu0
        %v962 = vadd.f32 0.0, %v961
        %v963 = vpop.f32.mrf.mxu0
        %v964 = vpop.f32.mrf.mxu0
        %v965 = vadd.f32 0.0, %v964
        %v966 = vpop.f32.mrf.mxu0
        %967 = vmatprep.mubr.bf16.mxu0 0
        %968 = vmatmul.mubr.bf16.gmra.mxu0 %v564
        %v969 = vpop.f32.mrf.mxu0
        %v970 = vadd.f32 0.0, %v969
        %v971 = vpop.f32.mrf.mxu0
        %v972 = vpop.f32.mrf.mxu0
        %v973 = vpop.f32.mrf.mxu0
        %974 = vdwg.mxu0
        %v975 = vpack.c.bf16 %v957, %v954
        %v976 = vpack.c.bf16 %v965, %v962
        %v977 = vpack.c.bf16 %v970, %v970
        %s978 = scalar_lea.vmem %s1, 32
        %v979 = vld [vmem:[%s978] sm:$0xff]
        %v980 = vld [vmem:[%s978 + $0x8] sm:$0xff]
        %v981 = vld [vmem:[%s978 + $0x10] sm:$0xff]
        %v982 = vld [vmem:[%s978 + $0x18] sm:$0xff]
        %v987 = vunpack.c.l.b16 %v979
        %v988 = vunpack.c.h.b16 %v979
        %v989 = vunpack.c.l.b16 %v980
        %v990 = vunpack.c.h.b16 %v980
        %v991 = vunpack.c.l.b16 %v981
        %v992 = vunpack.c.h.b16 %v981
        %v993 = vunpack.c.l.b16 %v982
        %v994 = vunpack.c.h.b16 %v982
        %v995 = vpack.c.b16 %v989, %v987
        %v996 = vpack.c.b16 %v990, %v988
        %v997 = vpack.c.b16 %v993, %v991
        %v998 = vpack.c.b16 %v994, %v992
        %v1004 = vsel %vm556, %v975, 0
        %v1007 = vsel %vm556, %v976, 0
        %1009 = vmatprep.subr.bf16.mxu0 0
        %1010 = vmatpush1.bf16.msra.mxu0 0
        %1011 = vmatprep.subr.bf16.mxu0 0
        %1012 = vmatpush1.bf16.msra.mxu0 0
        %1013 = vmatprep.subr.bf16.mxu0 0
        %1014 = vmatpush1.bf16.msra.mxu0 0
        %1015 = vmatprep.subr.bf16.mxu0 0
        %1016 = vmatpush1.bf16.msra.mxu0 0
        %1017 = vmatprep.subr.bf16.mxu0 0
        %1018 = vmatpush1.bf16.msra.mxu0 0
        %1019 = vmatprep.subr.bf16.mxu0 0
        %1020 = vmatpush1.bf16.msra.mxu0 0
        %1021 = vmatprep.subr.bf16.mxu0 %v998
        %1022 = vmatpush1.bf16.msra.mxu0 %v997
        %1023 = vmatprep.subr.bf16.mxu0 %v996
        %1024 = vmatpush1.bf16.msra.mxu0 %v995
        %1025 = vmatprep.subr.bf16.mxu0 0
        %1026 = vmatpush2.bf16.msra.mxu0 0
        %1027 = vmatprep.subr.bf16.mxu0 0
        %1028 = vmatpush2.bf16.msra.mxu0 0
        %1029 = vmatprep.subr.bf16.mxu0 0
        %1030 = vmatpush2.bf16.msra.mxu0 0
        %1031 = vmatprep.subr.bf16.mxu0 0
        %1032 = vmatpush2.bf16.msra.mxu0 0
        %1033 = vmatprep.subr.bf16.mxu0 0
        %1034 = vmatpush2.bf16.msra.mxu0 0
        %1035 = vmatprep.subr.bf16.mxu0 0
        %1036 = vmatpush2.bf16.msra.mxu0 0
        %1037 = vmatprep.subr.bf16.mxu0 0
        %1038 = vmatpush2.bf16.msra.mxu0 0
        %1039 = vmatprep.subr.bf16.mxu0 0
        %1040 = vmatpush2.bf16.msra.mxu0 0
        %1041 = vmatprep.mubr.bf16.mxu0 0
        %1042 = vmatmul.mubr.bf16.gmra.mxu0 %v1004
        %v1043 = vpop.f32.mrf.mxu0
        %v1044 = vadd.f32 0.0, %v1043
        %v1045 = vpop.f32.mrf.mxu0
        %v1046 = vadd.f32 0.0, %v1045
        %v1047 = vpop.f32.mrf.mxu0
        %v1048 = vadd.f32 0.0, %v1047
        %v1049 = vpop.f32.mrf.mxu0
        %v1050 = vadd.f32 0.0, %v1049
        %1051 = vmatprep.mubr.bf16.mxu0 0
        %1052 = vmatmul.mubr.bf16.gmra.mxu0 %v1007
        %v1053 = vpop.f32.mrf.mxu0
        %v1054 = vadd.f32 0.0, %v1053
        %v1055 = vpop.f32.mrf.mxu0
        %v1056 = vadd.f32 0.0, %v1055
        %v1057 = vpop.f32.mrf.mxu0
        %v1058 = vadd.f32 0.0, %v1057
        %v1059 = vpop.f32.mrf.mxu0
        %v1060 = vadd.f32 0.0, %v1059
        %1061 = vdwg.mxu0
        %v1062 = vadd.f32 %v904, %v1044
        %v1063 = vadd.f32 %v905, %v1046
        %v1064 = vadd.f32 %v906, %v1048
        %v1065 = vadd.f32 %v907, %v1050
        %v1066 = vadd.f32 %v908, %v1054
        %v1067 = vadd.f32 %v909, %v1056
        %v1068 = vadd.f32 %v910, %v1058
        %v1069 = vadd.f32 %v911, %v1060
        %s1070 = scalar_lea.vmem %s1, 128
        %v1071 = vld [vmem:[%s1070] sm:$0xff]
        %v1072 = vld [vmem:[%s1070 + $0x8] sm:$0xff]
        %v1073 = vld [vmem:[%s1070 + $0x10] sm:$0xff]
        %v1074 = vld [vmem:[%s1070 + $0x18] sm:$0xff]
        %v1075 = vshrl.u32 %v975, 16
        %v1077 = vshll.u32 %v975, 16
        %v1079 = vrot.slane %v1077, 1
        %v1080 = vor.u32 %v1075, %v1079
        %v1081 = vshll.u32 %v976, 16
        %v1083 = vrot.slane %v1081, 1
        %v1084 = vsel %vm634, %v1080, %v1083
        %v1085 = vshrl.u32 %v976, 16
        %v1087 = vor.u32 %v1085, %v1083
        %v1089 = vshll.u32 %v977, 16
        %v1091 = vrot.slane %v1089, 1
        %v1092 = vsel %vm634, %v1087, %v1091
        %v1097 = vunpack.c.l.b16 %v1071
        %v1098 = vunpack.c.h.b16 %v1071
        %v1099 = vunpack.c.l.b16 %v1072
        %v1100 = vunpack.c.h.b16 %v1072
        %v1101 = vunpack.c.l.b16 %v1073
        %v1102 = vunpack.c.h.b16 %v1073
        %v1103 = vunpack.c.l.b16 %v1074
        %v1104 = vunpack.c.h.b16 %v1074
        %v1105 = vpack.c.b16 %v1099, %v1097
        %v1106 = vpack.c.b16 %v1100, %v1098
        %v1107 = vpack.c.b16 %v1103, %v1101
        %v1108 = vpack.c.b16 %v1104, %v1102
        %v1114 = vsel %vm556, %v1084, 0
        %v1117 = vsel %vm556, %v1092, 0
        %1119 = vmatprep.subr.bf16.mxu0 0
        %1120 = vmatpush1.bf16.msra.mxu0 0
        %1121 = vmatprep.subr.bf16.mxu0 0
        %1122 = vmatpush1.bf16.msra.mxu0 0
        %1123 = vmatprep.subr.bf16.mxu0 0
        %1124 = vmatpush1.bf16.msra.mxu0 0
        %1125 = vmatprep.subr.bf16.mxu0 0
        %1126 = vmatpush1.bf16.msra.mxu0 0
        %1127 = vmatprep.subr.bf16.mxu0 0
        %1128 = vmatpush1.bf16.msra.mxu0 0
        %1129 = vmatprep.subr.bf16.mxu0 0
        %1130 = vmatpush1.bf16.msra.mxu0 0
        %1131 = vmatprep.subr.bf16.mxu0 %v1108
        %1132 = vmatpush1.bf16.msra.mxu0 %v1107
        %1133 = vmatprep.subr.bf16.mxu0 %v1106
        %1134 = vmatpush1.bf16.msra.mxu0 %v1105
        %1135 = vmatprep.subr.bf16.mxu0 0
        %1136 = vmatpush2.bf16.msra.mxu0 0
        %1137 = vmatprep.subr.bf16.mxu0 0
        %1138 = vmatpush2.bf16.msra.mxu0 0
        %1139 = vmatprep.subr.bf16.mxu0 0
        %1140 = vmatpush2.bf16.msra.mxu0 0
        %1141 = vmatprep.subr.bf16.mxu0 0
        %1142 = vmatpush2.bf16.msra.mxu0 0
        %1143 = vmatprep.subr.bf16.mxu0 0
        %1144 = vmatpush2.bf16.msra.mxu0 0
        %1145 = vmatprep.subr.bf16.mxu0 0
        %1146 = vmatpush2.bf16.msra.mxu0 0
        %1147 = vmatprep.subr.bf16.mxu0 0
        %1148 = vmatpush2.bf16.msra.mxu0 0
        %1149 = vmatprep.subr.bf16.mxu0 0
        %1150 = vmatpush2.bf16.msra.mxu0 0
        %1151 = vmatprep.mubr.bf16.mxu0 0
        %1152 = vmatmul.mubr.bf16.gmra.mxu0 %v1114
        %v1153 = vpop.f32.mrf.mxu0
        %v1154 = vadd.f32 0.0, %v1153
        %v1155 = vpop.f32.mrf.mxu0
        %v1156 = vadd.f32 0.0, %v1155
        %v1157 = vpop.f32.mrf.mxu0
        %v1158 = vadd.f32 0.0, %v1157
        %v1159 = vpop.f32.mrf.mxu0
        %v1160 = vadd.f32 0.0, %v1159
        %1161 = vmatprep.mubr.bf16.mxu0 0
        %1162 = vmatmul.mubr.bf16.gmra.mxu0 %v1117
        %v1163 = vpop.f32.mrf.mxu0
        %v1164 = vadd.f32 0.0, %v1163
        %v1165 = vpop.f32.mrf.mxu0
        %v1166 = vadd.f32 0.0, %v1165
        %v1167 = vpop.f32.mrf.mxu0
        %v1168 = vadd.f32 0.0, %v1167
        %v1169 = vpop.f32.mrf.mxu0
        %v1170 = vadd.f32 0.0, %v1169
        %1171 = vdwg.mxu0
        %v1172 = vadd.f32 %v1062, %v1154
        %v1173 = vadd.f32 %v1063, %v1156
        %v1174 = vadd.f32 %v1064, %v1158
        %v1175 = vadd.f32 %v1065, %v1160
        %v1176 = vadd.f32 %v1066, %v1164
        %v1177 = vadd.f32 %v1067, %v1166
        %v1178 = vadd.f32 %v1068, %v1168
        %v1179 = vadd.f32 %v1069, %v1170
        %s1180 = scalar_lea.vmem %s1, 224
        %v1181 = vld [vmem:[%s1180] sm:$0xff]
        %v1182 = vld [vmem:[%s1180 + $0x8] sm:$0xff]
        %v1183 = vld [vmem:[%s1180 + $0x10] sm:$0xff]
        %v1184 = vld [vmem:[%s1180 + $0x18] sm:$0xff]
        %v1188 = vrot.slane %v975, 1
        %v1189 = vrot.slane %v976, 1
        %v1190 = vsel %vm819, %v1188, %v1189
        %v1191 = vrot.slane %v977, 1
        %v1192 = vsel %vm819, %v1189, %v1191
        %v1197 = vunpack.c.l.b16 %v1181
        %v1198 = vunpack.c.h.b16 %v1181
        %v1199 = vunpack.c.l.b16 %v1182
        %v1200 = vunpack.c.h.b16 %v1182
        %v1201 = vunpack.c.l.b16 %v1183
        %v1202 = vunpack.c.h.b16 %v1183
        %v1203 = vunpack.c.l.b16 %v1184
        %v1204 = vunpack.c.h.b16 %v1184
        %v1205 = vpack.c.b16 %v1199, %v1197
        %v1206 = vpack.c.b16 %v1200, %v1198
        %v1207 = vpack.c.b16 %v1203, %v1201
        %v1208 = vpack.c.b16 %v1204, %v1202
        %v1214 = vsel %vm556, %v1190, 0
        %v1217 = vsel %vm556, %v1192, 0
        %1219 = vmatprep.subr.bf16.mxu0 0
        %1220 = vmatpush1.bf16.msra.mxu0 0
        %1221 = vmatprep.subr.bf16.mxu0 0
        %1222 = vmatpush1.bf16.msra.mxu0 0
        %1223 = vmatprep.subr.bf16.mxu0 0
        %1224 = vmatpush1.bf16.msra.mxu0 0
        %1225 = vmatprep.subr.bf16.mxu0 0
        %1226 = vmatpush1.bf16.msra.mxu0 0
        %1227 = vmatprep.subr.bf16.mxu0 0
        %1228 = vmatpush1.bf16.msra.mxu0 0
        %1229 = vmatprep.subr.bf16.mxu0 0
        %1230 = vmatpush1.bf16.msra.mxu0 0
        %1231 = vmatprep.subr.bf16.mxu0 %v1208
        %1232 = vmatpush1.bf16.msra.mxu0 %v1207
        %1233 = vmatprep.subr.bf16.mxu0 %v1206
        %1234 = vmatpush1.bf16.msra.mxu0 %v1205
        %1235 = vmatprep.subr.bf16.mxu0 0
        %1236 = vmatpush2.bf16.msra.mxu0 0
        %1237 = vmatprep.subr.bf16.mxu0 0
        %1238 = vmatpush2.bf16.msra.mxu0 0
        %1239 = vmatprep.subr.bf16.mxu0 0
        %1240 = vmatpush2.bf16.msra.mxu0 0
        %1241 = vmatprep.subr.bf16.mxu0 0
        %1242 = vmatpush2.bf16.msra.mxu0 0
        %1243 = vmatprep.subr.bf16.mxu0 0
        %1244 = vmatpush2.bf16.msra.mxu0 0
        %1245 = vmatprep.subr.bf16.mxu0 0
        %1246 = vmatpush2.bf16.msra.mxu0 0
        %1247 = vmatprep.subr.bf16.mxu0 0
        %1248 = vmatpush2.bf16.msra.mxu0 0
        %1249 = vmatprep.subr.bf16.mxu0 0
        %1250 = vmatpush2.bf16.msra.mxu0 0
        %1251 = vmatprep.mubr.bf16.mxu0 0
        %1252 = vmatmul.mubr.bf16.gmra.mxu0 %v1214
        %v1253 = vpop.f32.mrf.mxu0
        %v1254 = vadd.f32 0.0, %v1253
        %v1255 = vpop.f32.mrf.mxu0
        %v1256 = vadd.f32 0.0, %v1255
        %v1257 = vpop.f32.mrf.mxu0
        %v1258 = vadd.f32 0.0, %v1257
        %v1259 = vpop.f32.mrf.mxu0
        %v1260 = vadd.f32 0.0, %v1259
        %1261 = vmatprep.mubr.bf16.mxu0 0
        %1262 = vmatmul.mubr.bf16.gmra.mxu0 %v1217
        %v1263 = vpop.f32.mrf.mxu0
        %v1264 = vadd.f32 0.0, %v1263
        %v1265 = vpop.f32.mrf.mxu0
        %v1266 = vadd.f32 0.0, %v1265
        %v1267 = vpop.f32.mrf.mxu0
        %v1268 = vadd.f32 0.0, %v1267
        %v1269 = vpop.f32.mrf.mxu0
        %v1270 = vadd.f32 0.0, %v1269
        %1271 = vdwg.mxu0
        %v1272 = vadd.f32 %v1172, %v1254
        %v1273 = vadd.f32 %v1173, %v1256
        %v1274 = vadd.f32 %v1174, %v1258
        %v1275 = vadd.f32 %v1175, %v1260
        %v1276 = vadd.f32 %v1176, %v1264
        %v1277 = vadd.f32 %v1177, %v1266
        %v1278 = vadd.f32 %v1178, %v1268
        %v1279 = vadd.f32 %v1179, %v1270
        %s1280 = scalar_lea.vmem %s521, 64
        %v1281 = vld [vmem:[%s1280] sm:$0xff]
        %v1282 = vld [vmem:[%s1280 + $0x8] sm:$0xff]
        %v1283 = vld [vmem:[%s1280 + $0x10] sm:$0xff]
        %v1284 = vld [vmem:[%s1280 + $0x18] sm:$0xff]
        %v1285 = vpack.c.bf16 %v1282, %v1281
        %v1286 = vpack.c.bf16 %v1284, %v1283
        %1287 = vmatprep.subr.bf16.mxu0 0
        %1288 = vmatpush1.bf16.msra.mxu0 0
        %1289 = vmatprep.subr.bf16.mxu0 0
        %1290 = vmatpush1.bf16.msra.mxu0 0
        %1291 = vmatprep.subr.bf16.mxu0 0
        %1292 = vmatpush1.bf16.msra.mxu0 0
        %1293 = vmatprep.subr.bf16.mxu0 0
        %1294 = vmatpush1.bf16.msra.mxu0 0
        %1295 = vmatprep.subr.bf16.mxu0 0
        %1296 = vmatpush1.bf16.msra.mxu0 0
        %1297 = vmatprep.subr.bf16.mxu0 0
        %1298 = vmatpush1.bf16.msra.mxu0 0
        %1299 = vmatprep.subr.bf16.mxu0 0
        %1300 = vmatpush1.bf16.msra.mxu0 %v1286
        %1301 = vmatprep.subr.bf16.mxu0 0
        %1302 = vmatpush1.bf16.msra.mxu0 %v1285
        %1303 = vmatprep.subr.bf16.mxu0 0
        %1304 = vmatpush2.bf16.msra.mxu0 0
        %1305 = vmatprep.subr.bf16.mxu0 0
        %1306 = vmatpush2.bf16.msra.mxu0 0
        %1307 = vmatprep.subr.bf16.mxu0 0
        %1308 = vmatpush2.bf16.msra.mxu0 0
        %1309 = vmatprep.subr.bf16.mxu0 0
        %1310 = vmatpush2.bf16.msra.mxu0 0
        %1311 = vmatprep.subr.bf16.mxu0 0
        %1312 = vmatpush2.bf16.msra.mxu0 0
        %1313 = vmatprep.subr.bf16.mxu0 0
        %1314 = vmatpush2.bf16.msra.mxu0 0
        %1315 = vmatprep.subr.bf16.mxu0 0
        %1316 = vmatpush2.bf16.msra.mxu0 0
        %1317 = vmatprep.subr.bf16.mxu0 0
        %1318 = vmatpush2.bf16.msra.mxu0 0
        %1319 = vmatprep.mubr.bf16.mxu0 0
        %1320 = vmatmul.mubr.bf16.gmra.mxu0 %v558
        %v1321 = vpop.f32.mrf.mxu0
        %v1322 = vadd.f32 0.0, %v1321
        %v1323 = vpop.f32.mrf.mxu0
        %v1324 = vpop.f32.mrf.mxu0
        %v1325 = vadd.f32 0.0, %v1324
        %v1326 = vpop.f32.mrf.mxu0
        %1327 = vmatprep.mubr.bf16.mxu0 0
        %1328 = vmatmul.mubr.bf16.gmra.mxu0 %v561
        %v1329 = vpop.f32.mrf.mxu0
        %v1330 = vadd.f32 0.0, %v1329
        %v1331 = vpop.f32.mrf.mxu0
        %v1332 = vpop.f32.mrf.mxu0
        %v1333 = vadd.f32 0.0, %v1332
        %v1334 = vpop.f32.mrf.mxu0
        %1335 = vmatprep.mubr.bf16.mxu0 0
        %1336 = vmatmul.mubr.bf16.gmra.mxu0 %v564
        %v1337 = vpop.f32.mrf.mxu0
        %v1338 = vadd.f32 0.0, %v1337
        %v1339 = vpop.f32.mrf.mxu0
        %v1340 = vpop.f32.mrf.mxu0
        %v1341 = vpop.f32.mrf.mxu0
        %1342 = vdwg.mxu0
        %v1343 = vpack.c.bf16 %v1325, %v1322
        %v1344 = vpack.c.bf16 %v1333, %v1330
        %v1345 = vpack.c.bf16 %v1338, %v1338
        %s1346 = scalar_lea.vmem %s1, 64
        %v1347 = vld [vmem:[%s1346] sm:$0xff]
        %v1348 = vld [vmem:[%s1346 + $0x8] sm:$0xff]
        %v1349 = vld [vmem:[%s1346 + $0x10] sm:$0xff]
        %v1350 = vld [vmem:[%s1346 + $0x18] sm:$0xff]
        %v1355 = vunpack.c.l.b16 %v1347
        %v1356 = vunpack.c.h.b16 %v1347
        %v1357 = vunpack.c.l.b16 %v1348
        %v1358 = vunpack.c.h.b16 %v1348
        %v1359 = vunpack.c.l.b16 %v1349
        %v1360 = vunpack.c.h.b16 %v1349
        %v1361 = vunpack.c.l.b16 %v1350
        %v1362 = vunpack.c.h.b16 %v1350
        %v1363 = vpack.c.b16 %v1357, %v1355
        %v1364 = vpack.c.b16 %v1358, %v1356
        %v1365 = vpack.c.b16 %v1361, %v1359
        %v1366 = vpack.c.b16 %v1362, %v1360
        %v1372 = vsel %vm556, %v1343, 0
        %v1375 = vsel %vm556, %v1344, 0
        %1377 = vmatprep.subr.bf16.mxu0 0
        %1378 = vmatpush1.bf16.msra.mxu0 0
        %1379 = vmatprep.subr.bf16.mxu0 0
        %1380 = vmatpush1.bf16.msra.mxu0 0
        %1381 = vmatprep.subr.bf16.mxu0 0
        %1382 = vmatpush1.bf16.msra.mxu0 0
        %1383 = vmatprep.subr.bf16.mxu0 0
        %1384 = vmatpush1.bf16.msra.mxu0 0
        %1385 = vmatprep.subr.bf16.mxu0 0
        %1386 = vmatpush1.bf16.msra.mxu0 0
        %1387 = vmatprep.subr.bf16.mxu0 0
        %1388 = vmatpush1.bf16.msra.mxu0 0
        %1389 = vmatprep.subr.bf16.mxu0 %v1366
        %1390 = vmatpush1.bf16.msra.mxu0 %v1365
        %1391 = vmatprep.subr.bf16.mxu0 %v1364
        %1392 = vmatpush1.bf16.msra.mxu0 %v1363
        %1393 = vmatprep.subr.bf16.mxu0 0
        %1394 = vmatpush2.bf16.msra.mxu0 0
        %1395 = vmatprep.subr.bf16.mxu0 0
        %1396 = vmatpush2.bf16.msra.mxu0 0
        %1397 = vmatprep.subr.bf16.mxu0 0
        %1398 = vmatpush2.bf16.msra.mxu0 0
        %1399 = vmatprep.subr.bf16.mxu0 0
        %1400 = vmatpush2.bf16.msra.mxu0 0
        %1401 = vmatprep.subr.bf16.mxu0 0
        %1402 = vmatpush2.bf16.msra.mxu0 0
        %1403 = vmatprep.subr.bf16.mxu0 0
        %1404 = vmatpush2.bf16.msra.mxu0 0
        %1405 = vmatprep.subr.bf16.mxu0 0
        %1406 = vmatpush2.bf16.msra.mxu0 0
        %1407 = vmatprep.subr.bf16.mxu0 0
        %1408 = vmatpush2.bf16.msra.mxu0 0
        %1409 = vmatprep.mubr.bf16.mxu0 0
        %1410 = vmatmul.mubr.bf16.gmra.mxu0 %v1372
        %v1411 = vpop.f32.mrf.mxu0
        %v1412 = vadd.f32 0.0, %v1411
        %v1413 = vpop.f32.mrf.mxu0
        %v1414 = vadd.f32 0.0, %v1413
        %v1415 = vpop.f32.mrf.mxu0
        %v1416 = vadd.f32 0.0, %v1415
        %v1417 = vpop.f32.mrf.mxu0
        %v1418 = vadd.f32 0.0, %v1417
        %1419 = vmatprep.mubr.bf16.mxu0 0
        %1420 = vmatmul.mubr.bf16.gmra.mxu0 %v1375
        %v1421 = vpop.f32.mrf.mxu0
        %v1422 = vadd.f32 0.0, %v1421
        %v1423 = vpop.f32.mrf.mxu0
        %v1424 = vadd.f32 0.0, %v1423
        %v1425 = vpop.f32.mrf.mxu0
        %v1426 = vadd.f32 0.0, %v1425
        %v1427 = vpop.f32.mrf.mxu0
        %v1428 = vadd.f32 0.0, %v1427
        %1429 = vdwg.mxu0
        %v1430 = vadd.f32 %v1272, %v1412
        %v1431 = vadd.f32 %v1273, %v1414
        %v1432 = vadd.f32 %v1274, %v1416
        %v1433 = vadd.f32 %v1275, %v1418
        %v1434 = vadd.f32 %v1276, %v1422
        %v1435 = vadd.f32 %v1277, %v1424
        %v1436 = vadd.f32 %v1278, %v1426
        %v1437 = vadd.f32 %v1279, %v1428
        %s1438 = scalar_lea.vmem %s1, 160
        %v1439 = vld [vmem:[%s1438] sm:$0xff]
        %v1440 = vld [vmem:[%s1438 + $0x8] sm:$0xff]
        %v1441 = vld [vmem:[%s1438 + $0x10] sm:$0xff]
        %v1442 = vld [vmem:[%s1438 + $0x18] sm:$0xff]
        %v1443 = vshrl.u32 %v1343, 16
        %v1445 = vshll.u32 %v1343, 16
        %v1447 = vrot.slane %v1445, 1
        %v1448 = vor.u32 %v1443, %v1447
        %v1449 = vshll.u32 %v1344, 16
        %v1451 = vrot.slane %v1449, 1
        %v1452 = vsel %vm634, %v1448, %v1451
        %v1453 = vshrl.u32 %v1344, 16
        %v1455 = vor.u32 %v1453, %v1451
        %v1457 = vshll.u32 %v1345, 16
        %v1459 = vrot.slane %v1457, 1
        %v1460 = vsel %vm634, %v1455, %v1459
        %v1465 = vunpack.c.l.b16 %v1439
        %v1466 = vunpack.c.h.b16 %v1439
        %v1467 = vunpack.c.l.b16 %v1440
        %v1468 = vunpack.c.h.b16 %v1440
        %v1469 = vunpack.c.l.b16 %v1441
        %v1470 = vunpack.c.h.b16 %v1441
        %v1471 = vunpack.c.l.b16 %v1442
        %v1472 = vunpack.c.h.b16 %v1442
        %v1473 = vpack.c.b16 %v1467, %v1465
        %v1474 = vpack.c.b16 %v1468, %v1466
        %v1475 = vpack.c.b16 %v1471, %v1469
        %v1476 = vpack.c.b16 %v1472, %v1470
        %v1482 = vsel %vm556, %v1452, 0
        %v1485 = vsel %vm556, %v1460, 0
        %1487 = vmatprep.subr.bf16.mxu0 0
        %1488 = vmatpush1.bf16.msra.mxu0 0
        %1489 = vmatprep.subr.bf16.mxu0 0
        %1490 = vmatpush1.bf16.msra.mxu0 0
        %1491 = vmatprep.subr.bf16.mxu0 0
        %1492 = vmatpush1.bf16.msra.mxu0 0
        %1493 = vmatprep.subr.bf16.mxu0 0
        %1494 = vmatpush1.bf16.msra.mxu0 0
        %1495 = vmatprep.subr.bf16.mxu0 0
        %1496 = vmatpush1.bf16.msra.mxu0 0
        %1497 = vmatprep.subr.bf16.mxu0 0
        %1498 = vmatpush1.bf16.msra.mxu0 0
        %1499 = vmatprep.subr.bf16.mxu0 %v1476
        %1500 = vmatpush1.bf16.msra.mxu0 %v1475
        %1501 = vmatprep.subr.bf16.mxu0 %v1474
        %1502 = vmatpush1.bf16.msra.mxu0 %v1473
        %1503 = vmatprep.subr.bf16.mxu0 0
        %1504 = vmatpush2.bf16.msra.mxu0 0
        %1505 = vmatprep.subr.bf16.mxu0 0
        %1506 = vmatpush2.bf16.msra.mxu0 0
        %1507 = vmatprep.subr.bf16.mxu0 0
        %1508 = vmatpush2.bf16.msra.mxu0 0
        %1509 = vmatprep.subr.bf16.mxu0 0
        %1510 = vmatpush2.bf16.msra.mxu0 0
        %1511 = vmatprep.subr.bf16.mxu0 0
        %1512 = vmatpush2.bf16.msra.mxu0 0
        %1513 = vmatprep.subr.bf16.mxu0 0
        %1514 = vmatpush2.bf16.msra.mxu0 0
        %1515 = vmatprep.subr.bf16.mxu0 0
        %1516 = vmatpush2.bf16.msra.mxu0 0
        %1517 = vmatprep.subr.bf16.mxu0 0
        %1518 = vmatpush2.bf16.msra.mxu0 0
        %1519 = vmatprep.mubr.bf16.mxu0 0
        %1520 = vmatmul.mubr.bf16.gmra.mxu0 %v1482
        %v1521 = vpop.f32.mrf.mxu0
        %v1522 = vadd.f32 0.0, %v1521
        %v1523 = vpop.f32.mrf.mxu0
        %v1524 = vadd.f32 0.0, %v1523
        %v1525 = vpop.f32.mrf.mxu0
        %v1526 = vadd.f32 0.0, %v1525
        %v1527 = vpop.f32.mrf.mxu0
        %v1528 = vadd.f32 0.0, %v1527
        %1529 = vmatprep.mubr.bf16.mxu0 0
        %1530 = vmatmul.mubr.bf16.gmra.mxu0 %v1485
        %v1531 = vpop.f32.mrf.mxu0
        %v1532 = vadd.f32 0.0, %v1531
        %v1533 = vpop.f32.mrf.mxu0
        %v1534 = vadd.f32 0.0, %v1533
        %v1535 = vpop.f32.mrf.mxu0
        %v1536 = vadd.f32 0.0, %v1535
        %v1537 = vpop.f32.mrf.mxu0
        %v1538 = vadd.f32 0.0, %v1537
        %1539 = vdwg.mxu0
        %v1540 = vadd.f32 %v1430, %v1522
        %v1541 = vadd.f32 %v1431, %v1524
        %v1542 = vadd.f32 %v1432, %v1526
        %v1543 = vadd.f32 %v1433, %v1528
        %v1544 = vadd.f32 %v1434, %v1532
        %v1545 = vadd.f32 %v1435, %v1534
        %v1546 = vadd.f32 %v1436, %v1536
        %v1547 = vadd.f32 %v1437, %v1538
        %s1548 = scalar_lea.vmem %s1, 256
        %v1549 = vld [vmem:[%s1548] sm:$0xff]
        %v1550 = vld [vmem:[%s1548 + $0x8] sm:$0xff]
        %v1551 = vld [vmem:[%s1548 + $0x10] sm:$0xff]
        %v1552 = vld [vmem:[%s1548 + $0x18] sm:$0xff]
        %v1556 = vrot.slane %v1343, 1
        %v1557 = vrot.slane %v1344, 1
        %v1558 = vsel %vm819, %v1556, %v1557
        %v1559 = vrot.slane %v1345, 1
        %v1560 = vsel %vm819, %v1557, %v1559
        %v1565 = vunpack.c.l.b16 %v1549
        %v1566 = vunpack.c.h.b16 %v1549
        %v1567 = vunpack.c.l.b16 %v1550
        %v1568 = vunpack.c.h.b16 %v1550
        %v1569 = vunpack.c.l.b16 %v1551
        %v1570 = vunpack.c.h.b16 %v1551
        %v1571 = vunpack.c.l.b16 %v1552
        %v1572 = vunpack.c.h.b16 %v1552
        %v1573 = vpack.c.b16 %v1567, %v1565
        %v1574 = vpack.c.b16 %v1568, %v1566
        %v1575 = vpack.c.b16 %v1571, %v1569
        %v1576 = vpack.c.b16 %v1572, %v1570
        %v1582 = vsel %vm556, %v1558, 0
        %v1585 = vsel %vm556, %v1560, 0
        %1587 = vmatprep.subr.bf16.mxu0 0
        %1588 = vmatpush1.bf16.msra.mxu0 0
        %1589 = vmatprep.subr.bf16.mxu0 0
        %1590 = vmatpush1.bf16.msra.mxu0 0
        %1591 = vmatprep.subr.bf16.mxu0 0
        %1592 = vmatpush1.bf16.msra.mxu0 0
        %1593 = vmatprep.subr.bf16.mxu0 0
        %1594 = vmatpush1.bf16.msra.mxu0 0
        %1595 = vmatprep.subr.bf16.mxu0 0
        %1596 = vmatpush1.bf16.msra.mxu0 0
        %1597 = vmatprep.subr.bf16.mxu0 0
        %1598 = vmatpush1.bf16.msra.mxu0 0
        %1599 = vmatprep.subr.bf16.mxu0 %v1576
        %1600 = vmatpush1.bf16.msra.mxu0 %v1575
        %1601 = vmatprep.subr.bf16.mxu0 %v1574
        %1602 = vmatpush1.bf16.msra.mxu0 %v1573
        %1603 = vmatprep.subr.bf16.mxu0 0
        %1604 = vmatpush2.bf16.msra.mxu0 0
        %1605 = vmatprep.subr.bf16.mxu0 0
        %1606 = vmatpush2.bf16.msra.mxu0 0
        %1607 = vmatprep.subr.bf16.mxu0 0
        %1608 = vmatpush2.bf16.msra.mxu0 0
        %1609 = vmatprep.subr.bf16.mxu0 0
        %1610 = vmatpush2.bf16.msra.mxu0 0
        %1611 = vmatprep.subr.bf16.mxu0 0
        %1612 = vmatpush2.bf16.msra.mxu0 0
        %1613 = vmatprep.subr.bf16.mxu0 0
        %1614 = vmatpush2.bf16.msra.mxu0 0
        %1615 = vmatprep.subr.bf16.mxu0 0
        %1616 = vmatpush2.bf16.msra.mxu0 0
        %1617 = vmatprep.subr.bf16.mxu0 0
        %1618 = vmatpush2.bf16.msra.mxu0 0
        %1619 = vmatprep.mubr.bf16.mxu0 0
        %1620 = vmatmul.mubr.bf16.gmra.mxu0 %v1582
        %v1621 = vpop.f32.mrf.mxu0
        %v1622 = vadd.f32 0.0, %v1621
        %v1623 = vpop.f32.mrf.mxu0
        %v1624 = vadd.f32 0.0, %v1623
        %v1625 = vpop.f32.mrf.mxu0
        %v1626 = vadd.f32 0.0, %v1625
        %v1627 = vpop.f32.mrf.mxu0
        %v1628 = vadd.f32 0.0, %v1627
        %1629 = vmatprep.mubr.bf16.mxu0 0
        %1630 = vmatmul.mubr.bf16.gmra.mxu0 %v1585
        %v1631 = vpop.f32.mrf.mxu0
        %v1632 = vadd.f32 0.0, %v1631
        %v1633 = vpop.f32.mrf.mxu0
        %v1634 = vadd.f32 0.0, %v1633
        %v1635 = vpop.f32.mrf.mxu0
        %v1636 = vadd.f32 0.0, %v1635
        %v1637 = vpop.f32.mrf.mxu0
        %v1638 = vadd.f32 0.0, %v1637
        %1639 = vdwg.mxu0
        %v1640 = vadd.f32 %v1540, %v1622
        %v1641 = vadd.f32 %v1541, %v1624
        %v1642 = vadd.f32 %v1542, %v1626
        %v1643 = vadd.f32 %v1543, %v1628
        %v1644 = vadd.f32 %v1544, %v1632
        %v1645 = vadd.f32 %v1545, %v1634
        %v1646 = vadd.f32 %v1546, %v1636
        %v1647 = vadd.f32 %v1547, %v1638
        %v1648 = vld [vmem:[%s2] sm:$0x3]
        %v1650 = vlaneseq
        %v1651 = vshrl.u32 %v1650, 7
        %v1652 = vsub.s32 0, %v1651
        %v1653 = vrot.slane %v1648, %v1652
        %v1654 = vlaneseq
        %v1655 = vshrl.u32 %v1654, 7
        %v1656 = vsub.s32 1, %v1655
        %v1657 = vrot.slane %v1648, %v1656
        %v1660 = vmul.f32 %v1640, %v1653
        %v1661 = vmul.f32 %v1641, %v1657
        %v1662 = vmul.f32 %v1642, %v1653
        %v1663 = vmul.f32 %v1643, %v1657
        %v1664 = vmul.f32 %v1644, %v1653
        %v1665 = vmul.f32 %v1645, %v1657
        %v1666 = vmul.f32 %v1646, %v1653
        %v1667 = vmul.f32 %v1647, %v1657
        %v1668 = vld [vmem:[%s3] sm:$0x3]
        %v1670 = vlaneseq
        %v1671 = vshrl.u32 %v1670, 7
        %v1672 = vsub.s32 0, %v1671
        %v1673 = vrot.slane %v1668, %v1672
        %v1674 = vlaneseq
        %v1675 = vshrl.u32 %v1674, 7
        %v1676 = vsub.s32 1, %v1675
        %v1677 = vrot.slane %v1668, %v1676
        %v1680 = vadd.f32 %v1660, %v1673
        %v1681 = vadd.f32 %v1661, %v1677
        %v1682 = vadd.f32 %v1662, %v1673
        %v1683 = vadd.f32 %v1663, %v1677
        %v1684 = vadd.f32 %v1664, %v1673
        %v1685 = vadd.f32 %v1665, %v1677
        %v1686 = vadd.f32 %v1666, %v1673
        %v1687 = vadd.f32 %v1667, %v1677
        %v1688 = vmax.f32 %v1680, 0.0
        %v1689 = vmax.f32 %v1681, 0.0
        %v1690 = vmax.f32 %v1682, 0.0
        %v1691 = vmax.f32 %v1683, 0.0
        %v1692 = vmax.f32 %v1684, 0.0
        %v1693 = vmax.f32 %v1685, 0.0
        %v1694 = vmax.f32 %v1686, 0.0
        %v1695 = vmax.f32 %v1687, 0.0
        %vm1704 = vcmask 1046528
        %v1705 = vrot.slane %v1688, 1
        %v1706 = vrot.slane %v1690, 1
        %v1707 = vsel %vm1704, %v1705, %v1706
        %v1708 = vrot.slane %v1689, 1
        %v1709 = vrot.slane %v1691, 1
        %v1710 = vsel %vm1704, %v1708, %v1709
        %v1711 = vrot.slane %v1692, 1
        %v1712 = vsel %vm1704, %v1706, %v1711
        %v1713 = vrot.slane %v1693, 1
        %v1714 = vsel %vm1704, %v1709, %v1713
        %v1715 = vrot.slane %v1694, 1
        %v1716 = vsel %vm1704, %v1711, %v1715
        %v1717 = vrot.slane %v1695, 1
        %v1718 = vsel %vm1704, %v1713, %v1717
        %v1727 = vmax.f32 %v1688, %v1707
        %v1728 = vmax.f32 %v1689, %v1710
        %v1729 = vmax.f32 %v1690, %v1712
        %v1730 = vmax.f32 %v1691, %v1714
        %v1731 = vmax.f32 %v1692, %v1716
        %v1732 = vmax.f32 %v1693, %v1718
        %v1733 = vmax.f32 %v1694, %v1715
        %v1734 = vmax.f32 %v1695, %v1717
        %v1735 = vpack.c.bf16 %v1729, %v1727
        %v1736 = vpack.c.bf16 %v1730, %v1728
        %v1737 = vpack.c.bf16 %v1733, %v1731
        %v1738 = vpack.c.bf16 %v1734, %v1732
        %v1739 = vsub.s32 %v524, 1
        %v1740 = vsub.s32 %v525, 1
        %v1741 = vsub.s32 %v526, 1
        %v1742 = vmul.u32 %v1739, 2
        %v1743 = vmul.u32 %v1740, 2
        %v1744 = vmul.u32 %v1741, 2
        %vm1745 = vcmp.eq.s32.totalorder %v530, %v1742
        %vm1746 = vcmp.eq.s32.totalorder %v530, %v1743
        %vm1747 = vcmp.eq.s32.totalorder %v530, %v1744
        %v1748 = vsel %vm1745, 1, 0
        %v1749 = vsel %vm1746, 1, 0
        %v1750 = vsel %vm1747, 1, 0
        %v1751 = vcvt.s32.f32 %v1748
        %v1752 = vcvt.s32.f32 %v1749
        %v1753 = vcvt.s32.f32 %v1750
        %v1754 = vpack.c.bf16 %v1752, %v1751
        %v1755 = vpack.c.bf16 %v1753, %v1753
        %vm1756 = vcmask 252928
        %v1758 = vsel %vm1756, %v1754, 0
        %v1761 = vsel %vm1756, %v1755, 0
        %vm1763 = vcmask 1047552
        %v1764 = vsel %vm1704, 4294967295, 65535
        %v1765 = vsel %vm1763, %v1764, 0
        %v1767 = vand.u32 %v1737, %v1765
        %v1770 = vand.u32 %v1738, %v1765
        %1772 = vmatprep.subr.bf16.mxu0 0
        %1773 = vmatpush1.bf16.msra.mxu0 0
        %1774 = vmatprep.subr.bf16.mxu0 0
        %1775 = vmatpush1.bf16.msra.mxu0 0
        %1776 = vmatprep.subr.bf16.mxu0 0
        %1777 = vmatpush1.bf16.msra.mxu0 0
        %1778 = vmatprep.subr.bf16.mxu0 0
        %1779 = vmatpush1.bf16.msra.mxu0 0
        %1780 = vmatprep.subr.bf16.mxu0 0
        %1781 = vmatpush1.bf16.msra.mxu0 0
        %1782 = vmatprep.subr.bf16.mxu0 0
        %1783 = vmatpush1.bf16.msra.mxu0 0
        %1784 = vmatprep.subr.bf16.mxu0 %v1770
        %1785 = vmatpush1.bf16.msra.mxu0 %v1767
        %1786 = vmatprep.subr.bf16.mxu0 %v1736
        %1787 = vmatpush1.bf16.msra.mxu0 %v1735
        %1788 = vmatprep.subr.bf16.mxu0 0
        %1789 = vmatpush2.bf16.msra.mxu0 0
        %1790 = vmatprep.subr.bf16.mxu0 0
        %1791 = vmatpush2.bf16.msra.mxu0 0
        %1792 = vmatprep.subr.bf16.mxu0 0
        %1793 = vmatpush2.bf16.msra.mxu0 0
        %1794 = vmatprep.subr.bf16.mxu0 0
        %1795 = vmatpush2.bf16.msra.mxu0 0
        %1796 = vmatprep.subr.bf16.mxu0 0
        %1797 = vmatpush2.bf16.msra.mxu0 0
        %1798 = vmatprep.subr.bf16.mxu0 0
        %1799 = vmatpush2.bf16.msra.mxu0 0
        %1800 = vmatprep.subr.bf16.mxu0 0
        %1801 = vmatpush2.bf16.msra.mxu0 0
        %1802 = vmatprep.subr.bf16.mxu0 0
        %1803 = vmatpush2.bf16.msra.mxu0 0
        %1804 = vmatprep.mubr.bf16.mxu0 0
        %1805 = vmatmul.mubr.bf16.gmra.mxu0 %v1758
        %v1806 = vpop.f32.mrf.mxu0
        %v1807 = vadd.f32 0.0, %v1806
        %v1808 = vpop.f32.mrf.mxu0
        %v1809 = vadd.f32 0.0, %v1808
        %v1810 = vpop.f32.mrf.mxu0
        %v1811 = vadd.f32 0.0, %v1810
        %v1812 = vpop.f32.mrf.mxu0
        %v1813 = vadd.f32 0.0, %v1812
        %1814 = vmatprep.mubr.bf16.mxu0 0
        %1815 = vmatmul.mubr.bf16.gmra.mxu0 %v1761
        %v1816 = vpop.f32.mrf.mxu0
        %v1817 = vadd.f32 0.0, %v1816
        %v1818 = vpop.f32.mrf.mxu0
        %v1819 = vadd.f32 0.0, %v1818
        %v1820 = vpop.f32.mrf.mxu0
        %v1821 = vpop.f32.mrf.mxu0
        %1822 = vdwg.mxu0
        %1829 = vrot.lane.b32.xlu0 %v1807, 120
        %v1830 = vpop.permute.xlu0 %1829
        %1831 = vrot.lane.b32.xlu0 %v1809, 120
        %v1832 = vpop.permute.xlu0 %1831
        %1833 = vrot.lane.b32.xlu0 %v1811, 120
        %v1834 = vpop.permute.xlu0 %1833
        %1835 = vrot.lane.b32.xlu0 %v1813, 120
        %v1836 = vpop.permute.xlu0 %1835
        %1837 = vrot.lane.b32.xlu0 %v1817, 120
        %v1838 = vpop.permute.xlu0 %1837
        %1839 = vrot.lane.b32.xlu0 %v1819, 120
        %v1840 = vpop.permute.xlu0 %1839
        %vm1841 = vcmask 982016
        %v1842 = vsel %vm1841, %v1830, %v1832
        %v1843 = vsel %vm1841, %v1834, %v1836
        %v1844 = vsel %vm1841, %v1838, %v1840
        %v1851 = vmax.f32 %v1807, %v1842
        %v1852 = vmax.f32 %v1809, %v1832
        %v1853 = vmax.f32 %v1811, %v1843
        %v1854 = vmax.f32 %v1813, %v1836
        %v1855 = vmax.f32 %v1817, %v1844
        %v1856 = vmax.f32 %v1819, %v1840
        %v1857 = vpack.c.bf16 %v1853, %v1851
        %v1858 = vpack.c.bf16 %v1854, %v1852
        %v1859 = vpack.c.bf16 %v1855, %v1855
        %v1860 = vpack.c.bf16 %v1856, %v1856
        %v1861 = vld [vmem:[#allocation2] sm:$0xff]
        %v1862 = vld [vmem:[#allocation2 + $0x8] sm:$0xff]
        %v1863 = vld [vmem:[#allocation2 + $0x10] sm:$0xff]
        %v1864 = vld [vmem:[#allocation2 + $0x18] sm:$0xff]
        %v1865 = vld [vmem:[#allocation2 + $0x20] sm:$0xff]
        %v1866 = vld [vmem:[#allocation2 + $0x28] sm:$0xff]
        %v1867 = vld [vmem:[#allocation2 + $0x30] sm:$0xff]
        %v1868 = vld [vmem:[#allocation2 + $0x38] sm:$0xff]
        %v1869 = vld [vmem:[#allocation2 + $0x40] sm:$0xff]
        %v1870 = vld [vmem:[#allocation2 + $0x48] sm:$0xff]
        %v1871 = vld [vmem:[#allocation2 + $0x50] sm:$0xff]
        %v1872 = vld [vmem:[#allocation2 + $0x58] sm:$0xff]
        %v1873 = vld [vmem:[#allocation2 + $0x60] sm:$0xff]
        %v1874 = vld [vmem:[#allocation2 + $0x68] sm:$0xff]
        %v1875 = vld [vmem:[#allocation2 + $0x70] sm:$0xff]
        %v1876 = vld [vmem:[#allocation2 + $0x78] sm:$0xff]
        %v1877 = vld [vmem:[#allocation2 + $0x80] sm:$0xff]
        %v1878 = vld [vmem:[#allocation2 + $0x88] sm:$0xff]
        %v1879 = vld [vmem:[#allocation2 + $0x90] sm:$0xff]
        %v1880 = vld [vmem:[#allocation2 + $0x98] sm:$0xff]
        %v1881 = vld [vmem:[#allocation2 + $0xa0] sm:$0xff]
        %v1882 = vld [vmem:[#allocation2 + $0xa8] sm:$0xff]
        %v1883 = vld [vmem:[#allocation2 + $0xb0] sm:$0xff]
        %v1884 = vld [vmem:[#allocation2 + $0xb8] sm:$0xff]
        %v1885 = vld [vmem:[#allocation2 + $0xc0] sm:$0xff]
        %v1886 = vld [vmem:[#allocation2 + $0xc8] sm:$0xff]
        %v1887 = vld [vmem:[#allocation2 + $0xd0] sm:$0xff]
        %v1888 = vld [vmem:[#allocation2 + $0xd8] sm:$0xff]
        %v1889 = vld [vmem:[#allocation2 + $0xe0] sm:$0xff]
        %v1890 = vld [vmem:[#allocation2 + $0xe8] sm:$0xff]
        %v1891 = vld [vmem:[#allocation2 + $0xf0] sm:$0xff]
        %s1892 = scalar_lea.vmem [#allocation2], 248
        %v1893 = vld [vmem:[%s1892] sm:$0xff]
        %v1894 = vld [vmem:[%s1892 + $0x8] sm:$0xff]
        %v1895 = vld [vmem:[%s1892 + $0x10] sm:$0xff]
        %v1896 = vld [vmem:[%s1892 + $0x18] sm:$0xff]
        %v1897 = vld [vmem:[%s1892 + $0x20] sm:$0xff]
        %v1898 = vld [vmem:[%s1892 + $0x28] sm:$0xff]
        %v1899 = vld [vmem:[%s1892 + $0x30] sm:$0xff]
        %v1900 = vld [vmem:[%s1892 + $0x38] sm:$0xff]
        %v1901 = vld [vmem:[%s1892 + $0x40] sm:$0xff]
        %v1902 = vld [vmem:[%s1892 + $0x48] sm:$0xff]
        %v1903 = vld [vmem:[%s1892 + $0x50] sm:$0xff]
        %v1904 = vld [vmem:[%s1892 + $0x58] sm:$0xff]
        %v1905 = vld [vmem:[%s1892 + $0x60] sm:$0xff]
        %v1906 = vld [vmem:[%s1892 + $0x68] sm:$0xff]
        %v1907 = vld [vmem:[%s1892 + $0x70] sm:$0xff]
        %v1908 = vld [vmem:[%s1892 + $0x78] sm:$0xff]
        %v1909 = vld [vmem:[%s1892 + $0x80] sm:$0xff]
        %v1910 = vld [vmem:[%s1892 + $0x88] sm:$0xff]
        %v1911 = vld [vmem:[%s1892 + $0x90] sm:$0xff]
        %v1912 = vld [vmem:[%s1892 + $0x98] sm:$0xff]
        %v1913 = vld [vmem:[%s1892 + $0xa0] sm:$0xff]
        %v1914 = vld [vmem:[%s1892 + $0xa8] sm:$0xff]
        %v1915 = vld [vmem:[%s1892 + $0xb0] sm:$0xff]
        %v1916 = vld [vmem:[%s1892 + $0xb8] sm:$0xff]
        %v1917 = vld [vmem:[%s1892 + $0xc0] sm:$0xff]
        %v1918 = vld [vmem:[%s1892 + $0xc8] sm:$0xff]
        %v1919 = vld [vmem:[%s1892 + $0xd0] sm:$0xff]
        %v1920 = vld [vmem:[%s1892 + $0xd8] sm:$0xff]
        %v1921 = vld [vmem:[%s1892 + $0xe0] sm:$0xff]
        %v1922 = vld [vmem:[%s1892 + $0xe8] sm:$0xff]
        %v1923 = vld [vmem:[%s1892 + $0xf0] sm:$0xff]
        %v1925 = vshrl.u32 %v1857, 16
        %v1927 = vshll.u32 %v1857, 16
        %v1929 = vrot.slane %v1927, 1
        %v1930 = vor.u32 %v1925, %v1929
        %v1932 = vshll.u32 %v1859, 16
        %v1934 = vrot.slane %v1932, 1
        %v1935 = vsel %vm634, %v1930, %v1934
        %v1937 = vshrl.u32 %v1858, 16
        %v1939 = vshll.u32 %v1858, 16
        %v1941 = vrot.slane %v1939, 1
        %v1942 = vor.u32 %v1937, %v1941
        %v1944 = vshll.u32 %v1860, 16
        %v1946 = vrot.slane %v1944, 1
        %v1947 = vsel %vm634, %v1942, %v1946
        %v1980 = vunpack.c.l.b16 %v1893
        %v1981 = vunpack.c.h.b16 %v1893
        %v1982 = vunpack.c.l.b16 %v1894
        %v1983 = vunpack.c.h.b16 %v1894
        %v1984 = vunpack.c.l.b16 %v1895
        %v1985 = vunpack.c.h.b16 %v1895
        %v1986 = vunpack.c.l.b16 %v1896
        %v1987 = vunpack.c.h.b16 %v1896
        %v1988 = vunpack.c.l.b16 %v1897
        %v1989 = vunpack.c.h.b16 %v1897
        %v1990 = vunpack.c.l.b16 %v1898
        %v1991 = vunpack.c.h.b16 %v1898
        %v1992 = vunpack.c.l.b16 %v1899
        %v1993 = vunpack.c.h.b16 %v1899
        %v1994 = vunpack.c.l.b16 %v1900
        %v1995 = vunpack.c.h.b16 %v1900
        %v1996 = vunpack.c.l.b16 %v1901
        %v1997 = vunpack.c.h.b16 %v1901
        %v1998 = vunpack.c.l.b16 %v1902
        %v1999 = vunpack.c.h.b16 %v1902
        %v2000 = vunpack.c.l.b16 %v1903
        %v2001 = vunpack.c.h.b16 %v1903
        %v2002 = vunpack.c.l.b16 %v1904
        %v2003 = vunpack.c.h.b16 %v1904
        %v2004 = vunpack.c.l.b16 %v1905
        %v2005 = vunpack.c.h.b16 %v1905
        %v2006 = vunpack.c.l.b16 %v1906
        %v2007 = vunpack.c.h.b16 %v1906
        %v2008 = vunpack.c.l.b16 %v1907
        %v2009 = vunpack.c.h.b16 %v1907
        %v2010 = vunpack.c.l.b16 %v1908
        %v2011 = vunpack.c.h.b16 %v1908
        %v2012 = vunpack.c.l.b16 %v1909
        %v2013 = vunpack.c.h.b16 %v1909
        %v2014 = vunpack.c.l.b16 %v1910
        %v2015 = vunpack.c.h.b16 %v1910
        %v2016 = vunpack.c.l.b16 %v1911
        %v2017 = vunpack.c.h.b16 %v1911
        %v2018 = vunpack.c.l.b16 %v1912
        %v2019 = vunpack.c.h.b16 %v1912
        %v2020 = vunpack.c.l.b16 %v1913
        %v2021 = vunpack.c.h.b16 %v1913
        %v2022 = vunpack.c.l.b16 %v1914
        %v2023 = vunpack.c.h.b16 %v1914
        %v2024 = vunpack.c.l.b16 %v1915
        %v2025 = vunpack.c.h.b16 %v1915
        %v2026 = vunpack.c.l.b16 %v1916
        %v2027 = vunpack.c.h.b16 %v1916
        %v2028 = vunpack.c.l.b16 %v1917
        %v2029 = vunpack.c.h.b16 %v1917
        %v2030 = vunpack.c.l.b16 %v1918
        %v2031 = vunpack.c.h.b16 %v1918
        %v2032 = vunpack.c.l.b16 %v1919
        %v2033 = vunpack.c.h.b16 %v1919
        %v2034 = vunpack.c.l.b16 %v1920
        %v2035 = vunpack.c.h.b16 %v1920
        %v2036 = vunpack.c.l.b16 %v1921
        %v2037 = vunpack.c.h.b16 %v1921
        %v2038 = vunpack.c.l.b16 %v1922
        %v2039 = vunpack.c.h.b16 %v1922
        %v2040 = vunpack.c.l.b16 %v1923
        %v2041 = vunpack.c.h.b16 %v1923
        %v2042 = vpack.c.b16 %v1982, %v1980
        %v2043 = vpack.c.b16 %v1983, %v1981
        %v2044 = vpack.c.b16 %v1986, %v1984
        %v2045 = vpack.c.b16 %v1987, %v1985
        %v2046 = vpack.c.b16 %v1990, %v1988
        %v2047 = vpack.c.b16 %v1991, %v1989
        %v2048 = vpack.c.b16 %v1994, %v1992
        %v2049 = vpack.c.b16 %v1995, %v1993
        %v2050 = vpack.c.b16 %v1998, %v1996
        %v2051 = vpack.c.b16 %v1999, %v1997
        %v2052 = vpack.c.b16 %v2002, %v2000
        %v2053 = vpack.c.b16 %v2003, %v2001
        %v2054 = vpack.c.b16 %v2006, %v2004
        %v2055 = vpack.c.b16 %v2007, %v2005
        %v2056 = vpack.c.b16 %v2010, %v2008
        %v2057 = vpack.c.b16 %v2011, %v2009
        %v2058 = vpack.c.b16 %v2014, %v2012
        %v2059 = vpack.c.b16 %v2015, %v2013
        %v2060 = vpack.c.b16 %v2018, %v2016
        %v2061 = vpack.c.b16 %v2019, %v2017
        %v2062 = vpack.c.b16 %v2022, %v2020
        %v2063 = vpack.c.b16 %v2023, %v2021
        %v2064 = vpack.c.b16 %v2026, %v2024
        %v2065 = vpack.c.b16 %v2027, %v2025
        %v2066 = vpack.c.b16 %v2030, %v2028
        %v2067 = vpack.c.b16 %v2031, %v2029
        %v2068 = vpack.c.b16 %v2034, %v2032
        %v2069 = vpack.c.b16 %v2035, %v2033
        %v2070 = vpack.c.b16 %v2038, %v2036
        %v2071 = vpack.c.b16 %v2039, %v2037
        %v2072 = vpack.c.b16 %v2040, %v2040
        %v2073 = vpack.c.b16 %v2041, %v2041
        %v2105 = vsel %vm1841, %v1947, 0
        %vm2107 = vcmask 1043456
        %v2109 = vsel %vm2107, %v2072, 0
        %v2112 = vsel %vm2107, %v2073, 0
        %2114 = vmatprep.subr.bf16.mxu0 %v2057
        %2115 = vmatpush1.bf16.msra.mxu0 %v2056
        %2116 = vmatprep.subr.bf16.mxu0 %v2055
        %2117 = vmatpush1.bf16.msra.mxu0 %v2054
        %2118 = vmatprep.subr.bf16.mxu0 %v2053
        %2119 = vmatpush1.bf16.msra.mxu0 %v2052
        %2120 = vmatprep.subr.bf16.mxu0 %v2051
        %2121 = vmatpush1.bf16.msra.mxu0 %v2050
        %2122 = vmatprep.subr.bf16.mxu0 %v2049
        %2123 = vmatpush1.bf16.msra.mxu0 %v2048
        %2124 = vmatprep.subr.bf16.mxu0 %v2047
        %2125 = vmatpush1.bf16.msra.mxu0 %v2046
        %2126 = vmatprep.subr.bf16.mxu0 %v2045
        %2127 = vmatpush1.bf16.msra.mxu0 %v2044
        %2128 = vmatprep.subr.bf16.mxu0 %v2043
        %2129 = vmatpush1.bf16.msra.mxu0 %v2042
        %2130 = vmatprep.subr.bf16.mxu0 %v2112
        %2131 = vmatpush2.bf16.msra.mxu0 %v2109
        %2132 = vmatprep.subr.bf16.mxu0 %v2071
        %2133 = vmatpush2.bf16.msra.mxu0 %v2070
        %2134 = vmatprep.subr.bf16.mxu0 %v2069
        %2135 = vmatpush2.bf16.msra.mxu0 %v2068
        %2136 = vmatprep.subr.bf16.mxu0 %v2067
        %2137 = vmatpush2.bf16.msra.mxu0 %v2066
        %2138 = vmatprep.subr.bf16.mxu0 %v2065
        %2139 = vmatpush2.bf16.msra.mxu0 %v2064
        %2140 = vmatprep.subr.bf16.mxu0 %v2063
        %2141 = vmatpush2.bf16.msra.mxu0 %v2062
        %2142 = vmatprep.subr.bf16.mxu0 %v2061
        %2143 = vmatpush2.bf16.msra.mxu0 %v2060
        %2144 = vmatprep.subr.bf16.mxu0 %v2059
        %2145 = vmatpush2.bf16.msra.mxu0 %v2058
        %2146 = vmatprep.mubr.bf16.mxu0 %v2105
        %2147 = vmatmul.mubr.bf16.gmra.mxu0 %v1935
        %v2148 = vpop.f32.mrf.mxu0
        %v2149 = vadd.f32 0.0, %v2148
        %v2150 = vpop.f32.mrf.mxu0
        %v2151 = vadd.f32 0.0, %v2150
        %v2152 = vpop.f32.mrf.mxu0
        %v2153 = vadd.f32 0.0, %v2152
        %v2154 = vpop.f32.mrf.mxu0
        %v2155 = vadd.f32 0.0, %v2154
        %2156 = vdwg.mxu0
        %v2188 = vunpack.c.l.b16 %v1861
        %v2189 = vunpack.c.h.b16 %v1861
        %v2190 = vunpack.c.l.b16 %v1862
        %v2191 = vunpack.c.h.b16 %v1862
        %v2192 = vunpack.c.l.b16 %v1863
        %v2193 = vunpack.c.h.b16 %v1863
        %v2194 = vunpack.c.l.b16 %v1864
        %v2195 = vunpack.c.h.b16 %v1864
        %v2196 = vunpack.c.l.b16 %v1865
        %v2197 = vunpack.c.h.b16 %v1865
        %v2198 = vunpack.c.l.b16 %v1866
        %v2199 = vunpack.c.h.b16 %v1866
        %v2200 = vunpack.c.l.b16 %v1867
        %v2201 = vunpack.c.h.b16 %v1867
        %v2202 = vunpack.c.l.b16 %v1868
        %v2203 = vunpack.c.h.b16 %v1868
        %v2204 = vunpack.c.l.b16 %v1869
        %v2205 = vunpack.c.h.b16 %v1869
        %v2206 = vunpack.c.l.b16 %v1870
        %v2207 = vunpack.c.h.b16 %v1870
        %v2208 = vunpack.c.l.b16 %v1871
        %v2209 = vunpack.c.h.b16 %v1871
        %v2210 = vunpack.c.l.b16 %v1872
        %v2211 = vunpack.c.h.b16 %v1872
        %v2212 = vunpack.c.l.b16 %v1873
        %v2213 = vunpack.c.h.b16 %v1873
        %v2214 = vunpack.c.l.b16 %v1874
        %v2215 = vunpack.c.h.b16 %v1874
        %v2216 = vunpack.c.l.b16 %v1875
        %v2217 = vunpack.c.h.b16 %v1875
        %v2218 = vunpack.c.l.b16 %v1876
        %v2219 = vunpack.c.h.b16 %v1876
        %v2220 = vunpack.c.l.b16 %v1877
        %v2221 = vunpack.c.h.b16 %v1877
        %v2222 = vunpack.c.l.b16 %v1878
        %v2223 = vunpack.c.h.b16 %v1878
        %v2224 = vunpack.c.l.b16 %v1879
        %v2225 = vunpack.c.h.b16 %v1879
        %v2226 = vunpack.c.l.b16 %v1880
        %v2227 = vunpack.c.h.b16 %v1880
        %v2228 = vunpack.c.l.b16 %v1881
        %v2229 = vunpack.c.h.b16 %v1881
        %v2230 = vunpack.c.l.b16 %v1882
        %v2231 = vunpack.c.h.b16 %v1882
        %v2232 = vunpack.c.l.b16 %v1883
        %v2233 = vunpack.c.h.b16 %v1883
        %v2234 = vunpack.c.l.b16 %v1884
        %v2235 = vunpack.c.h.b16 %v1884
        %v2236 = vunpack.c.l.b16 %v1885
        %v2237 = vunpack.c.h.b16 %v1885
        %v2238 = vunpack.c.l.b16 %v1886
        %v2239 = vunpack.c.h.b16 %v1886
        %v2240 = vunpack.c.l.b16 %v1887
        %v2241 = vunpack.c.h.b16 %v1887
        %v2242 = vunpack.c.l.b16 %v1888
        %v2243 = vunpack.c.h.b16 %v1888
        %v2244 = vunpack.c.l.b16 %v1889
        %v2245 = vunpack.c.h.b16 %v1889
        %v2246 = vunpack.c.l.b16 %v1890
        %v2247 = vunpack.c.h.b16 %v1890
        %v2248 = vunpack.c.l.b16 %v1891
        %v2249 = vunpack.c.h.b16 %v1891
        %v2250 = vpack.c.b16 %v2190, %v2188
        %v2251 = vpack.c.b16 %v2191, %v2189
        %v2252 = vpack.c.b16 %v2194, %v2192
        %v2253 = vpack.c.b16 %v2195, %v2193
        %v2254 = vpack.c.b16 %v2198, %v2196
        %v2255 = vpack.c.b16 %v2199, %v2197
        %v2256 = vpack.c.b16 %v2202, %v2200
        %v2257 = vpack.c.b16 %v2203, %v2201
        %v2258 = vpack.c.b16 %v2206, %v2204
        %v2259 = vpack.c.b16 %v2207, %v2205
        %v2260 = vpack.c.b16 %v2210, %v2208
        %v2261 = vpack.c.b16 %v2211, %v2209
        %v2262 = vpack.c.b16 %v2214, %v2212
        %v2263 = vpack.c.b16 %v2215, %v2213
        %v2264 = vpack.c.b16 %v2218, %v2216
        %v2265 = vpack.c.b16 %v2219, %v2217
        %v2266 = vpack.c.b16 %v2222, %v2220
        %v2267 = vpack.c.b16 %v2223, %v2221
        %v2268 = vpack.c.b16 %v2226, %v2224
        %v2269 = vpack.c.b16 %v2227, %v2225
        %v2270 = vpack.c.b16 %v2230, %v2228
        %v2271 = vpack.c.b16 %v2231, %v2229
        %v2272 = vpack.c.b16 %v2234, %v2232
        %v2273 = vpack.c.b16 %v2235, %v2233
        %v2274 = vpack.c.b16 %v2238, %v2236
        %v2275 = vpack.c.b16 %v2239, %v2237
        %v2276 = vpack.c.b16 %v2242, %v2240
        %v2277 = vpack.c.b16 %v2243, %v2241
        %v2278 = vpack.c.b16 %v2246, %v2244
        %v2279 = vpack.c.b16 %v2247, %v2245
        %v2280 = vpack.c.b16 %v2248, %v2248
        %v2281 = vpack.c.b16 %v2249, %v2249
        %v2312 = vsel %vm1841, %v1858, 0
        %v2315 = vsel %vm2107, %v2280, 0
        %v2318 = vsel %vm2107, %v2281, 0
        %2320 = vmatprep.subr.bf16.mxu0 %v2265
        %2321 = vmatpush1.bf16.msra.mxu0 %v2264
        %2322 = vmatprep.subr.bf16.mxu0 %v2263
        %2323 = vmatpush1.bf16.msra.mxu0 %v2262
        %2324 = vmatprep.subr.bf16.mxu0 %v2261
        %2325 = vmatpush1.bf16.msra.mxu0 %v2260
        %2326 = vmatprep.subr.bf16.mxu0 %v2259
        %2327 = vmatpush1.bf16.msra.mxu0 %v2258
        %2328 = vmatprep.subr.bf16.mxu0 %v2257
        %2329 = vmatpush1.bf16.msra.mxu0 %v2256
        %2330 = vmatprep.subr.bf16.mxu0 %v2255
        %2331 = vmatpush1.bf16.msra.mxu0 %v2254
        %2332 = vmatprep.subr.bf16.mxu0 %v2253
        %2333 = vmatpush1.bf16.msra.mxu0 %v2252
        %2334 = vmatprep.subr.bf16.mxu0 %v2251
        %2335 = vmatpush1.bf16.msra.mxu0 %v2250
        %2336 = vmatprep.subr.bf16.mxu0 %v2318
        %2337 = vmatpush2.bf16.msra.mxu0 %v2315
        %2338 = vmatprep.subr.bf16.mxu0 %v2279
        %2339 = vmatpush2.bf16.msra.mxu0 %v2278
        %2340 = vmatprep.subr.bf16.mxu0 %v2277
        %2341 = vmatpush2.bf16.msra.mxu0 %v2276
        %2342 = vmatprep.subr.bf16.mxu0 %v2275
        %2343 = vmatpush2.bf16.msra.mxu0 %v2274
        %2344 = vmatprep.subr.bf16.mxu0 %v2273
        %2345 = vmatpush2.bf16.msra.mxu0 %v2272
        %2346 = vmatprep.subr.bf16.mxu0 %v2271
        %2347 = vmatpush2.bf16.msra.mxu0 %v2270
        %2348 = vmatprep.subr.bf16.mxu0 %v2269
        %2349 = vmatpush2.bf16.msra.mxu0 %v2268
        %2350 = vmatprep.subr.bf16.mxu0 %v2267
        %2351 = vmatpush2.bf16.msra.mxu0 %v2266
        %2352 = vmatprep.mubr.bf16.mxu0 %v2312
        %2353 = vmatmul.mubr.bf16.gmra.mxu0 %v1857
        %v2354 = vpop.f32.mrf.mxu0
        %v2355 = vadd.f32 %v2149, %v2354
        %v2356 = vpop.f32.mrf.mxu0
        %v2357 = vadd.f32 %v2151, %v2356
        %v2358 = vpop.f32.mrf.mxu0
        %v2359 = vadd.f32 %v2153, %v2358
        %v2360 = vpop.f32.mrf.mxu0
        %v2361 = vadd.f32 %v2155, %v2360
        %2362 = vdwg.mxu0
        %s2363 = scalar_lea.vmem [#allocation2], 496
        %v2364 = vld [vmem:[%s2363] sm:$0xff]
        %v2365 = vld [vmem:[%s2363 + $0x8] sm:$0xff]
        %v2366 = vld [vmem:[%s2363 + $0x10] sm:$0xff]
        %v2367 = vld [vmem:[%s2363 + $0x18] sm:$0xff]
        %v2368 = vld [vmem:[%s2363 + $0x20] sm:$0xff]
        %v2369 = vld [vmem:[%s2363 + $0x28] sm:$0xff]
        %v2370 = vld [vmem:[%s2363 + $0x30] sm:$0xff]
        %v2371 = vld [vmem:[%s2363 + $0x38] sm:$0xff]
        %v2372 = vld [vmem:[%s2363 + $0x40] sm:$0xff]
        %v2373 = vld [vmem:[%s2363 + $0x48] sm:$0xff]
        %v2374 = vld [vmem:[%s2363 + $0x50] sm:$0xff]
        %v2375 = vld [vmem:[%s2363 + $0x58] sm:$0xff]
        %v2376 = vld [vmem:[%s2363 + $0x60] sm:$0xff]
        %v2377 = vld [vmem:[%s2363 + $0x68] sm:$0xff]
        %v2378 = vld [vmem:[%s2363 + $0x70] sm:$0xff]
        %v2379 = vld [vmem:[%s2363 + $0x78] sm:$0xff]
        %v2380 = vld [vmem:[%s2363 + $0x80] sm:$0xff]
        %v2381 = vld [vmem:[%s2363 + $0x88] sm:$0xff]
        %v2382 = vld [vmem:[%s2363 + $0x90] sm:$0xff]
        %v2383 = vld [vmem:[%s2363 + $0x98] sm:$0xff]
        %v2384 = vld [vmem:[%s2363 + $0xa0] sm:$0xff]
        %v2385 = vld [vmem:[%s2363 + $0xa8] sm:$0xff]
        %v2386 = vld [vmem:[%s2363 + $0xb0] sm:$0xff]
        %v2387 = vld [vmem:[%s2363 + $0xb8] sm:$0xff]
        %v2388 = vld [vmem:[%s2363 + $0xc0] sm:$0xff]
        %v2389 = vld [vmem:[%s2363 + $0xc8] sm:$0xff]
        %v2390 = vld [vmem:[%s2363 + $0xd0] sm:$0xff]
        %v2391 = vld [vmem:[%s2363 + $0xd8] sm:$0xff]
        %v2392 = vld [vmem:[%s2363 + $0xe0] sm:$0xff]
        %v2393 = vld [vmem:[%s2363 + $0xe8] sm:$0xff]
        %v2394 = vld [vmem:[%s2363 + $0xf0] sm:$0xff]
        %v2399 = vrot.slane %v1857, 1
        %v2400 = vrot.slane %v1859, 1
        %v2401 = vsel %vm819, %v2399, %v2400
        %v2402 = vrot.slane %v1858, 1
        %v2403 = vrot.slane %v1860, 1
        %v2404 = vsel %vm819, %v2402, %v2403
        %v2437 = vunpack.c.l.b16 %v2364
        %v2438 = vunpack.c.h.b16 %v2364
        %v2439 = vunpack.c.l.b16 %v2365
        %v2440 = vunpack.c.h.b16 %v2365
        %v2441 = vunpack.c.l.b16 %v2366
        %v2442 = vunpack.c.h.b16 %v2366
        %v2443 = vunpack.c.l.b16 %v2367
        %v2444 = vunpack.c.h.b16 %v2367
        %v2445 = vunpack.c.l.b16 %v2368
        %v2446 = vunpack.c.h.b16 %v2368
        %v2447 = vunpack.c.l.b16 %v2369
        %v2448 = vunpack.c.h.b16 %v2369
        %v2449 = vunpack.c.l.b16 %v2370
        %v2450 = vunpack.c.h.b16 %v2370
        %v2451 = vunpack.c.l.b16 %v2371
        %v2452 = vunpack.c.h.b16 %v2371
        %v2453 = vunpack.c.l.b16 %v2372
        %v2454 = vunpack.c.h.b16 %v2372
        %v2455 = vunpack.c.l.b16 %v2373
        %v2456 = vunpack.c.h.b16 %v2373
        %v2457 = vunpack.c.l.b16 %v2374
        %v2458 = vunpack.c.h.b16 %v2374
        %v2459 = vunpack.c.l.b16 %v2375
        %v2460 = vunpack.c.h.b16 %v2375
        %v2461 = vunpack.c.l.b16 %v2376
        %v2462 = vunpack.c.h.b16 %v2376
        %v2463 = vunpack.c.l.b16 %v2377
        %v2464 = vunpack.c.h.b16 %v2377
        %v2465 = vunpack.c.l.b16 %v2378
        %v2466 = vunpack.c.h.b16 %v2378
        %v2467 = vunpack.c.l.b16 %v2379
        %v2468 = vunpack.c.h.b16 %v2379
        %v2469 = vunpack.c.l.b16 %v2380
        %v2470 = vunpack.c.h.b16 %v2380
        %v2471 = vunpack.c.l.b16 %v2381
        %v2472 = vunpack.c.h.b16 %v2381
        %v2473 = vunpack.c.l.b16 %v2382
        %v2474 = vunpack.c.h.b16 %v2382
        %v2475 = vunpack.c.l.b16 %v2383
        %v2476 = vunpack.c.h.b16 %v2383
        %v2477 = vunpack.c.l.b16 %v2384
        %v2478 = vunpack.c.h.b16 %v2384
        %v2479 = vunpack.c.l.b16 %v2385
        %v2480 = vunpack.c.h.b16 %v2385
        %v2481 = vunpack.c.l.b16 %v2386
        %v2482 = vunpack.c.h.b16 %v2386
        %v2483 = vunpack.c.l.b16 %v2387
        %v2484 = vunpack.c.h.b16 %v2387
        %v2485 = vunpack.c.l.b16 %v2388
        %v2486 = vunpack.c.h.b16 %v2388
        %v2487 = vunpack.c.l.b16 %v2389
        %v2488 = vunpack.c.h.b16 %v2389
        %v2489 = vunpack.c.l.b16 %v2390
        %v2490 = vunpack.c.h.b16 %v2390
        %v2491 = vunpack.c.l.b16 %v2391
        %v2492 = vunpack.c.h.b16 %v2391
        %v2493 = vunpack.c.l.b16 %v2392
        %v2494 = vunpack.c.h.b16 %v2392
        %v2495 = vunpack.c.l.b16 %v2393
        %v2496 = vunpack.c.h.b16 %v2393
        %v2497 = vunpack.c.l.b16 %v2394
        %v2498 = vunpack.c.h.b16 %v2394
        %v2499 = vpack.c.b16 %v2439, %v2437
        %v2500 = vpack.c.b16 %v2440, %v2438
        %v2501 = vpack.c.b16 %v2443, %v2441
        %v2502 = vpack.c.b16 %v2444, %v2442
        %v2503 = vpack.c.b16 %v2447, %v2445
        %v2504 = vpack.c.b16 %v2448, %v2446
        %v2505 = vpack.c.b16 %v2451, %v2449
        %v2506 = vpack.c.b16 %v2452, %v2450
        %v2507 = vpack.c.b16 %v2455, %v2453
        %v2508 = vpack.c.b16 %v2456, %v2454
        %v2509 = vpack.c.b16 %v2459, %v2457
        %v2510 = vpack.c.b16 %v2460, %v2458
        %v2511 = vpack.c.b16 %v2463, %v2461
        %v2512 = vpack.c.b16 %v2464, %v2462
        %v2513 = vpack.c.b16 %v2467, %v2465
        %v2514 = vpack.c.b16 %v2468, %v2466
        %v2515 = vpack.c.b16 %v2471, %v2469
        %v2516 = vpack.c.b16 %v2472, %v2470
        %v2517 = vpack.c.b16 %v2475, %v2473
        %v2518 = vpack.c.b16 %v2476, %v2474
        %v2519 = vpack.c.b16 %v2479, %v2477
        %v2520 = vpack.c.b16 %v2480, %v2478
        %v2521 = vpack.c.b16 %v2483, %v2481
        %v2522 = vpack.c.b16 %v2484, %v2482
        %v2523 = vpack.c.b16 %v2487, %v2485
        %v2524 = vpack.c.b16 %v2488, %v2486
        %v2525 = vpack.c.b16 %v2491, %v2489
        %v2526 = vpack.c.b16 %v2492, %v2490
        %v2527 = vpack.c.b16 %v2495, %v2493
        %v2528 = vpack.c.b16 %v2496, %v2494
        %v2529 = vpack.c.b16 %v2497, %v2497
        %v2530 = vpack.c.b16 %v2498, %v2498
        %v2562 = vsel %vm1841, %v2404, 0
        %v2565 = vsel %vm2107, %v2529, 0
        %v2568 = vsel %vm2107, %v2530, 0
        %2570 = vmatprep.subr.bf16.mxu0 %v2514
        %2571 = vmatpush1.bf16.msra.mxu0 %v2513
        %2572 = vmatprep.subr.bf16.mxu0 %v2512
        %2573 = vmatpush1.bf16.msra.mxu0 %v2511
        %2574 = vmatprep.subr.bf16.mxu0 %v2510
        %2575 = vmatpush1.bf16.msra.mxu0 %v2509
        %2576 = vmatprep.subr.bf16.mxu0 %v2508
        %2577 = vmatpush1.bf16.msra.mxu0 %v2507
        %2578 = vmatprep.subr.bf16.mxu0 %v2506
        %2579 = vmatpush1.bf16.msra.mxu0 %v2505
        %2580 = vmatprep.subr.bf16.mxu0 %v2504
        %2581 = vmatpush1.bf16.msra.mxu0 %v2503
        %2582 = vmatprep.subr.bf16.mxu0 %v2502
        %2583 = vmatpush1.bf16.msra.mxu0 %v2501
        %2584 = vmatprep.subr.bf16.mxu0 %v2500
        %2585 = vmatpush1.bf16.msra.mxu0 %v2499
        %2586 = vmatprep.subr.bf16.mxu0 %v2568
        %2587 = vmatpush2.bf16.msra.mxu0 %v2565
        %2588 = vmatprep.subr.bf16.mxu0 %v2528
        %2589 = vmatpush2.bf16.msra.mxu0 %v2527
        %2590 = vmatprep.subr.bf16.mxu0 %v2526
        %2591 = vmatpush2.bf16.msra.mxu0 %v2525
        %2592 = vmatprep.subr.bf16.mxu0 %v2524
        %2593 = vmatpush2.bf16.msra.mxu0 %v2523
        %2594 = vmatprep.subr.bf16.mxu0 %v2522
        %2595 = vmatpush2.bf16.msra.mxu0 %v2521
        %2596 = vmatprep.subr.bf16.mxu0 %v2520
        %2597 = vmatpush2.bf16.msra.mxu0 %v2519
        %2598 = vmatprep.subr.bf16.mxu0 %v2518
        %2599 = vmatpush2.bf16.msra.mxu0 %v2517
        %2600 = vmatprep.subr.bf16.mxu0 %v2516
        %2601 = vmatpush2.bf16.msra.mxu0 %v2515
        %2602 = vmatprep.mubr.bf16.mxu0 %v2562
        %2603 = vmatmul.mubr.bf16.gmra.mxu0 %v2401
        %v2604 = vpop.f32.mrf.mxu0
        %v2605 = vadd.f32 0.0, %v2604
        %v2606 = vpop.f32.mrf.mxu0
        %v2607 = vadd.f32 0.0, %v2606
        %v2608 = vpop.f32.mrf.mxu0
        %v2609 = vadd.f32 0.0, %v2608
        %v2610 = vpop.f32.mrf.mxu0
        %v2611 = vadd.f32 0.0, %v2610
        %2612 = vdwg.mxu0
        %v2613 = vadd.f32 %v2355, %v2605
        %v2614 = vadd.f32 %v2357, %v2607
        %v2615 = vadd.f32 %v2359, %v2609
        %v2616 = vadd.f32 %v2361, %v2611
        %v2617 = vld [vmem:[%s5] sm:$0x3]
        %v2619 = vlaneseq
        %v2620 = vshrl.u32 %v2619, 7
        %v2621 = vsub.s32 0, %v2620
        %v2622 = vrot.slane %v2617, %v2621
        %v2623 = vlaneseq
        %v2624 = vshrl.u32 %v2623, 7
        %v2625 = vsub.s32 1, %v2624
        %v2626 = vrot.slane %v2617, %v2625
        %v2629 = vmul.f32 %v2613, %v2622
        %v2630 = vmul.f32 %v2614, %v2626
        %v2631 = vmul.f32 %v2615, %v2622
        %v2632 = vmul.f32 %v2616, %v2626
        %v2633 = vld [vmem:[%s6] sm:$0x3]
        %v2635 = vlaneseq
        %v2636 = vshrl.u32 %v2635, 7
        %v2637 = vsub.s32 0, %v2636
        %v2638 = vrot.slane %v2633, %v2637
        %v2639 = vlaneseq
        %v2640 = vshrl.u32 %v2639, 7
        %v2641 = vsub.s32 1, %v2640
        %v2642 = vrot.slane %v2633, %v2641
        %v2645 = vadd.f32 %v2629, %v2638
        %v2646 = vadd.f32 %v2630, %v2642
        %v2647 = vadd.f32 %v2631, %v2638
        %v2648 = vadd.f32 %v2632, %v2642
        %v2649 = vmax.f32 %v2645, 0.0
        %v2650 = vmax.f32 %v2646, 0.0
        %v2651 = vmax.f32 %v2647, 0.0
        %v2652 = vmax.f32 %v2648, 0.0
        %v2657 = vrot.slane %v2649, 1
        %v2658 = vrot.slane %v2651, 1
        %v2659 = vsel %vm1704, %v2657, %v2658
        %v2660 = vrot.slane %v2650, 1
        %v2661 = vrot.slane %v2652, 1
        %v2662 = vsel %vm1704, %v2660, %v2661
        %v2667 = vmax.f32 %v2649, %v2659
        %v2668 = vmax.f32 %v2650, %v2662
        %v2669 = vmax.f32 %v2651, %v2658
        %v2670 = vmax.f32 %v2652, %v2661
        %v2671 = vpack.c.bf16 %v2669, %v2667
        %v2672 = vpack.c.bf16 %v2670, %v2668
        %vm2673 = vcmask 121856
        %v2674 = vsel %vm2673, %v1754, 0
        %v2677 = vand.u32 %v2671, %v1765
        %v2680 = vand.u32 %v2672, %v1765
        %2682 = vmatprep.subr.bf16.mxu0 0
        %2683 = vmatpush1.bf16.msra.mxu0 0
        %2684 = vmatprep.subr.bf16.mxu0 0
        %2685 = vmatpush1.bf16.msra.mxu0 0
        %2686 = vmatprep.subr.bf16.mxu0 0
        %2687 = vmatpush1.bf16.msra.mxu0 0
        %2688 = vmatprep.subr.bf16.mxu0 0
        %2689 = vmatpush1.bf16.msra.mxu0 0
        %2690 = vmatprep.subr.bf16.mxu0 0
        %2691 = vmatpush1.bf16.msra.mxu0 0
        %2692 = vmatprep.subr.bf16.mxu0 0
        %2693 = vmatpush1.bf16.msra.mxu0 0
        %2694 = vmatprep.subr.bf16.mxu0 0
        %2695 = vmatpush1.bf16.msra.mxu0 0
        %2696 = vmatprep.subr.bf16.mxu0 %v2680
        %2697 = vmatpush1.bf16.msra.mxu0 %v2677
        %2698 = vmatprep.subr.bf16.mxu0 0
        %2699 = vmatpush2.bf16.msra.mxu0 0
        %2700 = vmatprep.subr.bf16.mxu0 0
        %2701 = vmatpush2.bf16.msra.mxu0 0
        %2702 = vmatprep.subr.bf16.mxu0 0
        %2703 = vmatpush2.bf16.msra.mxu0 0
        %2704 = vmatprep.subr.bf16.mxu0 0
        %2705 = vmatpush2.bf16.msra.mxu0 0
        %2706 = vmatprep.subr.bf16.mxu0 0
        %2707 = vmatpush2.bf16.msra.mxu0 0
        %2708 = vmatprep.subr.bf16.mxu0 0
        %2709 = vmatpush2.bf16.msra.mxu0 0
        %2710 = vmatprep.subr.bf16.mxu0 0
        %2711 = vmatpush2.bf16.msra.mxu0 0
        %2712 = vmatprep.subr.bf16.mxu0 0
        %2713 = vmatpush2.bf16.msra.mxu0 0
        %2714 = vmatprep.mubr.bf16.mxu0 0
        %2715 = vmatmul.mubr.bf16.gmra.mxu0 %v2674
        %v2716 = vpop.f32.mrf.mxu0
        %v2717 = vadd.f32 0.0, %v2716
        %v2718 = vpop.f32.mrf.mxu0
        %v2719 = vadd.f32 0.0, %v2718
        %v2720 = vpop.f32.mrf.mxu0
        %v2721 = vadd.f32 0.0, %v2720
        %v2722 = vpop.f32.mrf.mxu0
        %v2723 = vadd.f32 0.0, %v2722
        %2724 = vdwg.mxu0
        %2729 = vrot.lane.b32.xlu0 %v2717, 112
        %v2730 = vpop.permute.xlu0 %2729
        %2731 = vrot.lane.b32.xlu0 %v2719, 112
        %v2732 = vpop.permute.xlu0 %2731
        %2733 = vrot.lane.b32.xlu0 %v2721, 112
        %v2734 = vpop.permute.xlu0 %2733
        %2735 = vrot.lane.b32.xlu0 %v2723, 112
        %v2736 = vpop.permute.xlu0 %2735
        %vm2737 = vcmask 916480
        %v2738 = vsel %vm2737, %v2730, %v2732
        %v2739 = vsel %vm2737, %v2734, %v2736
        %v2744 = vmax.f32 %v2717, %v2738
        %v2745 = vmax.f32 %v2719, %v2732
        %v2746 = vmax.f32 %v2721, %v2739
        %v2747 = vmax.f32 %v2723, %v2736
        %v2748 = vpack.c.bf16 %v2746, %v2744
        %v2749 = vpack.c.bf16 %v2747, %v2745
        %v2750 = vld [vmem:[#allocation5] sm:$0xff]
        %v2751 = vld [vmem:[#allocation5 + $0x8] sm:$0xff]
        %v2752 = vld [vmem:[#allocation5 + $0x10] sm:$0xff]
        %v2753 = vld [vmem:[#allocation5 + $0x18] sm:$0xff]
        %v2754 = vld [vmem:[#allocation5 + $0x20] sm:$0xff]
        %v2755 = vld [vmem:[#allocation5 + $0x28] sm:$0xff]
        %v2756 = vld [vmem:[#allocation5 + $0x30] sm:$0xff]
        %v2757 = vld [vmem:[#allocation5 + $0x38] sm:$0xff]
        %v2758 = vld [vmem:[#allocation5 + $0x40] sm:$0xff]
        %v2759 = vld [vmem:[#allocation5 + $0x48] sm:$0xff]
        %v2760 = vld [vmem:[#allocation5 + $0x50] sm:$0xff]
        %v2761 = vld [vmem:[#allocation5 + $0x58] sm:$0xff]
        %v2762 = vld [vmem:[#allocation5 + $0x60] sm:$0xff]
        %v2763 = vld [vmem:[#allocation5 + $0x68] sm:$0xff]
        %v2764 = vld [vmem:[#allocation5 + $0x70] sm:$0xff]
        %v2765 = vld [vmem:[#allocation5 + $0x78] sm:$0xff]
        %v2766 = vld [vmem:[#allocation5 + $0x80] sm:$0xff]
        %v2767 = vld [vmem:[#allocation5 + $0x88] sm:$0xff]
        %v2768 = vld [vmem:[#allocation5 + $0x90] sm:$0xff]
        %v2769 = vld [vmem:[#allocation5 + $0x98] sm:$0xff]
        %v2770 = vld [vmem:[#allocation5 + $0xa0] sm:$0xff]
        %v2771 = vld [vmem:[#allocation5 + $0xa8] sm:$0xff]
        %v2772 = vld [vmem:[#allocation5 + $0xb0] sm:$0xff]
        %v2773 = vld [vmem:[#allocation5 + $0xb8] sm:$0xff]
        %v2774 = vld [vmem:[#allocation5 + $0xc0] sm:$0xff]
        %v2775 = vld [vmem:[#allocation5 + $0xc8] sm:$0xff]
        %v2776 = vld [vmem:[#allocation5 + $0xd0] sm:$0xff]
        %v2777 = vld [vmem:[#allocation5 + $0xd8] sm:$0xff]
        %v2778 = vld [vmem:[#allocation5 + $0xe0] sm:$0xff]
        %v2779 = vld [vmem:[#allocation5 + $0xe8] sm:$0xff]
        %s2780 = scalar_lea.vmem [#allocation5], 240
        %v2781 = vld [vmem:[%s2780] sm:$0xff]
        %v2782 = vld [vmem:[%s2780 + $0x8] sm:$0xff]
        %v2783 = vld [vmem:[%s2780 + $0x10] sm:$0xff]
        %v2784 = vld [vmem:[%s2780 + $0x18] sm:$0xff]
        %v2785 = vld [vmem:[%s2780 + $0x20] sm:$0xff]
        %v2786 = vld [vmem:[%s2780 + $0x28] sm:$0xff]
        %v2787 = vld [vmem:[%s2780 + $0x30] sm:$0xff]
        %v2788 = vld [vmem:[%s2780 + $0x38] sm:$0xff]
        %v2789 = vld [vmem:[%s2780 + $0x40] sm:$0xff]
        %v2790 = vld [vmem:[%s2780 + $0x48] sm:$0xff]
        %v2791 = vld [vmem:[%s2780 + $0x50] sm:$0xff]
        %v2792 = vld [vmem:[%s2780 + $0x58] sm:$0xff]
        %v2793 = vld [vmem:[%s2780 + $0x60] sm:$0xff]
        %v2794 = vld [vmem:[%s2780 + $0x68] sm:$0xff]
        %v2795 = vld [vmem:[%s2780 + $0x70] sm:$0xff]
        %v2796 = vld [vmem:[%s2780 + $0x78] sm:$0xff]
        %v2797 = vld [vmem:[%s2780 + $0x80] sm:$0xff]
        %v2798 = vld [vmem:[%s2780 + $0x88] sm:$0xff]
        %v2799 = vld [vmem:[%s2780 + $0x90] sm:$0xff]
        %v2800 = vld [vmem:[%s2780 + $0x98] sm:$0xff]
        %v2801 = vld [vmem:[%s2780 + $0xa0] sm:$0xff]
        %v2802 = vld [vmem:[%s2780 + $0xa8] sm:$0xff]
        %v2803 = vld [vmem:[%s2780 + $0xb0] sm:$0xff]
        %v2804 = vld [vmem:[%s2780 + $0xb8] sm:$0xff]
        %v2805 = vld [vmem:[%s2780 + $0xc0] sm:$0xff]
        %v2806 = vld [vmem:[%s2780 + $0xc8] sm:$0xff]
        %v2807 = vld [vmem:[%s2780 + $0xd0] sm:$0xff]
        %v2808 = vld [vmem:[%s2780 + $0xd8] sm:$0xff]
        %v2809 = vld [vmem:[%s2780 + $0xe0] sm:$0xff]
        %v2810 = vld [vmem:[%s2780 + $0xe8] sm:$0xff]
        %v2812 = vshrl.u32 %v2748, 16
        %v2814 = vshll.u32 %v2748, 16
        %v2816 = vrot.slane %v2814, 1
        %v2817 = vor.u32 %v2812, %v2816
        %v2819 = vshrl.u32 %v2749, 16
        %v2821 = vshll.u32 %v2749, 16
        %v2823 = vrot.slane %v2821, 1
        %v2824 = vor.u32 %v2819, %v2823
        %v2856 = vunpack.c.l.b16 %v2781
        %v2857 = vunpack.c.h.b16 %v2781
        %v2858 = vunpack.c.l.b16 %v2782
        %v2859 = vunpack.c.h.b16 %v2782
        %v2860 = vunpack.c.l.b16 %v2783
        %v2861 = vunpack.c.h.b16 %v2783
        %v2862 = vunpack.c.l.b16 %v2784
        %v2863 = vunpack.c.h.b16 %v2784
        %v2864 = vunpack.c.l.b16 %v2785
        %v2865 = vunpack.c.h.b16 %v2785
        %v2866 = vunpack.c.l.b16 %v2786
        %v2867 = vunpack.c.h.b16 %v2786
        %v2868 = vunpack.c.l.b16 %v2787
        %v2869 = vunpack.c.h.b16 %v2787
        %v2870 = vunpack.c.l.b16 %v2788
        %v2871 = vunpack.c.h.b16 %v2788
        %v2872 = vunpack.c.l.b16 %v2789
        %v2873 = vunpack.c.h.b16 %v2789
        %v2874 = vunpack.c.l.b16 %v2790
        %v2875 = vunpack.c.h.b16 %v2790
        %v2876 = vunpack.c.l.b16 %v2791
        %v2877 = vunpack.c.h.b16 %v2791
        %v2878 = vunpack.c.l.b16 %v2792
        %v2879 = vunpack.c.h.b16 %v2792
        %v2880 = vunpack.c.l.b16 %v2793
        %v2881 = vunpack.c.h.b16 %v2793
        %v2882 = vunpack.c.l.b16 %v2794
        %v2883 = vunpack.c.h.b16 %v2794
        %v2884 = vunpack.c.l.b16 %v2795
        %v2885 = vunpack.c.h.b16 %v2795
        %v2886 = vunpack.c.l.b16 %v2796
        %v2887 = vunpack.c.h.b16 %v2796
        %v2888 = vunpack.c.l.b16 %v2797
        %v2889 = vunpack.c.h.b16 %v2797
        %v2890 = vunpack.c.l.b16 %v2798
        %v2891 = vunpack.c.h.b16 %v2798
        %v2892 = vunpack.c.l.b16 %v2799
        %v2893 = vunpack.c.h.b16 %v2799
        %v2894 = vunpack.c.l.b16 %v2800
        %v2895 = vunpack.c.h.b16 %v2800
        %v2896 = vunpack.c.l.b16 %v2801
        %v2897 = vunpack.c.h.b16 %v2801
        %v2898 = vunpack.c.l.b16 %v2802
        %v2899 = vunpack.c.h.b16 %v2802
        %v2900 = vunpack.c.l.b16 %v2803
        %v2901 = vunpack.c.h.b16 %v2803
        %v2902 = vunpack.c.l.b16 %v2804
        %v2903 = vunpack.c.h.b16 %v2804
        %v2904 = vunpack.c.l.b16 %v2805
        %v2905 = vunpack.c.h.b16 %v2805
        %v2906 = vunpack.c.l.b16 %v2806
        %v2907 = vunpack.c.h.b16 %v2806
        %v2908 = vunpack.c.l.b16 %v2807
        %v2909 = vunpack.c.h.b16 %v2807
        %v2910 = vunpack.c.l.b16 %v2808
        %v2911 = vunpack.c.h.b16 %v2808
        %v2912 = vunpack.c.l.b16 %v2809
        %v2913 = vunpack.c.h.b16 %v2809
        %v2914 = vunpack.c.l.b16 %v2810
        %v2915 = vunpack.c.h.b16 %v2810
        %v2916 = vpack.c.b16 %v2858, %v2856
        %v2917 = vpack.c.b16 %v2859, %v2857
        %v2918 = vpack.c.b16 %v2862, %v2860
        %v2919 = vpack.c.b16 %v2863, %v2861
        %v2920 = vpack.c.b16 %v2866, %v2864
        %v2921 = vpack.c.b16 %v2867, %v2865
        %v2922 = vpack.c.b16 %v2870, %v2868
        %v2923 = vpack.c.b16 %v2871, %v2869
        %v2924 = vpack.c.b16 %v2874, %v2872
        %v2925 = vpack.c.b16 %v2875, %v2873
        %v2926 = vpack.c.b16 %v2878, %v2876
        %v2927 = vpack.c.b16 %v2879, %v2877
        %v2928 = vpack.c.b16 %v2882, %v2880
        %v2929 = vpack.c.b16 %v2883, %v2881
        %v2930 = vpack.c.b16 %v2886, %v2884
        %v2931 = vpack.c.b16 %v2887, %v2885
        %v2932 = vpack.c.b16 %v2890, %v2888
        %v2933 = vpack.c.b16 %v2891, %v2889
        %v2934 = vpack.c.b16 %v2894, %v2892
        %v2935 = vpack.c.b16 %v2895, %v2893
        %v2936 = vpack.c.b16 %v2898, %v2896
        %v2937 = vpack.c.b16 %v2899, %v2897
        %v2938 = vpack.c.b16 %v2902, %v2900
        %v2939 = vpack.c.b16 %v2903, %v2901
        %v2940 = vpack.c.b16 %v2906, %v2904
        %v2941 = vpack.c.b16 %v2907, %v2905
        %v2942 = vpack.c.b16 %v2910, %v2908
        %v2943 = vpack.c.b16 %v2911, %v2909
        %v2944 = vpack.c.b16 %v2914, %v2912
        %v2945 = vpack.c.b16 %v2915, %v2913
        %v2977 = vsel %vm2737, %v2824, 0
        %2979 = vmatprep.subr.bf16.mxu0 %v2931
        %2980 = vmatpush1.bf16.msra.mxu0 %v2930
        %2981 = vmatprep.subr.bf16.mxu0 %v2929
        %2982 = vmatpush1.bf16.msra.mxu0 %v2928
        %2983 = vmatprep.subr.bf16.mxu0 %v2927
        %2984 = vmatpush1.bf16.msra.mxu0 %v2926
        %2985 = vmatprep.subr.bf16.mxu0 %v2925
        %2986 = vmatpush1.bf16.msra.mxu0 %v2924
        %2987 = vmatprep.subr.bf16.mxu0 %v2923
        %2988 = vmatpush1.bf16.msra.mxu0 %v2922
        %2989 = vmatprep.subr.bf16.mxu0 %v2921
        %2990 = vmatpush1.bf16.msra.mxu0 %v2920
        %2991 = vmatprep.subr.bf16.mxu0 %v2919
        %2992 = vmatpush1.bf16.msra.mxu0 %v2918
        %2993 = vmatprep.subr.bf16.mxu0 %v2917
        %2994 = vmatpush1.bf16.msra.mxu0 %v2916
        %2995 = vmatprep.subr.bf16.mxu0 0
        %2996 = vmatpush2.bf16.msra.mxu0 0
        %2997 = vmatprep.subr.bf16.mxu0 %v2945
        %2998 = vmatpush2.bf16.msra.mxu0 %v2944
        %2999 = vmatprep.subr.bf16.mxu0 %v2943
        %3000 = vmatpush2.bf16.msra.mxu0 %v2942
        %3001 = vmatprep.subr.bf16.mxu0 %v2941
        %3002 = vmatpush2.bf16.msra.mxu0 %v2940
        %3003 = vmatprep.subr.bf16.mxu0 %v2939
        %3004 = vmatpush2.bf16.msra.mxu0 %v2938
        %3005 = vmatprep.subr.bf16.mxu0 %v2937
        %3006 = vmatpush2.bf16.msra.mxu0 %v2936
        %3007 = vmatprep.subr.bf16.mxu0 %v2935
        %3008 = vmatpush2.bf16.msra.mxu0 %v2934
        %3009 = vmatprep.subr.bf16.mxu0 %v2933
        %3010 = vmatpush2.bf16.msra.mxu0 %v2932
        %3011 = vmatprep.mubr.bf16.mxu0 %v2977
        %3012 = vmatmul.mubr.bf16.gmra.mxu0 %v2817
        %v3013 = vpop.f32.mrf.mxu0
        %v3014 = vadd.f32 0.0, %v3013
        %v3015 = vpop.f32.mrf.mxu0
        %v3016 = vadd.f32 0.0, %v3015
        %v3017 = vpop.f32.mrf.mxu0
        %v3018 = vpop.f32.mrf.mxu0
        %3019 = vdwg.mxu0
        %v3050 = vunpack.c.l.b16 %v2750
        %v3051 = vunpack.c.h.b16 %v2750
        %v3052 = vunpack.c.l.b16 %v2751
        %v3053 = vunpack.c.h.b16 %v2751
        %v3054 = vunpack.c.l.b16 %v2752
        %v3055 = vunpack.c.h.b16 %v2752
        %v3056 = vunpack.c.l.b16 %v2753
        %v3057 = vunpack.c.h.b16 %v2753
        %v3058 = vunpack.c.l.b16 %v2754
        %v3059 = vunpack.c.h.b16 %v2754
        %v3060 = vunpack.c.l.b16 %v2755
        %v3061 = vunpack.c.h.b16 %v2755
        %v3062 = vunpack.c.l.b16 %v2756
        %v3063 = vunpack.c.h.b16 %v2756
        %v3064 = vunpack.c.l.b16 %v2757
        %v3065 = vunpack.c.h.b16 %v2757
        %v3066 = vunpack.c.l.b16 %v2758
        %v3067 = vunpack.c.h.b16 %v2758
        %v3068 = vunpack.c.l.b16 %v2759
        %v3069 = vunpack.c.h.b16 %v2759
        %v3070 = vunpack.c.l.b16 %v2760
        %v3071 = vunpack.c.h.b16 %v2760
        %v3072 = vunpack.c.l.b16 %v2761
        %v3073 = vunpack.c.h.b16 %v2761
        %v3074 = vunpack.c.l.b16 %v2762
        %v3075 = vunpack.c.h.b16 %v2762
        %v3076 = vunpack.c.l.b16 %v2763
        %v3077 = vunpack.c.h.b16 %v2763
        %v3078 = vunpack.c.l.b16 %v2764
        %v3079 = vunpack.c.h.b16 %v2764
        %v3080 = vunpack.c.l.b16 %v2765
        %v3081 = vunpack.c.h.b16 %v2765
        %v3082 = vunpack.c.l.b16 %v2766
        %v3083 = vunpack.c.h.b16 %v2766
        %v3084 = vunpack.c.l.b16 %v2767
        %v3085 = vunpack.c.h.b16 %v2767
        %v3086 = vunpack.c.l.b16 %v2768
        %v3087 = vunpack.c.h.b16 %v2768
        %v3088 = vunpack.c.l.b16 %v2769
        %v3089 = vunpack.c.h.b16 %v2769
        %v3090 = vunpack.c.l.b16 %v2770
        %v3091 = vunpack.c.h.b16 %v2770
        %v3092 = vunpack.c.l.b16 %v2771
        %v3093 = vunpack.c.h.b16 %v2771
        %v3094 = vunpack.c.l.b16 %v2772
        %v3095 = vunpack.c.h.b16 %v2772
        %v3096 = vunpack.c.l.b16 %v2773
        %v3097 = vunpack.c.h.b16 %v2773
        %v3098 = vunpack.c.l.b16 %v2774
        %v3099 = vunpack.c.h.b16 %v2774
        %v3100 = vunpack.c.l.b16 %v2775
        %v3101 = vunpack.c.h.b16 %v2775
        %v3102 = vunpack.c.l.b16 %v2776
        %v3103 = vunpack.c.h.b16 %v2776
        %v3104 = vunpack.c.l.b16 %v2777
        %v3105 = vunpack.c.h.b16 %v2777
        %v3106 = vunpack.c.l.b16 %v2778
        %v3107 = vunpack.c.h.b16 %v2778
        %v3108 = vunpack.c.l.b16 %v2779
        %v3109 = vunpack.c.h.b16 %v2779
        %v3110 = vpack.c.b16 %v3052, %v3050
        %v3111 = vpack.c.b16 %v3053, %v3051
        %v3112 = vpack.c.b16 %v3056, %v3054
        %v3113 = vpack.c.b16 %v3057, %v3055
        %v3114 = vpack.c.b16 %v3060, %v3058
        %v3115 = vpack.c.b16 %v3061, %v3059
        %v3116 = vpack.c.b16 %v3064, %v3062
        %v3117 = vpack.c.b16 %v3065, %v3063
        %v3118 = vpack.c.b16 %v3068, %v3066
        %v3119 = vpack.c.b16 %v3069, %v3067
        %v3120 = vpack.c.b16 %v3072, %v3070
        %v3121 = vpack.c.b16 %v3073, %v3071
        %v3122 = vpack.c.b16 %v3076, %v3074
        %v3123 = vpack.c.b16 %v3077, %v3075
        %v3124 = vpack.c.b16 %v3080, %v3078
        %v3125 = vpack.c.b16 %v3081, %v3079
        %v3126 = vpack.c.b16 %v3084, %v3082
        %v3127 = vpack.c.b16 %v3085, %v3083
        %v3128 = vpack.c.b16 %v3088, %v3086
        %v3129 = vpack.c.b16 %v3089, %v3087
        %v3130 = vpack.c.b16 %v3092, %v3090
        %v3131 = vpack.c.b16 %v3093, %v3091
        %v3132 = vpack.c.b16 %v3096, %v3094
        %v3133 = vpack.c.b16 %v3097, %v3095
        %v3134 = vpack.c.b16 %v3100, %v3098
        %v3135 = vpack.c.b16 %v3101, %v3099
        %v3136 = vpack.c.b16 %v3104, %v3102
        %v3137 = vpack.c.b16 %v3105, %v3103
        %v3138 = vpack.c.b16 %v3108, %v3106
        %v3139 = vpack.c.b16 %v3109, %v3107
        %v3170 = vsel %vm2737, %v2749, 0
        %3172 = vmatprep.subr.bf16.mxu0 %v3125
        %3173 = vmatpush1.bf16.msra.mxu0 %v3124
        %3174 = vmatprep.subr.bf16.mxu0 %v3123
        %3175 = vmatpush1.bf16.msra.mxu0 %v3122
        %3176 = vmatprep.subr.bf16.mxu0 %v3121
        %3177 = vmatpush1.bf16.msra.mxu0 %v3120
        %3178 = vmatprep.subr.bf16.mxu0 %v3119
        %3179 = vmatpush1.bf16.msra.mxu0 %v3118
        %3180 = vmatprep.subr.bf16.mxu0 %v3117
        %3181 = vmatpush1.bf16.msra.mxu0 %v3116
        %3182 = vmatprep.subr.bf16.mxu0 %v3115
        %3183 = vmatpush1.bf16.msra.mxu0 %v3114
        %3184 = vmatprep.subr.bf16.mxu0 %v3113
        %3185 = vmatpush1.bf16.msra.mxu0 %v3112
        %3186 = vmatprep.subr.bf16.mxu0 %v3111
        %3187 = vmatpush1.bf16.msra.mxu0 %v3110
        %3188 = vmatprep.subr.bf16.mxu0 0
        %3189 = vmatpush2.bf16.msra.mxu0 0
        %3190 = vmatprep.subr.bf16.mxu0 %v3139
        %3191 = vmatpush2.bf16.msra.mxu0 %v3138
        %3192 = vmatprep.subr.bf16.mxu0 %v3137
        %3193 = vmatpush2.bf16.msra.mxu0 %v3136
        %3194 = vmatprep.subr.bf16.mxu0 %v3135
        %3195 = vmatpush2.bf16.msra.mxu0 %v3134
        %3196 = vmatprep.subr.bf16.mxu0 %v3133
        %3197 = vmatpush2.bf16.msra.mxu0 %v3132
        %3198 = vmatprep.subr.bf16.mxu0 %v3131
        %3199 = vmatpush2.bf16.msra.mxu0 %v3130
        %3200 = vmatprep.subr.bf16.mxu0 %v3129
        %3201 = vmatpush2.bf16.msra.mxu0 %v3128
        %3202 = vmatprep.subr.bf16.mxu0 %v3127
        %3203 = vmatpush2.bf16.msra.mxu0 %v3126
        %3204 = vmatprep.mubr.bf16.mxu0 %v3170
        %3205 = vmatmul.mubr.bf16.gmra.mxu0 %v2748
        %v3206 = vpop.f32.mrf.mxu0
        %v3207 = vadd.f32 %v3014, %v3206
        %v3208 = vpop.f32.mrf.mxu0
        %v3209 = vadd.f32 %v3016, %v3208
        %v3210 = vpop.f32.mrf.mxu0
        %v3211 = vpop.f32.mrf.mxu0
        %3212 = vdwg.mxu0
        %s3213 = scalar_lea.vmem [#allocation5], 480
        %v3214 = vld [vmem:[%s3213] sm:$0xff]
        %v3215 = vld [vmem:[%s3213 + $0x8] sm:$0xff]
        %v3216 = vld [vmem:[%s3213 + $0x10] sm:$0xff]
        %v3217 = vld [vmem:[%s3213 + $0x18] sm:$0xff]
        %v3218 = vld [vmem:[%s3213 + $0x20] sm:$0xff]
        %v3219 = vld [vmem:[%s3213 + $0x28] sm:$0xff]
        %v3220 = vld [vmem:[%s3213 + $0x30] sm:$0xff]
        %v3221 = vld [vmem:[%s3213 + $0x38] sm:$0xff]
        %v3222 = vld [vmem:[%s3213 + $0x40] sm:$0xff]
        %v3223 = vld [vmem:[%s3213 + $0x48] sm:$0xff]
        %v3224 = vld [vmem:[%s3213 + $0x50] sm:$0xff]
        %v3225 = vld [vmem:[%s3213 + $0x58] sm:$0xff]
        %v3226 = vld [vmem:[%s3213 + $0x60] sm:$0xff]
        %v3227 = vld [vmem:[%s3213 + $0x68] sm:$0xff]
        %v3228 = vld [vmem:[%s3213 + $0x70] sm:$0xff]
        %v3229 = vld [vmem:[%s3213 + $0x78] sm:$0xff]
        %v3230 = vld [vmem:[%s3213 + $0x80] sm:$0xff]
        %v3231 = vld [vmem:[%s3213 + $0x88] sm:$0xff]
        %v3232 = vld [vmem:[%s3213 + $0x90] sm:$0xff]
        %v3233 = vld [vmem:[%s3213 + $0x98] sm:$0xff]
        %v3234 = vld [vmem:[%s3213 + $0xa0] sm:$0xff]
        %v3235 = vld [vmem:[%s3213 + $0xa8] sm:$0xff]
        %v3236 = vld [vmem:[%s3213 + $0xb0] sm:$0xff]
        %v3237 = vld [vmem:[%s3213 + $0xb8] sm:$0xff]
        %v3238 = vld [vmem:[%s3213 + $0xc0] sm:$0xff]
        %v3239 = vld [vmem:[%s3213 + $0xc8] sm:$0xff]
        %v3240 = vld [vmem:[%s3213 + $0xd0] sm:$0xff]
        %v3241 = vld [vmem:[%s3213 + $0xd8] sm:$0xff]
        %v3242 = vld [vmem:[%s3213 + $0xe0] sm:$0xff]
        %v3243 = vld [vmem:[%s3213 + $0xe8] sm:$0xff]
        %v3246 = vrot.slane %v2748, 1
        %v3247 = vrot.slane %v2749, 1
        %v3279 = vunpack.c.l.b16 %v3214
        %v3280 = vunpack.c.h.b16 %v3214
        %v3281 = vunpack.c.l.b16 %v3215
        %v3282 = vunpack.c.h.b16 %v3215
        %v3283 = vunpack.c.l.b16 %v3216
        %v3284 = vunpack.c.h.b16 %v3216
        %v3285 = vunpack.c.l.b16 %v3217
        %v3286 = vunpack.c.h.b16 %v3217
        %v3287 = vunpack.c.l.b16 %v3218
        %v3288 = vunpack.c.h.b16 %v3218
        %v3289 = vunpack.c.l.b16 %v3219
        %v3290 = vunpack.c.h.b16 %v3219
        %v3291 = vunpack.c.l.b16 %v3220
        %v3292 = vunpack.c.h.b16 %v3220
        %v3293 = vunpack.c.l.b16 %v3221
        %v3294 = vunpack.c.h.b16 %v3221
        %v3295 = vunpack.c.l.b16 %v3222
        %v3296 = vunpack.c.h.b16 %v3222
        %v3297 = vunpack.c.l.b16 %v3223
        %v3298 = vunpack.c.h.b16 %v3223
        %v3299 = vunpack.c.l.b16 %v3224
        %v3300 = vunpack.c.h.b16 %v3224
        %v3301 = vunpack.c.l.b16 %v3225
        %v3302 = vunpack.c.h.b16 %v3225
        %v3303 = vunpack.c.l.b16 %v3226
        %v3304 = vunpack.c.h.b16 %v3226
        %v3305 = vunpack.c.l.b16 %v3227
        %v3306 = vunpack.c.h.b16 %v3227
        %v3307 = vunpack.c.l.b16 %v3228
        %v3308 = vunpack.c.h.b16 %v3228
        %v3309 = vunpack.c.l.b16 %v3229
        %v3310 = vunpack.c.h.b16 %v3229
        %v3311 = vunpack.c.l.b16 %v3230
        %v3312 = vunpack.c.h.b16 %v3230
        %v3313 = vunpack.c.l.b16 %v3231
        %v3314 = vunpack.c.h.b16 %v3231
        %v3315 = vunpack.c.l.b16 %v3232
        %v3316 = vunpack.c.h.b16 %v3232
        %v3317 = vunpack.c.l.b16 %v3233
        %v3318 = vunpack.c.h.b16 %v3233
        %v3319 = vunpack.c.l.b16 %v3234
        %v3320 = vunpack.c.h.b16 %v3234
        %v3321 = vunpack.c.l.b16 %v3235
        %v3322 = vunpack.c.h.b16 %v3235
        %v3323 = vunpack.c.l.b16 %v3236
        %v3324 = vunpack.c.h.b16 %v3236
        %v3325 = vunpack.c.l.b16 %v3237
        %v3326 = vunpack.c.h.b16 %v3237
        %v3327 = vunpack.c.l.b16 %v3238
        %v3328 = vunpack.c.h.b16 %v3238
        %v3329 = vunpack.c.l.b16 %v3239
        %v3330 = vunpack.c.h.b16 %v3239
        %v3331 = vunpack.c.l.b16 %v3240
        %v3332 = vunpack.c.h.b16 %v3240
        %v3333 = vunpack.c.l.b16 %v3241
        %v3334 = vunpack.c.h.b16 %v3241
        %v3335 = vunpack.c.l.b16 %v3242
        %v3336 = vunpack.c.h.b16 %v3242
        %v3337 = vunpack.c.l.b16 %v3243
        %v3338 = vunpack.c.h.b16 %v3243
        %v3339 = vpack.c.b16 %v3281, %v3279
        %v3340 = vpack.c.b16 %v3282, %v3280
        %v3341 = vpack.c.b16 %v3285, %v3283
        %v3342 = vpack.c.b16 %v3286, %v3284
        %v3343 = vpack.c.b16 %v3289, %v3287
        %v3344 = vpack.c.b16 %v3290, %v3288
        %v3345 = vpack.c.b16 %v3293, %v3291
        %v3346 = vpack.c.b16 %v3294, %v3292
        %v3347 = vpack.c.b16 %v3297, %v3295
        %v3348 = vpack.c.b16 %v3298, %v3296
        %v3349 = vpack.c.b16 %v3301, %v3299
        %v3350 = vpack.c.b16 %v3302, %v3300
        %v3351 = vpack.c.b16 %v3305, %v3303
        %v3352 = vpack.c.b16 %v3306, %v3304
        %v3353 = vpack.c.b16 %v3309, %v3307
        %v3354 = vpack.c.b16 %v3310, %v3308
        %v3355 = vpack.c.b16 %v3313, %v3311
        %v3356 = vpack.c.b16 %v3314, %v3312
        %v3357 = vpack.c.b16 %v3317, %v3315
        %v3358 = vpack.c.b16 %v3318, %v3316
        %v3359 = vpack.c.b16 %v3321, %v3319
        %v3360 = vpack.c.b16 %v3322, %v3320
        %v3361 = vpack.c.b16 %v3325, %v3323
        %v3362 = vpack.c.b16 %v3326, %v3324
        %v3363 = vpack.c.b16 %v3329, %v3327
        %v3364 = vpack.c.b16 %v3330, %v3328
        %v3365 = vpack.c.b16 %v3333, %v3331
        %v3366 = vpack.c.b16 %v3334, %v3332
        %v3367 = vpack.c.b16 %v3337, %v3335
        %v3368 = vpack.c.b16 %v3338, %v3336
        %v3400 = vsel %vm2737, %v3247, 0
        %3402 = vmatprep.subr.bf16.mxu0 %v3354
        %3403 = vmatpush1.bf16.msra.mxu0 %v3353
        %3404 = vmatprep.subr.bf16.mxu0 %v3352
        %3405 = vmatpush1.bf16.msra.mxu0 %v3351
        %3406 = vmatprep.subr.bf16.mxu0 %v3350
        %3407 = vmatpush1.bf16.msra.mxu0 %v3349
        %3408 = vmatprep.subr.bf16.mxu0 %v3348
        %3409 = vmatpush1.bf16.msra.mxu0 %v3347
        %3410 = vmatprep.subr.bf16.mxu0 %v3346
        %3411 = vmatpush1.bf16.msra.mxu0 %v3345
        %3412 = vmatprep.subr.bf16.mxu0 %v3344
        %3413 = vmatpush1.bf16.msra.mxu0 %v3343
        %3414 = vmatprep.subr.bf16.mxu0 %v3342
        %3415 = vmatpush1.bf16.msra.mxu0 %v3341
        %3416 = vmatprep.subr.bf16.mxu0 %v3340
        %3417 = vmatpush1.bf16.msra.mxu0 %v3339
        %3418 = vmatprep.subr.bf16.mxu0 0
        %3419 = vmatpush2.bf16.msra.mxu0 0
        %3420 = vmatprep.subr.bf16.mxu0 %v3368
        %3421 = vmatpush2.bf16.msra.mxu0 %v3367
        %3422 = vmatprep.subr.bf16.mxu0 %v3366
        %3423 = vmatpush2.bf16.msra.mxu0 %v3365
        %3424 = vmatprep.subr.bf16.mxu0 %v3364
        %3425 = vmatpush2.bf16.msra.mxu0 %v3363
        %3426 = vmatprep.subr.bf16.mxu0 %v3362
        %3427 = vmatpush2.bf16.msra.mxu0 %v3361
        %3428 = vmatprep.subr.bf16.mxu0 %v3360
        %3429 = vmatpush2.bf16.msra.mxu0 %v3359
        %3430 = vmatprep.subr.bf16.mxu0 %v3358
        %3431 = vmatpush2.bf16.msra.mxu0 %v3357
        %3432 = vmatprep.subr.bf16.mxu0 %v3356
        %3433 = vmatpush2.bf16.msra.mxu0 %v3355
        %3434 = vmatprep.mubr.bf16.mxu0 %v3400
        %3435 = vmatmul.mubr.bf16.gmra.mxu0 %v3246
        %v3436 = vpop.f32.mrf.mxu0
        %v3437 = vadd.f32 0.0, %v3436
        %v3438 = vpop.f32.mrf.mxu0
        %v3439 = vadd.f32 0.0, %v3438
        %v3440 = vpop.f32.mrf.mxu0
        %v3441 = vpop.f32.mrf.mxu0
        %3442 = vdwg.mxu0
        %v3443 = vadd.f32 %v3207, %v3437
        %v3444 = vadd.f32 %v3209, %v3439
        %v3445 = vld [vmem:[%s8] sm:$0x3]
        %v3447 = vlaneseq
        %v3448 = vshrl.u32 %v3447, 7
        %v3449 = vsub.s32 0, %v3448
        %v3450 = vrot.slane %v3445, %v3449
        %v3451 = vlaneseq
        %v3452 = vshrl.u32 %v3451, 7
        %v3453 = vsub.s32 1, %v3452
        %v3454 = vrot.slane %v3445, %v3453
        %v3457 = vmul.f32 %v3443, %v3450
        %v3458 = vmul.f32 %v3444, %v3454
        %v3459 = vld [vmem:[%s9] sm:$0x3]
        %v3461 = vlaneseq
        %v3462 = vshrl.u32 %v3461, 7
        %v3463 = vsub.s32 0, %v3462
        %v3464 = vrot.slane %v3459, %v3463
        %v3465 = vlaneseq
        %v3466 = vshrl.u32 %v3465, 7
        %v3467 = vsub.s32 1, %v3466
        %v3468 = vrot.slane %v3459, %v3467
        %v3471 = vadd.f32 %v3457, %v3464
        %v3472 = vadd.f32 %v3458, %v3468
        %v3473 = vmax.f32 %v3471, 0.0
        %v3474 = vmax.f32 %v3472, 0.0
        %v3477 = vrot.slane %v3473, 1
        %v3478 = vrot.slane %v3474, 1
        %v3481 = vmax.f32 %v3473, %v3477
        %v3482 = vmax.f32 %v3474, %v3478
        %v3483 = vpack.c.bf16 %v3481, %v3481
        %v3484 = vpack.c.bf16 %v3482, %v3482
        %v3485 = vmul.u32 %v524, 2
        %vm3486 = vcmp.eq.s32.totalorder %v530, %v3485
        %v3487 = vsel %vm3486, 1, 0
        %v3488 = vcvt.s32.f32 %v3487
        %v3489 = vpack.c.bf16 %v3488, %v3488
        %vm3490 = vcmask 56320
        %v3492 = vsel %vm3490, %v3489, 0
        %vm3494 = vcmask 1042432
        %v3495 = vsel %vm3494, 4294967295, 65535
        %v3496 = vsel %vm2107, %v3495, 0
        %v3498 = vand.u32 %v3483, %v3496
        %v3501 = vand.u32 %v3484, %v3496
        %3503 = vmatprep.subr.bf16.mxu0 0
        %3504 = vmatpush1.bf16.msra.mxu0 0
        %3505 = vmatprep.subr.bf16.mxu0 0
        %3506 = vmatpush1.bf16.msra.mxu0 0
        %3507 = vmatprep.subr.bf16.mxu0 0
        %3508 = vmatpush1.bf16.msra.mxu0 0
        %3509 = vmatprep.subr.bf16.mxu0 0
        %3510 = vmatpush1.bf16.msra.mxu0 0
        %3511 = vmatprep.subr.bf16.mxu0 0
        %3512 = vmatpush1.bf16.msra.mxu0 0
        %3513 = vmatprep.subr.bf16.mxu0 0
        %3514 = vmatpush1.bf16.msra.mxu0 0
        %3515 = vmatprep.subr.bf16.mxu0 0
        %3516 = vmatpush1.bf16.msra.mxu0 0
        %3517 = vmatprep.subr.bf16.mxu0 %v3501
        %3518 = vmatpush1.bf16.msra.mxu0 %v3498
        %3519 = vmatprep.subr.bf16.mxu0 0
        %3520 = vmatpush2.bf16.msra.mxu0 0
        %3521 = vmatprep.subr.bf16.mxu0 0
        %3522 = vmatpush2.bf16.msra.mxu0 0
        %3523 = vmatprep.subr.bf16.mxu0 0
        %3524 = vmatpush2.bf16.msra.mxu0 0
        %3525 = vmatprep.subr.bf16.mxu0 0
        %3526 = vmatpush2.bf16.msra.mxu0 0
        %3527 = vmatprep.subr.bf16.mxu0 0
        %3528 = vmatpush2.bf16.msra.mxu0 0
        %3529 = vmatprep.subr.bf16.mxu0 0
        %3530 = vmatpush2.bf16.msra.mxu0 0
        %3531 = vmatprep.subr.bf16.mxu0 0
        %3532 = vmatpush2.bf16.msra.mxu0 0
        %3533 = vmatprep.subr.bf16.mxu0 0
        %3534 = vmatpush2.bf16.msra.mxu0 0
        %3535 = vmatprep.mubr.bf16.mxu0 0
        %3536 = vmatmul.mubr.bf16.gmra.mxu0 %v3492
        %v3537 = vpop.f32.mrf.mxu0
        %v3538 = vadd.f32 0.0, %v3537
        %v3539 = vpop.f32.mrf.mxu0
        %v3540 = vadd.f32 0.0, %v3539
        %v3541 = vpop.f32.mrf.mxu0
        %v3542 = vpop.f32.mrf.mxu0
        %3543 = vdwg.mxu0
        %3546 = vrot.lane.b32.xlu0 %v3538, 96
        %v3547 = vpop.permute.xlu0 %3546
        %3548 = vrot.lane.b32.xlu0 %v3540, 96
        %v3549 = vpop.permute.xlu0 %3548
        %vm3550 = vcmask 785408
        %v3551 = vsel %vm3550, %v3547, %v3549
        %v3554 = vmax.f32 %v3538, %v3551
        %v3555 = vmax.f32 %v3540, %v3549
        %v3556 = vpack.c.bf16 %v3554, %v3554
        %v3557 = vpack.c.bf16 %v3555, %v3555
        %v3558 = vld [vmem:[%s10] sm:$0xf]
        %v3559 = vld [vmem:[%s10 + $0x4] sm:$0xf]
        %v3560 = vld [vmem:[%s10 + $0x8] sm:$0xf]
        %v3561 = vld [vmem:[%s10 + $0xc] sm:$0xf]
        %v3562 = vld [vmem:[%s10 + $0x10] sm:$0xf]
        %v3563 = vld [vmem:[%s10 + $0x14] sm:$0xf]
        %v3564 = vld [vmem:[%s10 + $0x18] sm:$0xf]
        %v3565 = vld [vmem:[%s10 + $0x1c] sm:$0xf]
        %v3566 = vld [vmem:[%s10 + $0x20] sm:$0xf]
        %v3567 = vld [vmem:[%s10 + $0x24] sm:$0xf]
        %v3568 = vld [vmem:[%s10 + $0x28] sm:$0xf]
        %v3569 = vld [vmem:[%s10 + $0x2c] sm:$0xf]
        %v3570 = vld [vmem:[%s10 + $0x30] sm:$0xf]
        %v3571 = vld [vmem:[%s10 + $0x34] sm:$0xf]
        %v3572 = vld [vmem:[%s10 + $0x38] sm:$0xf]
        %v3573 = vld [vmem:[%s10 + $0x3c] sm:$0xf]
        %v3574 = vld [vmem:[%s10 + $0x40] sm:$0xf]
        %v3575 = vld [vmem:[%s10 + $0x44] sm:$0xf]
        %v3576 = vld [vmem:[%s10 + $0x48] sm:$0xf]
        %v3577 = vld [vmem:[%s10 + $0x4c] sm:$0xf]
        %v3578 = vld [vmem:[%s10 + $0x50] sm:$0xf]
        %v3579 = vld [vmem:[%s10 + $0x54] sm:$0xf]
        %v3580 = vld [vmem:[%s10 + $0x58] sm:$0xf]
        %v3581 = vld [vmem:[%s10 + $0x5c] sm:$0xf]
        %v3582 = vld [vmem:[%s10 + $0x60] sm:$0xf]
        %v3583 = vld [vmem:[%s10 + $0x64] sm:$0xf]
        %v3584 = vld [vmem:[%s10 + $0x68] sm:$0xf]
        %v3585 = vld [vmem:[%s10 + $0x6c] sm:$0xf]
        %s3586 = scalar_lea.vmem %s10, 112
        %v3587 = vld [vmem:[%s3586] sm:$0xf]
        %v3588 = vld [vmem:[%s3586 + $0x4] sm:$0xf]
        %v3589 = vld [vmem:[%s3586 + $0x8] sm:$0xf]
        %v3590 = vld [vmem:[%s3586 + $0xc] sm:$0xf]
        %v3591 = vld [vmem:[%s3586 + $0x10] sm:$0xf]
        %v3592 = vld [vmem:[%s3586 + $0x14] sm:$0xf]
        %v3593 = vld [vmem:[%s3586 + $0x18] sm:$0xf]
        %v3594 = vld [vmem:[%s3586 + $0x1c] sm:$0xf]
        %v3595 = vld [vmem:[%s3586 + $0x20] sm:$0xf]
        %v3596 = vld [vmem:[%s3586 + $0x24] sm:$0xf]
        %v3597 = vld [vmem:[%s3586 + $0x28] sm:$0xf]
        %v3598 = vld [vmem:[%s3586 + $0x2c] sm:$0xf]
        %v3599 = vld [vmem:[%s3586 + $0x30] sm:$0xf]
        %v3600 = vld [vmem:[%s3586 + $0x34] sm:$0xf]
        %v3601 = vld [vmem:[%s3586 + $0x38] sm:$0xf]
        %v3602 = vld [vmem:[%s3586 + $0x3c] sm:$0xf]
        %v3603 = vld [vmem:[%s3586 + $0x40] sm:$0xf]
        %v3604 = vld [vmem:[%s3586 + $0x44] sm:$0xf]
        %v3605 = vld [vmem:[%s3586 + $0x48] sm:$0xf]
        %v3606 = vld [vmem:[%s3586 + $0x4c] sm:$0xf]
        %v3607 = vld [vmem:[%s3586 + $0x50] sm:$0xf]
        %v3608 = vld [vmem:[%s3586 + $0x54] sm:$0xf]
        %v3609 = vld [vmem:[%s3586 + $0x58] sm:$0xf]
        %v3610 = vld [vmem:[%s3586 + $0x5c] sm:$0xf]
        %v3611 = vld [vmem:[%s3586 + $0x60] sm:$0xf]
        %v3612 = vld [vmem:[%s3586 + $0x64] sm:$0xf]
        %v3613 = vld [vmem:[%s3586 + $0x68] sm:$0xf]
        %v3614 = vld [vmem:[%s3586 + $0x6c] sm:$0xf]
        %v3616 = vshrl.u32 %v3556, 16
        %v3619 = vshrl.u32 %v3557, 16
        %v3650 = vunpack.c.l.b16 %v3587
        %v3651 = vunpack.c.l.b16 %v3588
        %v3652 = vunpack.c.l.b16 %v3589
        %v3653 = vunpack.c.l.b16 %v3590
        %v3654 = vunpack.c.l.b16 %v3591
        %v3655 = vunpack.c.l.b16 %v3592
        %v3656 = vunpack.c.l.b16 %v3593
        %v3657 = vunpack.c.l.b16 %v3594
        %v3658 = vunpack.c.l.b16 %v3595
        %v3659 = vunpack.c.l.b16 %v3596
        %v3660 = vunpack.c.l.b16 %v3597
        %v3661 = vunpack.c.l.b16 %v3598
        %v3662 = vunpack.c.l.b16 %v3599
        %v3663 = vunpack.c.l.b16 %v3600
        %v3664 = vunpack.c.l.b16 %v3601
        %v3665 = vunpack.c.l.b16 %v3602
        %v3666 = vunpack.c.l.b16 %v3603
        %v3667 = vunpack.c.l.b16 %v3604
        %v3668 = vunpack.c.l.b16 %v3605
        %v3669 = vunpack.c.l.b16 %v3606
        %v3670 = vunpack.c.l.b16 %v3607
        %v3671 = vunpack.c.l.b16 %v3608
        %v3672 = vunpack.c.l.b16 %v3609
        %v3673 = vunpack.c.l.b16 %v3610
        %v3674 = vunpack.c.l.b16 %v3611
        %v3675 = vunpack.c.l.b16 %v3612
        %v3676 = vunpack.c.l.b16 %v3613
        %v3677 = vunpack.c.l.b16 %v3614
        %v3678 = vpack.c.b16 %v3651, %v3650
        %v3679 = vpack.c.b16 %v3653, %v3652
        %v3680 = vpack.c.b16 %v3655, %v3654
        %v3681 = vpack.c.b16 %v3657, %v3656
        %v3682 = vpack.c.b16 %v3659, %v3658
        %v3683 = vpack.c.b16 %v3661, %v3660
        %v3684 = vpack.c.b16 %v3663, %v3662
        %v3685 = vpack.c.b16 %v3665, %v3664
        %v3686 = vpack.c.b16 %v3667, %v3666
        %v3687 = vpack.c.b16 %v3669, %v3668
        %v3688 = vpack.c.b16 %v3671, %v3670
        %v3689 = vpack.c.b16 %v3673, %v3672
        %v3690 = vpack.c.b16 %v3675, %v3674
        %v3691 = vpack.c.b16 %v3677, %v3676
        %v3707 = vsel %vm3550, %v3619, 0
        %3709 = vmatprep.subr.bf16.mxu0 0
        %3710 = vmatpush1.bf16.msra.mxu0 %v3685
        %3711 = vmatprep.subr.bf16.mxu0 0
        %3712 = vmatpush1.bf16.msra.mxu0 %v3684
        %3713 = vmatprep.subr.bf16.mxu0 0
        %3714 = vmatpush1.bf16.msra.mxu0 %v3683
        %3715 = vmatprep.subr.bf16.mxu0 0
        %3716 = vmatpush1.bf16.msra.mxu0 %v3682
        %3717 = vmatprep.subr.bf16.mxu0 0
        %3718 = vmatpush1.bf16.msra.mxu0 %v3681
        %3719 = vmatprep.subr.bf16.mxu0 0
        %3720 = vmatpush1.bf16.msra.mxu0 %v3680
        %3721 = vmatprep.subr.bf16.mxu0 0
        %3722 = vmatpush1.bf16.msra.mxu0 %v3679
        %3723 = vmatprep.subr.bf16.mxu0 0
        %3724 = vmatpush1.bf16.msra.mxu0 %v3678
        %3725 = vmatprep.subr.bf16.mxu0 0
        %3726 = vmatpush2.bf16.msra.mxu0 0
        %3727 = vmatprep.subr.bf16.mxu0 0
        %3728 = vmatpush2.bf16.msra.mxu0 0
        %3729 = vmatprep.subr.bf16.mxu0 0
        %3730 = vmatpush2.bf16.msra.mxu0 %v3691
        %3731 = vmatprep.subr.bf16.mxu0 0
        %3732 = vmatpush2.bf16.msra.mxu0 %v3690
        %3733 = vmatprep.subr.bf16.mxu0 0
        %3734 = vmatpush2.bf16.msra.mxu0 %v3689
        %3735 = vmatprep.subr.bf16.mxu0 0
        %3736 = vmatpush2.bf16.msra.mxu0 %v3688
        %3737 = vmatprep.subr.bf16.mxu0 0
        %3738 = vmatpush2.bf16.msra.mxu0 %v3687
        %3739 = vmatprep.subr.bf16.mxu0 0
        %3740 = vmatpush2.bf16.msra.mxu0 %v3686
        %3741 = vmatprep.mubr.bf16.mxu0 %v3707
        %3742 = vmatmul.mubr.bf16.gmra.mxu0 %v3616
        %v3743 = vpop.f32.mrf.mxu0
        %v3744 = vadd.f32 0.0, %v3743
        %v3745 = vpop.f32.mrf.mxu0
        %v3746 = vpop.f32.mrf.mxu0
        %v3747 = vpop.f32.mrf.mxu0
        %3748 = vdwg.mxu0
        %v3777 = vunpack.c.l.b16 %v3558
        %v3778 = vunpack.c.l.b16 %v3559
        %v3779 = vunpack.c.l.b16 %v3560
        %v3780 = vunpack.c.l.b16 %v3561
        %v3781 = vunpack.c.l.b16 %v3562
        %v3782 = vunpack.c.l.b16 %v3563
        %v3783 = vunpack.c.l.b16 %v3564
        %v3784 = vunpack.c.l.b16 %v3565
        %v3785 = vunpack.c.l.b16 %v3566
        %v3786 = vunpack.c.l.b16 %v3567
        %v3787 = vunpack.c.l.b16 %v3568
        %v3788 = vunpack.c.l.b16 %v3569
        %v3789 = vunpack.c.l.b16 %v3570
        %v3790 = vunpack.c.l.b16 %v3571
        %v3791 = vunpack.c.l.b16 %v3572
        %v3792 = vunpack.c.l.b16 %v3573
        %v3793 = vunpack.c.l.b16 %v3574
        %v3794 = vunpack.c.l.b16 %v3575
        %v3795 = vunpack.c.l.b16 %v3576
        %v3796 = vunpack.c.l.b16 %v3577
        %v3797 = vunpack.c.l.b16 %v3578
        %v3798 = vunpack.c.l.b16 %v3579
        %v3799 = vunpack.c.l.b16 %v3580
        %v3800 = vunpack.c.l.b16 %v3581
        %v3801 = vunpack.c.l.b16 %v3582
        %v3802 = vunpack.c.l.b16 %v3583
        %v3803 = vunpack.c.l.b16 %v3584
        %v3804 = vunpack.c.l.b16 %v3585
        %v3805 = vpack.c.b16 %v3778, %v3777
        %v3806 = vpack.c.b16 %v3780, %v3779
        %v3807 = vpack.c.b16 %v3782, %v3781
        %v3808 = vpack.c.b16 %v3784, %v3783
        %v3809 = vpack.c.b16 %v3786, %v3785
        %v3810 = vpack.c.b16 %v3788, %v3787
        %v3811 = vpack.c.b16 %v3790, %v3789
        %v3812 = vpack.c.b16 %v3792, %v3791
        %v3813 = vpack.c.b16 %v3794, %v3793
        %v3814 = vpack.c.b16 %v3796, %v3795
        %v3815 = vpack.c.b16 %v3798, %v3797
        %v3816 = vpack.c.b16 %v3800, %v3799
        %v3817 = vpack.c.b16 %v3802, %v3801
        %v3818 = vpack.c.b16 %v3804, %v3803
        %v3833 = vsel %vm3550, %v3557, 0
        %3835 = vmatprep.subr.bf16.mxu0 0
        %3836 = vmatpush1.bf16.msra.mxu0 %v3812
        %3837 = vmatprep.subr.bf16.mxu0 0
        %3838 = vmatpush1.bf16.msra.mxu0 %v3811
        %3839 = vmatprep.subr.bf16.mxu0 0
        %3840 = vmatpush1.bf16.msra.mxu0 %v3810
        %3841 = vmatprep.subr.bf16.mxu0 0
        %3842 = vmatpush1.bf16.msra.mxu0 %v3809
        %3843 = vmatprep.subr.bf16.mxu0 0
        %3844 = vmatpush1.bf16.msra.mxu0 %v3808
        %3845 = vmatprep.subr.bf16.mxu0 0
        %3846 = vmatpush1.bf16.msra.mxu0 %v3807
        %3847 = vmatprep.subr.bf16.mxu0 0
        %3848 = vmatpush1.bf16.msra.mxu0 %v3806
        %3849 = vmatprep.subr.bf16.mxu0 0
        %3850 = vmatpush1.bf16.msra.mxu0 %v3805
        %3851 = vmatprep.subr.bf16.mxu0 0
        %3852 = vmatpush2.bf16.msra.mxu0 0
        %3853 = vmatprep.subr.bf16.mxu0 0
        %3854 = vmatpush2.bf16.msra.mxu0 0
        %3855 = vmatprep.subr.bf16.mxu0 0
        %3856 = vmatpush2.bf16.msra.mxu0 %v3818
        %3857 = vmatprep.subr.bf16.mxu0 0
        %3858 = vmatpush2.bf16.msra.mxu0 %v3817
        %3859 = vmatprep.subr.bf16.mxu0 0
        %3860 = vmatpush2.bf16.msra.mxu0 %v3816
        %3861 = vmatprep.subr.bf16.mxu0 0
        %3862 = vmatpush2.bf16.msra.mxu0 %v3815
        %3863 = vmatprep.subr.bf16.mxu0 0
        %3864 = vmatpush2.bf16.msra.mxu0 %v3814
        %3865 = vmatprep.subr.bf16.mxu0 0
        %3866 = vmatpush2.bf16.msra.mxu0 %v3813
        %3867 = vmatprep.mubr.bf16.mxu0 %v3833
        %3868 = vmatmul.mubr.bf16.gmra.mxu0 %v3556
        %v3869 = vpop.f32.mrf.mxu0
        %v3870 = vadd.f32 %v3744, %v3869
        %v3871 = vpop.f32.mrf.mxu0
        %v3872 = vpop.f32.mrf.mxu0
        %v3873 = vpop.f32.mrf.mxu0
        %3874 = vdwg.mxu0
        %s3875 = scalar_lea.vmem %s10, 224
        %v3876 = vld [vmem:[%s3875] sm:$0xf]
        %v3877 = vld [vmem:[%s3875 + $0x4] sm:$0xf]
        %v3878 = vld [vmem:[%s3875 + $0x8] sm:$0xf]
        %v3879 = vld [vmem:[%s3875 + $0xc] sm:$0xf]
        %v3880 = vld [vmem:[%s3875 + $0x10] sm:$0xf]
        %v3881 = vld [vmem:[%s3875 + $0x14] sm:$0xf]
        %v3882 = vld [vmem:[%s3875 + $0x18] sm:$0xf]
        %v3883 = vld [vmem:[%s3875 + $0x1c] sm:$0xf]
        %v3884 = vld [vmem:[%s3875 + $0x20] sm:$0xf]
        %v3885 = vld [vmem:[%s3875 + $0x24] sm:$0xf]
        %v3886 = vld [vmem:[%s3875 + $0x28] sm:$0xf]
        %v3887 = vld [vmem:[%s3875 + $0x2c] sm:$0xf]
        %v3888 = vld [vmem:[%s3875 + $0x30] sm:$0xf]
        %v3889 = vld [vmem:[%s3875 + $0x34] sm:$0xf]
        %v3890 = vld [vmem:[%s3875 + $0x38] sm:$0xf]
        %v3891 = vld [vmem:[%s3875 + $0x3c] sm:$0xf]
        %v3892 = vld [vmem:[%s3875 + $0x40] sm:$0xf]
        %v3893 = vld [vmem:[%s3875 + $0x44] sm:$0xf]
        %v3894 = vld [vmem:[%s3875 + $0x48] sm:$0xf]
        %v3895 = vld [vmem:[%s3875 + $0x4c] sm:$0xf]
        %v3896 = vld [vmem:[%s3875 + $0x50] sm:$0xf]
        %v3897 = vld [vmem:[%s3875 + $0x54] sm:$0xf]
        %v3898 = vld [vmem:[%s3875 + $0x58] sm:$0xf]
        %v3899 = vld [vmem:[%s3875 + $0x5c] sm:$0xf]
        %v3900 = vld [vmem:[%s3875 + $0x60] sm:$0xf]
        %v3901 = vld [vmem:[%s3875 + $0x64] sm:$0xf]
        %v3902 = vld [vmem:[%s3875 + $0x68] sm:$0xf]
        %v3903 = vld [vmem:[%s3875 + $0x6c] sm:$0xf]
        %v3906 = vrot.slane %v3556, 1
        %v3907 = vrot.slane %v3557, 1
        %v3937 = vunpack.c.l.b16 %v3876
        %v3938 = vunpack.c.l.b16 %v3877
        %v3939 = vunpack.c.l.b16 %v3878
        %v3940 = vunpack.c.l.b16 %v3879
        %v3941 = vunpack.c.l.b16 %v3880
        %v3942 = vunpack.c.l.b16 %v3881
        %v3943 = vunpack.c.l.b16 %v3882
        %v3944 = vunpack.c.l.b16 %v3883
        %v3945 = vunpack.c.l.b16 %v3884
        %v3946 = vunpack.c.l.b16 %v3885
        %v3947 = vunpack.c.l.b16 %v3886
        %v3948 = vunpack.c.l.b16 %v3887
        %v3949 = vunpack.c.l.b16 %v3888
        %v3950 = vunpack.c.l.b16 %v3889
        %v3951 = vunpack.c.l.b16 %v3890
        %v3952 = vunpack.c.l.b16 %v3891
        %v3953 = vunpack.c.l.b16 %v3892
        %v3954 = vunpack.c.l.b16 %v3893
        %v3955 = vunpack.c.l.b16 %v3894
        %v3956 = vunpack.c.l.b16 %v3895
        %v3957 = vunpack.c.l.b16 %v3896
        %v3958 = vunpack.c.l.b16 %v3897
        %v3959 = vunpack.c.l.b16 %v3898
        %v3960 = vunpack.c.l.b16 %v3899
        %v3961 = vunpack.c.l.b16 %v3900
        %v3962 = vunpack.c.l.b16 %v3901
        %v3963 = vunpack.c.l.b16 %v3902
        %v3964 = vunpack.c.l.b16 %v3903
        %v3965 = vpack.c.b16 %v3938, %v3937
        %v3966 = vpack.c.b16 %v3940, %v3939
        %v3967 = vpack.c.b16 %v3942, %v3941
        %v3968 = vpack.c.b16 %v3944, %v3943
        %v3969 = vpack.c.b16 %v3946, %v3945
        %v3970 = vpack.c.b16 %v3948, %v3947
        %v3971 = vpack.c.b16 %v3950, %v3949
        %v3972 = vpack.c.b16 %v3952, %v3951
        %v3973 = vpack.c.b16 %v3954, %v3953
        %v3974 = vpack.c.b16 %v3956, %v3955
        %v3975 = vpack.c.b16 %v3958, %v3957
        %v3976 = vpack.c.b16 %v3960, %v3959
        %v3977 = vpack.c.b16 %v3962, %v3961
        %v3978 = vpack.c.b16 %v3964, %v3963
        %v3994 = vsel %vm3550, %v3907, 0
        %3996 = vmatprep.subr.bf16.mxu0 0
        %3997 = vmatpush1.bf16.msra.mxu0 %v3972
        %3998 = vmatprep.subr.bf16.mxu0 0
        %3999 = vmatpush1.bf16.msra.mxu0 %v3971
        %4000 = vmatprep.subr.bf16.mxu0 0
        %4001 = vmatpush1.bf16.msra.mxu0 %v3970
        %4002 = vmatprep.subr.bf16.mxu0 0
        %4003 = vmatpush1.bf16.msra.mxu0 %v3969
        %4004 = vmatprep.subr.bf16.mxu0 0
        %4005 = vmatpush1.bf16.msra.mxu0 %v3968
        %4006 = vmatprep.subr.bf16.mxu0 0
        %4007 = vmatpush1.bf16.msra.mxu0 %v3967
        %4008 = vmatprep.subr.bf16.mxu0 0
        %4009 = vmatpush1.bf16.msra.mxu0 %v3966
        %4010 = vmatprep.subr.bf16.mxu0 0
        %4011 = vmatpush1.bf16.msra.mxu0 %v3965
        %4012 = vmatprep.subr.bf16.mxu0 0
        %4013 = vmatpush2.bf16.msra.mxu0 0
        %4014 = vmatprep.subr.bf16.mxu0 0
        %4015 = vmatpush2.bf16.msra.mxu0 0
        %4016 = vmatprep.subr.bf16.mxu0 0
        %4017 = vmatpush2.bf16.msra.mxu0 %v3978
        %4018 = vmatprep.subr.bf16.mxu0 0
        %4019 = vmatpush2.bf16.msra.mxu0 %v3977
        %4020 = vmatprep.subr.bf16.mxu0 0
        %4021 = vmatpush2.bf16.msra.mxu0 %v3976
        %4022 = vmatprep.subr.bf16.mxu0 0
        %4023 = vmatpush2.bf16.msra.mxu0 %v3975
        %4024 = vmatprep.subr.bf16.mxu0 0
        %4025 = vmatpush2.bf16.msra.mxu0 %v3974
        %4026 = vmatprep.subr.bf16.mxu0 0
        %4027 = vmatpush2.bf16.msra.mxu0 %v3973
        %4028 = vmatprep.mubr.bf16.mxu0 %v3994
        %4029 = vmatmul.mubr.bf16.gmra.mxu0 %v3906
        %v4030 = vpop.f32.mrf.mxu0
        %v4031 = vadd.f32 0.0, %v4030
        %v4032 = vpop.f32.mrf.mxu0
        %v4033 = vpop.f32.mrf.mxu0
        %v4034 = vpop.f32.mrf.mxu0
        %4035 = vdwg.mxu0
        %v4036 = vadd.f32 %v3870, %v4031
        %s4037 = scalar_lea.vmem %s10, 336
        %v4038 = vld [vmem:[%s4037] sm:$0xf]
        %v4039 = vld [vmem:[%s4037 + $0x4] sm:$0xf]
        %v4040 = vld [vmem:[%s4037 + $0x8] sm:$0xf]
        %v4041 = vld [vmem:[%s4037 + $0xc] sm:$0xf]
        %v4042 = vld [vmem:[%s4037 + $0x10] sm:$0xf]
        %v4043 = vld [vmem:[%s4037 + $0x14] sm:$0xf]
        %v4044 = vld [vmem:[%s4037 + $0x18] sm:$0xf]
        %v4045 = vld [vmem:[%s4037 + $0x1c] sm:$0xf]
        %v4046 = vld [vmem:[%s4037 + $0x20] sm:$0xf]
        %v4047 = vld [vmem:[%s4037 + $0x24] sm:$0xf]
        %v4048 = vld [vmem:[%s4037 + $0x28] sm:$0xf]
        %v4049 = vld [vmem:[%s4037 + $0x2c] sm:$0xf]
        %v4050 = vld [vmem:[%s4037 + $0x30] sm:$0xf]
        %v4051 = vld [vmem:[%s4037 + $0x34] sm:$0xf]
        %v4052 = vld [vmem:[%s4037 + $0x38] sm:$0xf]
        %v4053 = vld [vmem:[%s4037 + $0x3c] sm:$0xf]
        %v4054 = vld [vmem:[%s4037 + $0x40] sm:$0xf]
        %v4055 = vld [vmem:[%s4037 + $0x44] sm:$0xf]
        %v4056 = vld [vmem:[%s4037 + $0x48] sm:$0xf]
        %v4057 = vld [vmem:[%s4037 + $0x4c] sm:$0xf]
        %v4058 = vld [vmem:[%s4037 + $0x50] sm:$0xf]
        %v4059 = vld [vmem:[%s4037 + $0x54] sm:$0xf]
        %v4060 = vld [vmem:[%s4037 + $0x58] sm:$0xf]
        %v4061 = vld [vmem:[%s4037 + $0x5c] sm:$0xf]
        %v4062 = vld [vmem:[%s4037 + $0x60] sm:$0xf]
        %v4063 = vld [vmem:[%s4037 + $0x64] sm:$0xf]
        %v4064 = vld [vmem:[%s4037 + $0x68] sm:$0xf]
        %v4065 = vld [vmem:[%s4037 + $0x6c] sm:$0xf]
        %v4066 = vrot.slane %v3616, 1
        %v4067 = vrot.slane %v3619, 1
        %v4097 = vunpack.c.l.b16 %v4038
        %v4098 = vunpack.c.l.b16 %v4039
        %v4099 = vunpack.c.l.b16 %v4040
        %v4100 = vunpack.c.l.b16 %v4041
        %v4101 = vunpack.c.l.b16 %v4042
        %v4102 = vunpack.c.l.b16 %v4043
        %v4103 = vunpack.c.l.b16 %v4044
        %v4104 = vunpack.c.l.b16 %v4045
        %v4105 = vunpack.c.l.b16 %v4046
        %v4106 = vunpack.c.l.b16 %v4047
        %v4107 = vunpack.c.l.b16 %v4048
        %v4108 = vunpack.c.l.b16 %v4049
        %v4109 = vunpack.c.l.b16 %v4050
        %v4110 = vunpack.c.l.b16 %v4051
        %v4111 = vunpack.c.l.b16 %v4052
        %v4112 = vunpack.c.l.b16 %v4053
        %v4113 = vunpack.c.l.b16 %v4054
        %v4114 = vunpack.c.l.b16 %v4055
        %v4115 = vunpack.c.l.b16 %v4056
        %v4116 = vunpack.c.l.b16 %v4057
        %v4117 = vunpack.c.l.b16 %v4058
        %v4118 = vunpack.c.l.b16 %v4059
        %v4119 = vunpack.c.l.b16 %v4060
        %v4120 = vunpack.c.l.b16 %v4061
        %v4121 = vunpack.c.l.b16 %v4062
        %v4122 = vunpack.c.l.b16 %v4063
        %v4123 = vunpack.c.l.b16 %v4064
        %v4124 = vunpack.c.l.b16 %v4065
        %v4125 = vpack.c.b16 %v4098, %v4097
        %v4126 = vpack.c.b16 %v4100, %v4099
        %v4127 = vpack.c.b16 %v4102, %v4101
        %v4128 = vpack.c.b16 %v4104, %v4103
        %v4129 = vpack.c.b16 %v4106, %v4105
        %v4130 = vpack.c.b16 %v4108, %v4107
        %v4131 = vpack.c.b16 %v4110, %v4109
        %v4132 = vpack.c.b16 %v4112, %v4111
        %v4133 = vpack.c.b16 %v4114, %v4113
        %v4134 = vpack.c.b16 %v4116, %v4115
        %v4135 = vpack.c.b16 %v4118, %v4117
        %v4136 = vpack.c.b16 %v4120, %v4119
        %v4137 = vpack.c.b16 %v4122, %v4121
        %v4138 = vpack.c.b16 %v4124, %v4123
        %v4154 = vsel %vm3550, %v4067, 0
        %4156 = vmatprep.subr.bf16.mxu0 0
        %4157 = vmatpush1.bf16.msra.mxu0 %v4132
        %4158 = vmatprep.subr.bf16.mxu0 0
        %4159 = vmatpush1.bf16.msra.mxu0 %v4131
        %4160 = vmatprep.subr.bf16.mxu0 0
        %4161 = vmatpush1.bf16.msra.mxu0 %v4130
        %4162 = vmatprep.subr.bf16.mxu0 0
        %4163 = vmatpush1.bf16.msra.mxu0 %v4129
        %4164 = vmatprep.subr.bf16.mxu0 0
        %4165 = vmatpush1.bf16.msra.mxu0 %v4128
        %4166 = vmatprep.subr.bf16.mxu0 0
        %4167 = vmatpush1.bf16.msra.mxu0 %v4127
        %4168 = vmatprep.subr.bf16.mxu0 0
        %4169 = vmatpush1.bf16.msra.mxu0 %v4126
        %4170 = vmatprep.subr.bf16.mxu0 0
        %4171 = vmatpush1.bf16.msra.mxu0 %v4125
        %4172 = vmatprep.subr.bf16.mxu0 0
        %4173 = vmatpush2.bf16.msra.mxu0 0
        %4174 = vmatprep.subr.bf16.mxu0 0
        %4175 = vmatpush2.bf16.msra.mxu0 0
        %4176 = vmatprep.subr.bf16.mxu0 0
        %4177 = vmatpush2.bf16.msra.mxu0 %v4138
        %4178 = vmatprep.subr.bf16.mxu0 0
        %4179 = vmatpush2.bf16.msra.mxu0 %v4137
        %4180 = vmatprep.subr.bf16.mxu0 0
        %4181 = vmatpush2.bf16.msra.mxu0 %v4136
        %4182 = vmatprep.subr.bf16.mxu0 0
        %4183 = vmatpush2.bf16.msra.mxu0 %v4135
        %4184 = vmatprep.subr.bf16.mxu0 0
        %4185 = vmatpush2.bf16.msra.mxu0 %v4134
        %4186 = vmatprep.subr.bf16.mxu0 0
        %4187 = vmatpush2.bf16.msra.mxu0 %v4133
        %4188 = vmatprep.mubr.bf16.mxu0 %v4154
        %4189 = vmatmul.mubr.bf16.gmra.mxu0 %v4066
        %v4190 = vpop.f32.mrf.mxu0
        %v4191 = vadd.f32 0.0, %v4190
        %v4192 = vpop.f32.mrf.mxu0
        %v4193 = vpop.f32.mrf.mxu0
        %v4194 = vpop.f32.mrf.mxu0
        %4195 = vdwg.mxu0
        %v4196 = vadd.f32 %v4036, %v4191
        %v4197 = vld [vmem:[%s11] sm:$0x1]
        %v4198 = vmul.f32 %v4196, %v4197
        %v4199 = vld [vmem:[%s12] sm:$0x1]
        %v4200 = vadd.f32 %v4198, %v4199
        %v4201 = vmax.f32 %v4200, 0.0
        %v4202 = vpack.c.bf16 %v4201, %v4201
        %v4203 = vld [vmem:[%s13] sm:$0xf]
        %v4204 = vld [vmem:[%s13 + $0x4] sm:$0xf]
        %v4205 = vld [vmem:[%s13 + $0x8] sm:$0xf]
        %v4206 = vld [vmem:[%s13 + $0xc] sm:$0xf]
        %v4207 = vld [vmem:[%s14] sm:$0x1]
        %v4212 = vunpack.c.l.b16 %v4203
        %v4213 = vunpack.c.l.b16 %v4204
        %v4214 = vunpack.c.l.b16 %v4205
        %v4215 = vunpack.c.l.b16 %v4206
        %v4216 = vpack.c.b16 %v4213, %v4212
        %v4217 = vpack.c.b16 %v4215, %v4214
        %v4221 = vsel %vm556, %v4202, 0
        %4223 = vmatprep.subr.bf16.mxu0 0
        %4224 = vmatpush1.bf16.msra.mxu0 0
        %4225 = vmatprep.subr.bf16.mxu0 0
        %4226 = vmatpush1.bf16.msra.mxu0 0
        %4227 = vmatprep.subr.bf16.mxu0 0
        %4228 = vmatpush1.bf16.msra.mxu0 0
        %4229 = vmatprep.subr.bf16.mxu0 0
        %4230 = vmatpush1.bf16.msra.mxu0 0
        %4231 = vmatprep.subr.bf16.mxu0 0
        %4232 = vmatpush1.bf16.msra.mxu0 0
        %4233 = vmatprep.subr.bf16.mxu0 0
        %4234 = vmatpush1.bf16.msra.mxu0 0
        %4235 = vmatprep.subr.bf16.mxu0 0
        %4236 = vmatpush1.bf16.msra.mxu0 %v4217
        %4237 = vmatprep.subr.bf16.mxu0 0
        %4238 = vmatpush1.bf16.msra.mxu0 %v4216
        %4239 = vmatprep.subr.bf16.mxu0 0
        %4240 = vmatpush2.bf16.msra.mxu0 0
        %4241 = vmatprep.subr.bf16.mxu0 0
        %4242 = vmatpush2.bf16.msra.mxu0 0
        %4243 = vmatprep.subr.bf16.mxu0 0
        %4244 = vmatpush2.bf16.msra.mxu0 0
        %4245 = vmatprep.subr.bf16.mxu0 0
        %4246 = vmatpush2.bf16.msra.mxu0 0
        %4247 = vmatprep.subr.bf16.mxu0 0
        %4248 = vmatpush2.bf16.msra.mxu0 0
        %4249 = vmatprep.subr.bf16.mxu0 0
        %4250 = vmatpush2.bf16.msra.mxu0 0
        %4251 = vmatprep.subr.bf16.mxu0 0
        %4252 = vmatpush2.bf16.msra.mxu0 0
        %4253 = vmatprep.subr.bf16.mxu0 0
        %4254 = vmatpush2.bf16.msra.mxu0 0
        %4255 = vmatprep.mubr.bf16.mxu0 0
        %4256 = vmatmul.mubr.bf16.gmra.mxu0 %v4221
        %v4257 = vpop.f32.mrf.mxu0
        %v4258 = vadd.f32 %v4207, %v4257
        %v4259 = vpop.f32.mrf.mxu0
        %v4260 = vpop.f32.mrf.mxu0
        %v4261 = vpop.f32.mrf.mxu0
        %4262 = vdwg.mxu0
        %vm4263 = vcmask 40960
        %4264 = vst.msk [vmem:[%s516] sm:$0x1] %vm4263, %v4258
        %s4265 = sand.u32 %s359, 1
        %s4266 = scalar_lea.sflag [#allocation4], %s4265
        %s4267 = sand.u32 %s359, 1
        %s4268 = scalar_lea.vmem [#allocation7], %s4267
        // Predicated region
        $region89: #{forward.1} parent=79 // pred_check
          %p4269 = pneg %p369
        $region90: #{forward.1} parent=79 // pred_check_branch
          %4271 = sbr.rel (%p4269) target = $region92
        $region91: #{forward.1} parent=79 // pred_region
          %s4273 = ssub.s32 16, 16
          %4274 = vsyncadd %s4266, %s4273
          %s4275 = smul.addr %s31, 16
          %s4276 = scalar_lea.hbm %s15, %s4275
          %s4278 = sshll.u32 %s4268, 4
          %s4279 = int_to_ptr.vmem [resolvable:$true] %s4278
          %4281 = dma.vmem_to_hbm [thread:$0]  %s4279, 16, %s4276, %s4266
        $region92: #{forward.1} parent=79 // pred_fallthru
          _
      $region80: #{forward.1} parent=5 // pred_fallthru
        _
      %p4282 = scmp.le.s32.totalorder 2, %s26
      // Predicated region
      $region93: #{forward.1} parent=5 // pred_check
        %p4283 = pneg %p4282
      $region94: #{forward.1} parent=5 // pred_check_branch
        %4285 = sbr.rel (%p4283) target = $region96
      $region95: #{forward.1} parent=5 // pred_region
        %s4286 = ssub.s32 %s26, 2
        // Predicated region
        $region97: #{forward.1} parent=95 // pred_check
          %p4287 = pneg %p375
        $region98: #{forward.1} parent=95 // pred_check_branch
          %4289 = sbr.rel (%p4287) target = $region100
        $region99: #{forward.1} parent=95 // pred_region
          %s4290 = sand.u32 %s360, 1
          %s4291 = scalar_lea.sflag [#allocation4], %s4290
          %s4292 = sand.u32 %s360, 1
          %s4293 = scalar_lea.vmem [#allocation7], %s4292
          %4294 = dma.done %s4291, 16
        $region100: #{forward.1} parent=95 // pred_fallthru
          _
      $region96: #{forward.1} parent=5 // pred_fallthru
        _
    $region6: #{forward.1} parent=1 // loop_footer
      %s30 = sadd.s32 1, %s26
    $region7: #{forward.1} parent=1 // loop_footer_branch
      %25 = sbr.rel target = $region3
    $region8: #{forward.1} parent=1 // loop_exit
      _
    %4295 = vsyncpa [#allocation3], 1
    %s4296 = scalar_lea.sflag [#allocation3], 1
    %4297 = vsyncpa %s4296, 1
    %4298 = vsyncpa [#allocation6], 1
    %4299 = vsyncpa [#allocation4], 1
    %s4300 = scalar_lea.sflag [#allocation4], 1
    %4301 = vsyncpa %s4300, 1

</llo_original>
